<compile_context>
chip_gen: v5e
topology: v5e:2x2
jax: 0.10.0
libtpu: 0.0.40
codegen_flags: <defaults>
</compile_context>

<pallas_src>
import numpy as np

import jax
import jax.numpy as jnp
from jax import lax
from jax.experimental import pallas as pl
from jax.experimental.pallas import tpu as pltpu


# ----------------------- fused decoder kernel (one pallas_call) ---------------

def _make_decoder_kernel(n_fc, n_conv):
    """Builds the kernel body: a chain of f32 MXU matmuls with fused bias/ReLU.

    Ref order: (z, [W_fc, b_fc] * n_fc, [T_conv, b_conv] * n_conv, out)
    All refs are whole-array VMEM; activations never leave vregs/VMEM.
    """
    def kernel(*refs):
        z_ref, out_ref = refs[0], refs[-1]
        h = z_ref[...].astype(jnp.float32)
        idx = 1
        for i in range(n_fc):
            w, b = refs[idx], refs[idx + 1]
            idx += 2
            h = jnp.dot(h, w[...], preferred_element_type=jnp.float32) + b[...]
            if i < n_fc - 1:                      # ReLU between FC layers only
                h = jnp.maximum(h, 0.0)
        for i in range(n_conv):
            t, b = refs[idx], refs[idx + 1]
            idx += 2
            h = jnp.dot(h, t[...], preferred_element_type=jnp.float32) + b[...]
            if i < n_conv - 1:                    # ReLU between conv layers only
                h = jnp.maximum(h, 0.0)
        out_ref[...] = h.astype(out_ref.dtype)

    return kernel


def image_decoder_forward(params, z):
    """Single fused pallas_call for the whole decoder; returns NCHW output."""
    B = z.shape[0]
    c, hh, ww = params["out_chw"]
    out_dim = c * hh * ww
    args = params["kernel_args"]
    kernel = _make_decoder_kernel(params["n_fc"], params["n_conv"])

    vmem = pl.BlockSpec(memory_space=pltpu.MemorySpace.VMEM)
    flat = pl.pallas_call(
        kernel,
        out_shape=jax.ShapeDtypeStruct((B, out_dim), z.dtype),
        in_specs=[vmem] * (1 + len(args)),
        out_specs=vmem,
        compiler_params=pltpu.CompilerParams(vmem_limit_bytes=32 * 1024 * 1024),
    )(z, *args)
    # Lane-dense (B, C*H*W) slab comes out of the kernel; NCHW view is free here.
    return flat.reshape(B, c, hh, ww)


# --------------------- conv-transpose -> dense matrix (build time) ------------

def _convtranspose_matrix(W, hin, win):
    """Dense T s.t. flatten_NCHW(conv_transpose2d(x, W)) == flatten_NCHW(x) @ T.

    Valid for stride=1, padding=0, output_padding=0 (the ImageDecoder default).
    W has the PyTorch ConvTranspose2d layout (Cin, Cout, kh, kw).
    """
    cin, cout, kh, kw = W.shape
    ho, wo = hin + kh - 1, win + kw - 1
    T = np.zeros((cin, hin, win, cout, ho, wo), np.float32)
    for ky in range(kh):
        for kx in range(kw):
            for iy in range(hin):
                for ix in range(win):
                    # out[co, iy+ky, ix+kx] += x[ci, iy, ix] * W[ci, co, ky, kx]
                    T[:, iy, ix, :, iy + ky, ix + kx] = W[:, :, ky, kx]
    return T.reshape(cin * hin * win, cout * ho * wo)


# ----------------------------- parameter building -----------------------------

def build_image_decoder_params(key, output_size, latent_size, num_convs=3,
                               conv_h_sizes=None, ks=4, stride=1, num_fcs=2,
                               fc_hidden_size=50):
    # TODO(synk): only stride=1 / padding=0 / output_padding=0 implemented
    # (the ImageDecoder defaults).
    assert stride == 1
    output_size = np.asarray(output_size)
    if conv_h_sizes is None:
        hidden_dims = [int(output_size[0])] * num_convs + [int(output_size[0])]
    else:
        hidden_dims = list(conv_h_sizes) + [int(output_size[0])]
        num_convs = len(conv_h_sizes)

    # conv_in_size: invert the stack of transposed convs (same as the module)
    wh = output_size[1:].astype(np.int64)
    for _ in range(num_convs):
        wh = (wh - ks) // stride + 1
    conv_in_size = (hidden_dims[0], int(wh[0]), int(wh[1]))
    fc_out_size = int(np.prod(conv_in_size))
    fc_sizes = [latent_size] + [fc_hidden_size] * (num_fcs - 1) + [fc_out_size]

    params = {"fc": [], "conv": [], "conv_in_size": conv_in_size, "ks": ks}
    for i in range(len(fc_sizes) - 1):
        key, k_w, k_b = jax.random.split(key, 3)
        bound = 1.0 / np.sqrt(fc_sizes[i])
        W = jax.random.uniform(k_w, (fc_sizes[i], fc_sizes[i + 1]),
                               jnp.float32, -bound, bound)
        bb = jax.random.uniform(k_b, (fc_sizes[i + 1],), jnp.float32,
                                -bound, bound)
        params["fc"].append((W, bb))
    for i in range(num_convs):
        cin, cout = hidden_dims[i], hidden_dims[i + 1]
        key, k_w, k_b = jax.random.split(key, 3)
        bound = 1.0 / np.sqrt(cout * ks * ks)
        W = jax.random.uniform(k_w, (cin, cout, ks, ks), jnp.float32,
                               -bound, bound)
        bb = jax.random.uniform(k_b, (cout,), jnp.float32, -bound, bound)
        params["conv"].append((W, bb))

    # ---- precompute fused-kernel operands ONCE (off the forward hot path) ----
    kernel_args = []
    for (W, b) in params["fc"]:
        kernel_args += [W, b.reshape(1, -1)]          # bias already 2-D
    hin, win = conv_in_size[1], conv_in_size[2]
    for (W, b) in params["conv"]:
        Wn = np.asarray(W)
        cin, cout, kh, kw = Wn.shape
        T = _convtranspose_matrix(Wn, hin, win)       # exact linear operator
        ho, wo = hin + kh - 1, win + kw - 1
        cb = np.repeat(np.asarray(b), ho * wo)[None, :]   # bias broadcast over HxW
        kernel_args += [jnp.asarray(T), jnp.asarray(cb)]
        hin, win = ho, wo
    params["kernel_args"] = kernel_args
    params["out_chw"] = (int(hidden_dims[-1]), hin, win)
    params["n_fc"] = len(params["fc"])
    params["n_conv"] = num_convs
    return params


# ------------------------------ pure-JAX reference ----------------------------

def image_decoder_reference(params, z):
    """Pure-JAX reference (same math, XLA convs) for validation."""
    h = z
    nfc = len(params["fc"])
    for i, (W, b) in enumerate(params["fc"]):
        h = h @ W + b
        if i < nfc - 1:
            h = jnp.maximum(h, 0.0)
    B = z.shape[0]
    c0, h0, w0 = params["conv_in_size"]
    x = h.reshape((B, c0, h0, w0))
    nconv = len(params["conv"])
    for i, (W, b) in enumerate(params["conv"]):
        k = W.shape[-1]
        w_oihw = jnp.flip(W, axis=(2, 3)).transpose(1, 0, 2, 3)
        x = lax.conv_general_dilated(
            x, w_oihw, window_strides=(1, 1),
            padding=[(k - 1, k - 1), (k - 1, k - 1)],
            dimension_numbers=("NCHW", "OIHW", "NCHW"))
        x = x + b[None, :, None, None]
        if i < nconv - 1:
            x = jnp.maximum(x, 0.0)
    return x


if __name__ == "__main__":
    output_size = (4, 16, 16)   # (C, H, W) of the decoded image
    latent_size = 8
    batch = 2

    key = jax.random.PRNGKey(0)
    key, kz = jax.random.split(key)
    params = build_image_decoder_params(
        key, output_size, latent_size,
        num_convs=3, conv_h_sizes=None, ks=4, stride=1,
        num_fcs=2, fc_hidden_size=32)

    z = jax.random.normal(kz, (batch, latent_size), jnp.float32)

    out = image_decoder_forward(params, z)
    out = jax.block_until_ready(out)

    assert out.shape == (batch,) + tuple(output_size), out.shape
    ref = image_decoder_reference(params, z)
    np.testing.assert_allclose(np.asarray(out), np.asarray(ref),
                               atol=1e-4, rtol=1e-4)
    print("KERNEL_OK")
</pallas_src>

<mosaic_0001>
module attributes {stable_mosaic.version = 11 : i64} {
  func.func @kernel(%arg0: memref<2x8xf32, #tpu.memory_space<vmem>>, %arg1: memref<8x32xf32, #tpu.memory_space<vmem>>, %arg2: memref<1x32xf32, #tpu.memory_space<vmem>>, %arg3: memref<32x196xf32, #tpu.memory_space<vmem>>, %arg4: memref<1x196xf32, #tpu.memory_space<vmem>>, %arg5: memref<196x400xf32, #tpu.memory_space<vmem>>, %arg6: memref<1x400xf32, #tpu.memory_space<vmem>>, %arg7: memref<400x676xf32, #tpu.memory_space<vmem>>, %arg8: memref<1x676xf32, #tpu.memory_space<vmem>>, %arg9: memref<676x1024xf32, #tpu.memory_space<vmem>>, %arg10: memref<1x1024xf32, #tpu.memory_space<vmem>>, %arg11: memref<2x1024xf32, #tpu.memory_space<vmem>>) attributes {dimension_semantics = [], scalar_prefetch = 0 : i64, scratch_operands = 0 : i64, tpu.core_type = #tpu.core_type<tc>} {
    %c0 = arith.constant 0 : index
    %c0_0 = arith.constant 0 : index
    %0 = vector.load %arg0[%c0, %c0_0] : memref<2x8xf32, #tpu.memory_space<vmem>>, vector<2x8xf32>
    %c0_1 = arith.constant 0 : index
    %c0_2 = arith.constant 0 : index
    %1 = vector.load %arg1[%c0_1, %c0_2] : memref<8x32xf32, #tpu.memory_space<vmem>>, vector<8x32xf32>
    %cst = arith.constant dense<0.000000e+00> : vector<2x32xf32>
    %2 = tpu.matmul %0, %1, %cst {dimension_numbers = #tpu.dot_dimension_numbers<[1], [0], [0], [1], [0, 0, 1, 1], [], []>} : vector<2x8xf32>, vector<8x32xf32>, vector<2x32xf32> -> vector<2x32xf32>
    %c0_3 = arith.constant 0 : index
    %c0_4 = arith.constant 0 : index
    %3 = vector.load %arg2[%c0_3, %c0_4] : memref<1x32xf32, #tpu.memory_space<vmem>>, vector<1x32xf32>
    %4 = vector.broadcast %3 : vector<1x32xf32> to vector<2x32xf32>
    %5 = arith.addf %2, %4 : vector<2x32xf32>
    %cst_5 = arith.constant 0.000000e+00 : f32
    %6 = vector.broadcast %cst_5 : f32 to vector<2x32xf32>
    %7 = arith.maximumf %5, %6 : vector<2x32xf32>
    %c0_6 = arith.constant 0 : index
    %c0_7 = arith.constant 0 : index
    %8 = vector.load %arg3[%c0_6, %c0_7] : memref<32x196xf32, #tpu.memory_space<vmem>>, vector<32x196xf32>
    %cst_8 = arith.constant dense<0.000000e+00> : vector<2x196xf32>
    %9 = tpu.matmul %7, %8, %cst_8 {dimension_numbers = #tpu.dot_dimension_numbers<[1], [0], [0], [1], [0, 0, 1, 1], [], []>} : vector<2x32xf32>, vector<32x196xf32>, vector<2x196xf32> -> vector<2x196xf32>
    %c0_9 = arith.constant 0 : index
    %c0_10 = arith.constant 0 : index
    %10 = vector.load %arg4[%c0_9, %c0_10] : memref<1x196xf32, #tpu.memory_space<vmem>>, vector<1x196xf32>
    %11 = vector.broadcast %10 : vector<1x196xf32> to vector<2x196xf32>
    %12 = arith.addf %9, %11 : vector<2x196xf32>
    %c0_11 = arith.constant 0 : index
    %c0_12 = arith.constant 0 : index
    %13 = vector.load %arg5[%c0_11, %c0_12] : memref<196x400xf32, #tpu.memory_space<vmem>>, vector<196x400xf32>
    %cst_13 = arith.constant dense<0.000000e+00> : vector<2x400xf32>
    %14 = tpu.matmul %12, %13, %cst_13 {dimension_numbers = #tpu.dot_dimension_numbers<[1], [0], [0], [1], [0, 0, 1, 1], [], []>} : vector<2x196xf32>, vector<196x400xf32>, vector<2x400xf32> -> vector<2x400xf32>
    %c0_14 = arith.constant 0 : index
    %c0_15 = arith.constant 0 : index
    %15 = vector.load %arg6[%c0_14, %c0_15] : memref<1x400xf32, #tpu.memory_space<vmem>>, vector<1x400xf32>
    %16 = vector.broadcast %15 : vector<1x400xf32> to vector<2x400xf32>
    %17 = arith.addf %14, %16 : vector<2x400xf32>
    %cst_16 = arith.constant 0.000000e+00 : f32
    %18 = vector.broadcast %cst_16 : f32 to vector<2x400xf32>
    %19 = arith.maximumf %17, %18 : vector<2x400xf32>
    %c0_17 = arith.constant 0 : index
    %c0_18 = arith.constant 0 : index
    %20 = vector.load %arg7[%c0_17, %c0_18] : memref<400x676xf32, #tpu.memory_space<vmem>>, vector<400x676xf32>
    %cst_19 = arith.constant dense<0.000000e+00> : vector<2x676xf32>
    %21 = tpu.matmul %19, %20, %cst_19 {dimension_numbers = #tpu.dot_dimension_numbers<[1], [0], [0], [1], [0, 0, 1, 1], [], []>} : vector<2x400xf32>, vector<400x676xf32>, vector<2x676xf32> -> vector<2x676xf32>
    %c0_20 = arith.constant 0 : index
    %c0_21 = arith.constant 0 : index
    %22 = vector.load %arg8[%c0_20, %c0_21] : memref<1x676xf32, #tpu.memory_space<vmem>>, vector<1x676xf32>
    %23 = vector.broadcast %22 : vector<1x676xf32> to vector<2x676xf32>
    %24 = arith.addf %21, %23 : vector<2x676xf32>
    %cst_22 = arith.constant 0.000000e+00 : f32
    %25 = vector.broadcast %cst_22 : f32 to vector<2x676xf32>
    %26 = arith.maximumf %24, %25 : vector<2x676xf32>
    %c0_23 = arith.constant 0 : index
    %c0_24 = arith.constant 0 : index
    %27 = vector.load %arg9[%c0_23, %c0_24] : memref<676x1024xf32, #tpu.memory_space<vmem>>, vector<676x1024xf32>
    %cst_25 = arith.constant dense<0.000000e+00> : vector<2x1024xf32>
    %28 = tpu.matmul %26, %27, %cst_25 {dimension_numbers = #tpu.dot_dimension_numbers<[1], [0], [0], [1], [0, 0, 1, 1], [], []>} : vector<2x676xf32>, vector<676x1024xf32>, vector<2x1024xf32> -> vector<2x1024xf32>
    %c0_26 = arith.constant 0 : index
    %c0_27 = arith.constant 0 : index
    %29 = vector.load %arg10[%c0_26, %c0_27] : memref<1x1024xf32, #tpu.memory_space<vmem>>, vector<1x1024xf32>
    %30 = vector.broadcast %29 : vector<1x1024xf32> to vector<2x1024xf32>
    %31 = arith.addf %28, %30 : vector<2x1024xf32>
    %c0_28 = arith.constant 0 : index
    %c0_29 = arith.constant 0 : index
    %32 = vector.load %arg11[%c0_28, %c0_29] : memref<2x1024xf32, #tpu.memory_space<vmem>>, vector<2x1024xf32>
    tpu.vector_store %arg11[%c0_28, %c0_29], %31 {strides = array<i32>} : memref<2x1024xf32, #tpu.memory_space<vmem>>, vector<2x1024xf32>,
    return
  }
}

</mosaic_0001>

<llo_original>
// kernel: tpu_custom_call.1
$region0: #{tpu_custom_call.1}
  #allocation0 [shape = 'u32[]', space=smem, size = 0x4, offset = 0x4, fixed_abs, tag = 'smem constant byte address 0x4 - core index']
  #allocation1 [shape = 'u32[72,128]{1,0:T(1,128)}', space=vmem, size = 0x9000, scoped, tag = 'internal scratch']
  %s0 = inlined_call_operand.hbm [shape: f32[2,8], index: 0, kind: input, shape index: {}]
  %s1 = inlined_call_operand.hbm [shape: f32[8,32], index: 1, kind: input, shape index: {}]
  %s2 = inlined_call_operand.hbm [shape: f32[1,32], index: 2, kind: input, shape index: {}]
  %s3 = inlined_call_operand.hbm [shape: f32[32,196], index: 3, kind: input, shape index: {}]
  %s4 = inlined_call_operand.hbm [shape: f32[1,196], index: 4, kind: input, shape index: {}]
  %s5 = inlined_call_operand.hbm [shape: f32[196,400], index: 5, kind: input, shape index: {}]
  %s6 = inlined_call_operand.hbm [shape: f32[1,400], index: 6, kind: input, shape index: {}]
  %s7 = inlined_call_operand.hbm [shape: f32[400,676], index: 7, kind: input, shape index: {}]
  %s8 = inlined_call_operand.hbm [shape: f32[1,676], index: 8, kind: input, shape index: {}]
  %s9 = inlined_call_operand.hbm [shape: f32[676,1024], index: 9, kind: input, shape index: {}]
  %s10 = inlined_call_operand.hbm [shape: f32[1,1024], index: 10, kind: input, shape index: {}]
  %s11 = inlined_call_operand.hbm [shape: f32[2,1024], index: 11, kind: output, shape index: {}]
  %s12 = sld [smem:[#allocation0]]
  $region98: #{tpu_custom_call.1} parent=0
    _
  %s14 = ssub.s32 1, %s12
  %s15 = scalar_select 0, %s14, %s12
  $region1: #{tpu_custom_call.1} parent=0
    #allocation2 [shape = 'u8[1024]{0}', space=vmem, size = 0x400, scoped, tag = 'input window, operand 0, single buffered']
    #allocation3 [shape = 's32[1]{0}', space=sflag, size = 0x4, scoped, tag = 'scoped memory for tpu_custom_call.1']
    #allocation4 [shape = 's32[1]{0}', space=sflag, size = 0x4, scoped, tag = 'scoped memory for tpu_custom_call.1']
    #allocation5 [shape = 'u8[4096]{0}', space=vmem, size = 0x1000, scoped, tag = 'input window, operand 1, single buffered']
    #allocation6 [shape = 's32[1]{0}', space=sflag, size = 0x4, scoped, tag = 'scoped memory for tpu_custom_call.1']
    #allocation7 [shape = 'u8[512]{0}', space=vmem, size = 0x400, scoped, tag = 'input window, operand 2, single buffered']
    #allocation8 [shape = 'u8[32768]{0}', space=vmem, size = 0x8000, scoped, tag = 'input window, operand 3, single buffered']
    #allocation9 [shape = 's32[1]{0}', space=sflag, size = 0x4, scoped, tag = 'scoped memory for tpu_custom_call.1']
    #allocation10 [shape = 'u8[1024]{0}', space=vmem, size = 0x400, scoped, tag = 'input window, operand 4, single buffered']
    #allocation11 [shape = 'u8[409600]{0}', space=vmem, size = 0x64000, scoped, tag = 'input window, operand 5, single buffered']
    #allocation12 [shape = 's32[1]{0}', space=sflag, size = 0x4, scoped, tag = 'scoped memory for tpu_custom_call.1']
    #allocation13 [shape = 'u8[2048]{0}', space=vmem, size = 0x800, scoped, tag = 'input window, operand 6, single buffered']
    #allocation14 [shape = 'u8[1228800]{0}', space=vmem, size = 0x12c000, scoped, tag = 'input window, operand 7, single buffered']
    #allocation15 [shape = 's32[1]{0}', space=sflag, size = 0x4, scoped, tag = 'scoped memory for tpu_custom_call.1']
    #allocation16 [shape = 'u8[3072]{0}', space=vmem, size = 0xc00, scoped, tag = 'input window, operand 8, single buffered']
    #allocation17 [shape = 'u8[2785280]{0}', space=vmem, size = 0x2a8000, scoped, tag = 'input window, operand 9, single buffered']
    #allocation18 [shape = 's32[1]{0}', space=sflag, size = 0x4, scoped, tag = 'scoped memory for tpu_custom_call.1']
    #allocation19 [shape = 'u8[4096]{0}', space=vmem, size = 0x1000, scoped, tag = 'input window, operand 10, single buffered']
    #allocation20 [shape = 'u8[8192]{0}', space=vmem, size = 0x2000, scoped, tag = 'output window, operand 0, single buffered']
    %16 = vsyncpa [#allocation3], 0
    %17 = vsyncpa [#allocation6], 0
    %18 = vsyncpa [#allocation9], 0
    %19 = vsyncpa [#allocation12], 0
    %20 = vsyncpa [#allocation15], 0
    %21 = vsyncpa [#allocation18], 0
    %22 = vsyncpa [#allocation4], 0
    // Predicated region
    $region2: #{tpu_custom_call.1} parent=1 // pred_check
      _
    $region3: #{tpu_custom_call.1} parent=1 // pred_check_branch
      %24 = sbr.rel (0) target = $region5
    $region4: #{tpu_custom_call.1} parent=1 // pred_region
      %26 = vsyncadd [#allocation3], 0
      %s28 = sshll.u32 %s0, 4
      %s29 = int_to_ptr.hbm [resolvable:$true] %s28
      %s30 = sshll.u32 [#allocation2], 4
      %s31 = int_to_ptr.vmem [resolvable:$true] %s30
      %33 = dma.hbm_to_vmem [thread:$0]  %s29, 32, %s31, [#allocation3]
    $region5: #{tpu_custom_call.1} parent=1 // pred_fallthru
      _
    // Predicated region
    $region6: #{tpu_custom_call.1} parent=1 // pred_check
      _
    $region7: #{tpu_custom_call.1} parent=1 // pred_check_branch
      %35 = sbr.rel (0) target = $region9
    $region8: #{tpu_custom_call.1} parent=1 // pred_region
      %37 = vsyncadd [#allocation6], 0
      %s39 = sshll.u32 %s1, 4
      %s40 = int_to_ptr.hbm [resolvable:$true] %s39
      %s41 = sshll.u32 [#allocation5], 4
      %s42 = int_to_ptr.vmem [resolvable:$true] %s41
      %44 = dma.hbm_to_vmem [thread:$0]  %s40, 128, %s42, [#allocation6]
    $region9: #{tpu_custom_call.1} parent=1 // pred_fallthru
      _
    // Predicated region
    $region10: #{tpu_custom_call.1} parent=1 // pred_check
      _
    $region11: #{tpu_custom_call.1} parent=1 // pred_check_branch
      %46 = sbr.rel (0) target = $region13
    $region12: #{tpu_custom_call.1} parent=1 // pred_region
      %48 = vsyncadd [#allocation6], 0
      %s50 = sshll.u32 %s2, 4
      %s51 = int_to_ptr.hbm [resolvable:$true] %s50
      %s52 = sshll.u32 [#allocation7], 4
      %s53 = int_to_ptr.vmem [resolvable:$true] %s52
      %55 = dma.hbm_to_vmem [thread:$0]  %s51, 16, %s53, [#allocation6]
    $region13: #{tpu_custom_call.1} parent=1 // pred_fallthru
      _
    // Predicated region
    $region14: #{tpu_custom_call.1} parent=1 // pred_check
      _
    $region15: #{tpu_custom_call.1} parent=1 // pred_check_branch
      %57 = sbr.rel (0) target = $region17
    $region16: #{tpu_custom_call.1} parent=1 // pred_region
      %59 = vsyncadd [#allocation9], 0
      %s60 = sshll.u32 %s3, 4
      %s61 = int_to_ptr.hbm [resolvable:$true] %s60
      %s62 = sshll.u32 [#allocation8], 4
      %s63 = int_to_ptr.vmem [resolvable:$true] %s62
      %68 = dma.hbm_to_vmem [thread:$0]  %s61, 1024, %s63, [#allocation9], 256, 256, 16
    $region17: #{tpu_custom_call.1} parent=1 // pred_fallthru
      _
    // Predicated region
    $region18: #{tpu_custom_call.1} parent=1 // pred_check
      _
    $region19: #{tpu_custom_call.1} parent=1 // pred_check_branch
      %70 = sbr.rel (0) target = $region21
    $region20: #{tpu_custom_call.1} parent=1 // pred_region
      %72 = vsyncadd [#allocation9], 0
      %s74 = sshll.u32 %s4, 4
      %s75 = int_to_ptr.hbm [resolvable:$true] %s74
      %s76 = sshll.u32 [#allocation10], 4
      %s77 = int_to_ptr.vmem [resolvable:$true] %s76
      %79 = dma.hbm_to_vmem [thread:$0]  %s75, 32, %s77, [#allocation9]
    $region21: #{tpu_custom_call.1} parent=1 // pred_fallthru
      _
    // Predicated region
    $region22: #{tpu_custom_call.1} parent=1 // pred_check
      _
    $region23: #{tpu_custom_call.1} parent=1 // pred_check_branch
      %81 = sbr.rel (0) target = $region25
    $region24: #{tpu_custom_call.1} parent=1 // pred_region
      %83 = vsyncadd [#allocation12], 0
      %s84 = sshll.u32 %s5, 4
      %s85 = int_to_ptr.hbm [resolvable:$true] %s84
      %s86 = sshll.u32 [#allocation11], 4
      %s87 = int_to_ptr.vmem [resolvable:$true] %s86
      %92 = dma.hbm_to_vmem [thread:$0]  %s85, 12800, %s87, [#allocation12], 512, 512, 32
    $region25: #{tpu_custom_call.1} parent=1 // pred_fallthru
      _
    // Predicated region
    $region26: #{tpu_custom_call.1} parent=1 // pred_check
      _
    $region27: #{tpu_custom_call.1} parent=1 // pred_check_branch
      %94 = sbr.rel (0) target = $region29
    $region28: #{tpu_custom_call.1} parent=1 // pred_region
      %96 = vsyncadd [#allocation12], 0
      %s98 = sshll.u32 %s6, 4
      %s99 = int_to_ptr.hbm [resolvable:$true] %s98
      %s100 = sshll.u32 [#allocation13], 4
      %s101 = int_to_ptr.vmem [resolvable:$true] %s100
      %103 = dma.hbm_to_vmem [thread:$0]  %s99, 64, %s101, [#allocation12]
    $region29: #{tpu_custom_call.1} parent=1 // pred_fallthru
      _
    // Predicated region
    $region30: #{tpu_custom_call.1} parent=1 // pred_check
      _
    $region31: #{tpu_custom_call.1} parent=1 // pred_check_branch
      %105 = sbr.rel (0) target = $region33
    $region32: #{tpu_custom_call.1} parent=1 // pred_region
      %107 = vsyncadd [#allocation15], 0
      %s108 = sshll.u32 %s7, 4
      %s109 = int_to_ptr.hbm [resolvable:$true] %s108
      %s110 = sshll.u32 [#allocation14], 4
      %s111 = int_to_ptr.vmem [resolvable:$true] %s110
      %116 = dma.hbm_to_vmem [thread:$0]  %s109, 38400, %s111, [#allocation15], 768, 768, 48
    $region33: #{tpu_custom_call.1} parent=1 // pred_fallthru
      _
    // Predicated region
    $region34: #{tpu_custom_call.1} parent=1 // pred_check
      _
    $region35: #{tpu_custom_call.1} parent=1 // pred_check_branch
      %118 = sbr.rel (0) target = $region37
    $region36: #{tpu_custom_call.1} parent=1 // pred_region
      %120 = vsyncadd [#allocation15], 0
      %s122 = sshll.u32 %s8, 4
      %s123 = int_to_ptr.hbm [resolvable:$true] %s122
      %s124 = sshll.u32 [#allocation16], 4
      %s125 = int_to_ptr.vmem [resolvable:$true] %s124
      %127 = dma.hbm_to_vmem [thread:$0]  %s123, 96, %s125, [#allocation15]
    $region37: #{tpu_custom_call.1} parent=1 // pred_fallthru
      _
    // Predicated region
    $region38: #{tpu_custom_call.1} parent=1 // pred_check
      _
    $region39: #{tpu_custom_call.1} parent=1 // pred_check_branch
      %129 = sbr.rel (0) target = $region41
    $region40: #{tpu_custom_call.1} parent=1 // pred_region
      %131 = vsyncadd [#allocation18], 0
      %s132 = sshll.u32 %s9, 4
      %s133 = int_to_ptr.hbm [resolvable:$true] %s132
      %s134 = sshll.u32 [#allocation17], 4
      %s135 = int_to_ptr.vmem [resolvable:$true] %s134
      %140 = dma.hbm_to_vmem [thread:$0]  %s133, 87040, %s135, [#allocation18], 1024, 1024, 64
    $region41: #{tpu_custom_call.1} parent=1 // pred_fallthru
      _
    // Predicated region
    $region42: #{tpu_custom_call.1} parent=1 // pred_check
      _
    $region43: #{tpu_custom_call.1} parent=1 // pred_check_branch
      %142 = sbr.rel (0) target = $region45
    $region44: #{tpu_custom_call.1} parent=1 // pred_region
      %144 = vsyncadd [#allocation18], 0
      %s146 = sshll.u32 %s10, 4
      %s147 = int_to_ptr.hbm [resolvable:$true] %s146
      %s148 = sshll.u32 [#allocation19], 4
      %s149 = int_to_ptr.vmem [resolvable:$true] %s148
      %151 = dma.hbm_to_vmem [thread:$0]  %s147, 128, %s149, [#allocation18]
    $region45: #{tpu_custom_call.1} parent=1 // pred_fallthru
      _
    // Predicated region
    $region46: #{tpu_custom_call.1} parent=1 // pred_check
      _
    $region47: #{tpu_custom_call.1} parent=1 // pred_check_branch
      %153 = sbr.rel (0) target = $region49
    $region48: #{tpu_custom_call.1} parent=1 // pred_region
      %155 = dma.done [#allocation3], 32
    $region49: #{tpu_custom_call.1} parent=1 // pred_fallthru
      _
    // Predicated region
    $region50: #{tpu_custom_call.1} parent=1 // pred_check
      _
    $region51: #{tpu_custom_call.1} parent=1 // pred_check_branch
      %157 = sbr.rel (0) target = $region53
    $region52: #{tpu_custom_call.1} parent=1 // pred_region
      %159 = dma.done [#allocation6], 128
    $region53: #{tpu_custom_call.1} parent=1 // pred_fallthru
      _
    // Predicated region
    $region54: #{tpu_custom_call.1} parent=1 // pred_check
      _
    $region55: #{tpu_custom_call.1} parent=1 // pred_check_branch
      %161 = sbr.rel (0) target = $region57
    $region56: #{tpu_custom_call.1} parent=1 // pred_region
      %163 = dma.done [#allocation6], 16
    $region57: #{tpu_custom_call.1} parent=1 // pred_fallthru
      _
    // Predicated region
    $region58: #{tpu_custom_call.1} parent=1 // pred_check
      _
    $region59: #{tpu_custom_call.1} parent=1 // pred_check_branch
      %165 = sbr.rel (0) target = $region61
    $region60: #{tpu_custom_call.1} parent=1 // pred_region
      %167 = dma.done [#allocation9], 1024
    $region61: #{tpu_custom_call.1} parent=1 // pred_fallthru
      _
    // Predicated region
    $region62: #{tpu_custom_call.1} parent=1 // pred_check
      _
    $region63: #{tpu_custom_call.1} parent=1 // pred_check_branch
      %169 = sbr.rel (0) target = $region65
    $region64: #{tpu_custom_call.1} parent=1 // pred_region
      %171 = dma.done [#allocation9], 32
    $region65: #{tpu_custom_call.1} parent=1 // pred_fallthru
      _
    // Predicated region
    $region66: #{tpu_custom_call.1} parent=1 // pred_check
      _
    $region67: #{tpu_custom_call.1} parent=1 // pred_check_branch
      %173 = sbr.rel (0) target = $region69
    $region68: #{tpu_custom_call.1} parent=1 // pred_region
      %175 = dma.done [#allocation12], 12800
    $region69: #{tpu_custom_call.1} parent=1 // pred_fallthru
      _
    // Predicated region
    $region70: #{tpu_custom_call.1} parent=1 // pred_check
      _
    $region71: #{tpu_custom_call.1} parent=1 // pred_check_branch
      %177 = sbr.rel (0) target = $region73
    $region72: #{tpu_custom_call.1} parent=1 // pred_region
      %179 = dma.done [#allocation12], 64
    $region73: #{tpu_custom_call.1} parent=1 // pred_fallthru
      _
    // Predicated region
    $region74: #{tpu_custom_call.1} parent=1 // pred_check
      _
    $region75: #{tpu_custom_call.1} parent=1 // pred_check_branch
      %181 = sbr.rel (0) target = $region77
    $region76: #{tpu_custom_call.1} parent=1 // pred_region
      %183 = dma.done [#allocation15], 38400
    $region77: #{tpu_custom_call.1} parent=1 // pred_fallthru
      _
    // Predicated region
    $region78: #{tpu_custom_call.1} parent=1 // pred_check
      _
    $region79: #{tpu_custom_call.1} parent=1 // pred_check_branch
      %185 = sbr.rel (0) target = $region81
    $region80: #{tpu_custom_call.1} parent=1 // pred_region
      %187 = dma.done [#allocation15], 96
    $region81: #{tpu_custom_call.1} parent=1 // pred_fallthru
      _
    // Predicated region
    $region82: #{tpu_custom_call.1} parent=1 // pred_check
      _
    $region83: #{tpu_custom_call.1} parent=1 // pred_check_branch
      %189 = sbr.rel (0) target = $region85
    $region84: #{tpu_custom_call.1} parent=1 // pred_region
      %191 = dma.done [#allocation18], 87040
    $region85: #{tpu_custom_call.1} parent=1 // pred_fallthru
      _
    // Predicated region
    $region86: #{tpu_custom_call.1} parent=1 // pred_check
      _
    $region87: #{tpu_custom_call.1} parent=1 // pred_check_branch
      %193 = sbr.rel (0) target = $region89
    $region88: #{tpu_custom_call.1} parent=1 // pred_region
      %195 = dma.done [#allocation18], 128
    $region89: #{tpu_custom_call.1} parent=1 // pred_fallthru
      _
    %v196 = vld [vmem:[#allocation2] sm:$0x3]
    %v197 = vld [vmem:[#allocation5] sm:$0xff]
    %v198 = vld [vmem:[#allocation7] sm:$0x1]
    %v200 = vperm.slane %v198, 0
    %vm202 = vcmask 64512
    %v204 = vsel %vm202, %v196, 0
    %206 = vmatpush.msra.mxu0 0.0
    %207 = vmatpush.msra.mxu0 0.0
    %208 = vmatpush.msra.mxu0 0.0
    %209 = vmatpush.msra.mxu0 0.0
    %210 = vmatpush.msra.mxu0 0.0
    %211 = vmatpush.msra.mxu0 0.0
    %212 = vmatpush.msra.mxu0 0.0
    %213 = vmatpush.msra.mxu0 0.0
    %214 = vmatpush.msra.mxu0 0.0
    %215 = vmatpush.msra.mxu0 0.0
    %216 = vmatpush.msra.mxu0 0.0
    %217 = vmatpush.msra.mxu0 0.0
    %218 = vmatpush.msra.mxu0 0.0
    %219 = vmatpush.msra.mxu0 0.0
    %220 = vmatpush.msra.mxu0 0.0
    %221 = vmatpush.msra.mxu0 %v197
    %222 = vmatmul.f32.gmra.mxu0 %v204
    %v223 = vpop.f32.mrf.mxu0
    %v224 = vadd.f32 %v200, %v223
    %225 = vdwg.mxu0
    %v226 = vmax.f32 %v224, 0.0
    %v227 = vld [vmem:[#allocation8] sm:$0xff]
    %v228 = vld [vmem:[#allocation8 + $0x8] sm:$0xff]
    %v229 = vld [vmem:[#allocation8 + $0x10] sm:$0xff]
    %v230 = vld [vmem:[#allocation8 + $0x18] sm:$0xff]
    %v231 = vld [vmem:[#allocation8 + $0x20] sm:$0xff]
    %v232 = vld [vmem:[#allocation8 + $0x28] sm:$0xff]
    %v233 = vld [vmem:[#allocation8 + $0x30] sm:$0xff]
    %v234 = vld [vmem:[#allocation8 + $0x38] sm:$0xff]
    %v235 = vld [vmem:[#allocation10] sm:$0x3]
    %v237 = vperm.slane %v235, 0
    %v238 = vperm.slane %v235, 1
    %vm241 = vcmask 261120
    %v243 = vsel %vm241, %v226, 0
    %245 = vmatpush.msra.mxu0 0.0
    %246 = vmatpush.msra.mxu0 0.0
    %247 = vmatpush.msra.mxu0 0.0
    %248 = vmatpush.msra.mxu0 0.0
    %249 = vmatpush.msra.mxu0 0.0
    %250 = vmatpush.msra.mxu0 0.0
    %251 = vmatpush.msra.mxu0 0.0
    %252 = vmatpush.msra.mxu0 0.0
    %253 = vmatpush.msra.mxu0 0.0
    %254 = vmatpush.msra.mxu0 0.0
    %255 = vmatpush.msra.mxu0 0.0
    %256 = vmatpush.msra.mxu0 0.0
    %257 = vmatpush.msra.mxu0 %v233
    %258 = vmatpush.msra.mxu0 %v231
    %259 = vmatpush.msra.mxu0 %v229
    %260 = vmatpush.msra.mxu0 %v227
    %261 = vmatmul.f32.gmra.mxu0 %v243
    %v262 = vpop.f32.mrf.mxu0
    %v263 = vadd.f32 %v237, %v262
    %264 = vdwg.mxu0
    %265 = vmatpush.msra.mxu0 0.0
    %266 = vmatpush.msra.mxu0 0.0
    %267 = vmatpush.msra.mxu0 0.0
    %268 = vmatpush.msra.mxu0 0.0
    %269 = vmatpush.msra.mxu0 0.0
    %270 = vmatpush.msra.mxu0 0.0
    %271 = vmatpush.msra.mxu0 0.0
    %272 = vmatpush.msra.mxu0 0.0
    %273 = vmatpush.msra.mxu0 0.0
    %274 = vmatpush.msra.mxu0 0.0
    %275 = vmatpush.msra.mxu0 0.0
    %276 = vmatpush.msra.mxu0 0.0
    %277 = vmatpush.msra.mxu0 %v234
    %278 = vmatpush.msra.mxu0 %v232
    %279 = vmatpush.msra.mxu0 %v230
    %280 = vmatpush.msra.mxu0 %v228
    %281 = vmatmul.f32.gmra.mxu0 %v243
    %v282 = vpop.f32.mrf.mxu0
    %v283 = vadd.f32 %v238, %v282
    %284 = vdwg.mxu0
    %v285 = vld [vmem:[#allocation11] sm:$0xff]
    %v286 = vld [vmem:[#allocation11 + $0x8] sm:$0xff]
    %v287 = vld [vmem:[#allocation11 + $0x10] sm:$0xff]
    %v288 = vld [vmem:[#allocation11 + $0x18] sm:$0xff]
    %v289 = vld [vmem:[#allocation11 + $0x20] sm:$0xff]
    %v290 = vld [vmem:[#allocation11 + $0x28] sm:$0xff]
    %v291 = vld [vmem:[#allocation11 + $0x30] sm:$0xff]
    %v292 = vld [vmem:[#allocation11 + $0x38] sm:$0xff]
    %v293 = vld [vmem:[#allocation11 + $0x40] sm:$0xff]
    %v294 = vld [vmem:[#allocation11 + $0x48] sm:$0xff]
    %v295 = vld [vmem:[#allocation11 + $0x50] sm:$0xff]
    %v296 = vld [vmem:[#allocation11 + $0x58] sm:$0xff]
    %v297 = vld [vmem:[#allocation11 + $0x60] sm:$0xff]
    %v298 = vld [vmem:[#allocation11 + $0x68] sm:$0xff]
    %v299 = vld [vmem:[#allocation11 + $0x70] sm:$0xff]
    %v300 = vld [vmem:[#allocation11 + $0x78] sm:$0xff]
    %v301 = vld [vmem:[#allocation11 + $0x80] sm:$0xff]
    %v302 = vld [vmem:[#allocation11 + $0x88] sm:$0xff]
    %v303 = vld [vmem:[#allocation11 + $0x90] sm:$0xff]
    %v304 = vld [vmem:[#allocation11 + $0x98] sm:$0xff]
    %v305 = vld [vmem:[#allocation11 + $0xa0] sm:$0xff]
    %v306 = vld [vmem:[#allocation11 + $0xa8] sm:$0xff]
    %v307 = vld [vmem:[#allocation11 + $0xb0] sm:$0xff]
    %v308 = vld [vmem:[#allocation11 + $0xb8] sm:$0xff]
    %v309 = vld [vmem:[#allocation11 + $0xc0] sm:$0xff]
    %v310 = vld [vmem:[#allocation11 + $0xc8] sm:$0xff]
    %v311 = vld [vmem:[#allocation11 + $0xd0] sm:$0xff]
    %v312 = vld [vmem:[#allocation11 + $0xd8] sm:$0xff]
    %v313 = vld [vmem:[#allocation11 + $0xe0] sm:$0xff]
    %v314 = vld [vmem:[#allocation11 + $0xe8] sm:$0xff]
    %v315 = vld [vmem:[#allocation11 + $0xf0] sm:$0xff]
    %v316 = vld [vmem:[#allocation11 + $0xf8] sm:$0xff]
    %v317 = vld [vmem:[#allocation11 + $0x100] sm:$0xff]
    %v318 = vld [vmem:[#allocation11 + $0x108] sm:$0xff]
    %v319 = vld [vmem:[#allocation11 + $0x110] sm:$0xff]
    %v320 = vld [vmem:[#allocation11 + $0x118] sm:$0xff]
    %v321 = vld [vmem:[#allocation11 + $0x120] sm:$0xff]
    %v322 = vld [vmem:[#allocation11 + $0x128] sm:$0xff]
    %v323 = vld [vmem:[#allocation11 + $0x130] sm:$0xff]
    %v324 = vld [vmem:[#allocation11 + $0x138] sm:$0xff]
    %v325 = vld [vmem:[#allocation11 + $0x140] sm:$0xff]
    %v326 = vld [vmem:[#allocation11 + $0x148] sm:$0xff]
    %v327 = vld [vmem:[#allocation11 + $0x150] sm:$0xff]
    %v328 = vld [vmem:[#allocation11 + $0x158] sm:$0xff]
    %v329 = vld [vmem:[#allocation11 + $0x160] sm:$0xff]
    %v330 = vld [vmem:[#allocation11 + $0x168] sm:$0xff]
    %v331 = vld [vmem:[#allocation11 + $0x170] sm:$0xff]
    %v332 = vld [vmem:[#allocation11 + $0x178] sm:$0xff]
    %v333 = vld [vmem:[#allocation11 + $0x180] sm:$0xff]
    %v334 = vld [vmem:[#allocation11 + $0x188] sm:$0xff]
    %v335 = vld [vmem:[#allocation11 + $0x190] sm:$0xff]
    %v336 = vld [vmem:[#allocation11 + $0x198] sm:$0xff]
    %v337 = vld [vmem:[#allocation11 + $0x1a0] sm:$0xff]
    %v338 = vld [vmem:[#allocation11 + $0x1a8] sm:$0xff]
    %v339 = vld [vmem:[#allocation11 + $0x1b0] sm:$0xff]
    %v340 = vld [vmem:[#allocation11 + $0x1b8] sm:$0xff]
    %v341 = vld [vmem:[#allocation11 + $0x1c0] sm:$0xff]
    %v342 = vld [vmem:[#allocation11 + $0x1c8] sm:$0xff]
    %v343 = vld [vmem:[#allocation11 + $0x1d0] sm:$0xff]
    %v344 = vld [vmem:[#allocation11 + $0x1d8] sm:$0xff]
    %v345 = vld [vmem:[#allocation11 + $0x1e0] sm:$0xff]
    %v346 = vld [vmem:[#allocation11 + $0x1e8] sm:$0xff]
    %v347 = vld [vmem:[#allocation11 + $0x1f0] sm:$0xff]
    %v348 = vld [vmem:[#allocation11 + $0x1f8] sm:$0xff]
    %v349 = vld [vmem:[#allocation11 + $0x200] sm:$0xff]
    %v350 = vld [vmem:[#allocation11 + $0x208] sm:$0xff]
    %v351 = vld [vmem:[#allocation11 + $0x210] sm:$0xff]
    %v352 = vld [vmem:[#allocation11 + $0x218] sm:$0xff]
    %v353 = vld [vmem:[#allocation11 + $0x220] sm:$0xff]
    %v354 = vld [vmem:[#allocation11 + $0x228] sm:$0xff]
    %v355 = vld [vmem:[#allocation11 + $0x230] sm:$0xff]
    %v356 = vld [vmem:[#allocation11 + $0x238] sm:$0xff]
    %v357 = vld [vmem:[#allocation11 + $0x240] sm:$0xff]
    %v358 = vld [vmem:[#allocation11 + $0x248] sm:$0xff]
    %v359 = vld [vmem:[#allocation11 + $0x250] sm:$0xff]
    %v360 = vld [vmem:[#allocation11 + $0x258] sm:$0xff]
    %v361 = vld [vmem:[#allocation11 + $0x260] sm:$0xff]
    %v362 = vld [vmem:[#allocation11 + $0x268] sm:$0xff]
    %v363 = vld [vmem:[#allocation11 + $0x270] sm:$0xff]
    %v364 = vld [vmem:[#allocation11 + $0x278] sm:$0xff]
    %v365 = vld [vmem:[#allocation11 + $0x280] sm:$0xff]
    %v366 = vld [vmem:[#allocation11 + $0x288] sm:$0xff]
    %v367 = vld [vmem:[#allocation11 + $0x290] sm:$0xff]
    %v368 = vld [vmem:[#allocation11 + $0x298] sm:$0xff]
    %v369 = vld [vmem:[#allocation11 + $0x2a0] sm:$0xff]
    %v370 = vld [vmem:[#allocation11 + $0x2a8] sm:$0xff]
    %v371 = vld [vmem:[#allocation11 + $0x2b0] sm:$0xff]
    %v372 = vld [vmem:[#allocation11 + $0x2b8] sm:$0xff]
    %v373 = vld [vmem:[#allocation11 + $0x2c0] sm:$0xff]
    %v374 = vld [vmem:[#allocation11 + $0x2c8] sm:$0xff]
    %v375 = vld [vmem:[#allocation11 + $0x2d0] sm:$0xff]
    %v376 = vld [vmem:[#allocation11 + $0x2d8] sm:$0xff]
    %v377 = vld [vmem:[#allocation11 + $0x2e0] sm:$0xff]
    %v378 = vld [vmem:[#allocation11 + $0x2e8] sm:$0xff]
    %v379 = vld [vmem:[#allocation11 + $0x2f0] sm:$0xff]
    %v380 = vld [vmem:[#allocation11 + $0x2f8] sm:$0xff]
    %v381 = vld [vmem:[#allocation11 + $0x300] sm:$0xf]
    %v382 = vld [vmem:[#allocation11 + $0x308] sm:$0xf]
    %v383 = vld [vmem:[#allocation11 + $0x310] sm:$0xf]
    %v384 = vld [vmem:[#allocation11 + $0x318] sm:$0xf]
    %v385 = vld [vmem:[#allocation13] sm:$0xf]
    %v387 = vperm.slane %v385, 0
    %v388 = vperm.slane %v385, 1
    %v389 = vperm.slane %v385, 2
    %v390 = vperm.slane %v385, 3
    %vm395 = vcmask 556032
    %v397 = vsel %vm395, %v283, 0
    %vm399 = vcmask 1043456
    %v401 = vsel %vm399, %v381, 0
    %v404 = vsel %vm399, %v382, 0
    %v407 = vsel %vm399, %v383, 0
    %v410 = vsel %vm399, %v384, 0
    %412 = vmatpush.msra.mxu0 %v345
    %413 = vmatpush.msra.mxu0 %v341
    %414 = vmatpush.msra.mxu0 %v337
    %415 = vmatpush.msra.mxu0 %v333
    %416 = vmatpush.msra.mxu0 %v329
    %417 = vmatpush.msra.mxu0 %v325
    %418 = vmatpush.msra.mxu0 %v321
    %419 = vmatpush.msra.mxu0 %v317
    %420 = vmatpush.msra.mxu0 %v313
    %421 = vmatpush.msra.mxu0 %v309
    %422 = vmatpush.msra.mxu0 %v305
    %423 = vmatpush.msra.mxu0 %v301
    %424 = vmatpush.msra.mxu0 %v297
    %425 = vmatpush.msra.mxu0 %v293
    %426 = vmatpush.msra.mxu0 %v289
    %427 = vmatpush.msra.mxu0 %v285
    %428 = vmatmul.f32.gmra.mxu0 %v263
    %v429 = vpop.f32.mrf.mxu0
    %v430 = vadd.f32 %v387, %v429
    %431 = vdwg.mxu0
    %432 = vmatpush.msra.mxu0 0.0
    %433 = vmatpush.msra.mxu0 0.0
    %434 = vmatpush.msra.mxu0 0.0
    %435 = vmatpush.msra.mxu0 0.0
    %436 = vmatpush.msra.mxu0 0.0
    %437 = vmatpush.msra.mxu0 0.0
    %438 = vmatpush.msra.mxu0 0.0
    %439 = vmatpush.msra.mxu0 %v401
    %440 = vmatpush.msra.mxu0 %v377
    %441 = vmatpush.msra.mxu0 %v373
    %442 = vmatpush.msra.mxu0 %v369
    %443 = vmatpush.msra.mxu0 %v365
    %444 = vmatpush.msra.mxu0 %v361
    %445 = vmatpush.msra.mxu0 %v357
    %446 = vmatpush.msra.mxu0 %v353
    %447 = vmatpush.msra.mxu0 %v349
    %448 = vmatmul.f32.gmra.mxu0 %v397
    %v449 = vpop.f32.mrf.mxu0
    %v450 = vadd.f32 %v430, %v449
    %451 = vdwg.mxu0
    %452 = vmatpush.msra.mxu0 %v346
    %453 = vmatpush.msra.mxu0 %v342
    %454 = vmatpush.msra.mxu0 %v338
    %455 = vmatpush.msra.mxu0 %v334
    %456 = vmatpush.msra.mxu0 %v330
    %457 = vmatpush.msra.mxu0 %v326
    %458 = vmatpush.msra.mxu0 %v322
    %459 = vmatpush.msra.mxu0 %v318
    %460 = vmatpush.msra.mxu0 %v314
    %461 = vmatpush.msra.mxu0 %v310
    %462 = vmatpush.msra.mxu0 %v306
    %463 = vmatpush.msra.mxu0 %v302
    %464 = vmatpush.msra.mxu0 %v298
    %465 = vmatpush.msra.mxu0 %v294
    %466 = vmatpush.msra.mxu0 %v290
    %467 = vmatpush.msra.mxu0 %v286
    %468 = vmatmul.f32.gmra.mxu0 %v263
    %v469 = vpop.f32.mrf.mxu0
    %v470 = vadd.f32 %v388, %v469
    %471 = vdwg.mxu0
    %472 = vmatpush.msra.mxu0 0.0
    %473 = vmatpush.msra.mxu0 0.0
    %474 = vmatpush.msra.mxu0 0.0
    %475 = vmatpush.msra.mxu0 0.0
    %476 = vmatpush.msra.mxu0 0.0
    %477 = vmatpush.msra.mxu0 0.0
    %478 = vmatpush.msra.mxu0 0.0
    %479 = vmatpush.msra.mxu0 %v404
    %480 = vmatpush.msra.mxu0 %v378
    %481 = vmatpush.msra.mxu0 %v374
    %482 = vmatpush.msra.mxu0 %v370
    %483 = vmatpush.msra.mxu0 %v366
    %484 = vmatpush.msra.mxu0 %v362
    %485 = vmatpush.msra.mxu0 %v358
    %486 = vmatpush.msra.mxu0 %v354
    %487 = vmatpush.msra.mxu0 %v350
    %488 = vmatmul.f32.gmra.mxu0 %v397
    %v489 = vpop.f32.mrf.mxu0
    %v490 = vadd.f32 %v470, %v489
    %491 = vdwg.mxu0
    %492 = vmatpush.msra.mxu0 %v347
    %493 = vmatpush.msra.mxu0 %v343
    %494 = vmatpush.msra.mxu0 %v339
    %495 = vmatpush.msra.mxu0 %v335
    %496 = vmatpush.msra.mxu0 %v331
    %497 = vmatpush.msra.mxu0 %v327
    %498 = vmatpush.msra.mxu0 %v323
    %499 = vmatpush.msra.mxu0 %v319
    %500 = vmatpush.msra.mxu0 %v315
    %501 = vmatpush.msra.mxu0 %v311
    %502 = vmatpush.msra.mxu0 %v307
    %503 = vmatpush.msra.mxu0 %v303
    %504 = vmatpush.msra.mxu0 %v299
    %505 = vmatpush.msra.mxu0 %v295
    %506 = vmatpush.msra.mxu0 %v291
    %507 = vmatpush.msra.mxu0 %v287
    %508 = vmatmul.f32.gmra.mxu0 %v263
    %v509 = vpop.f32.mrf.mxu0
    %v510 = vadd.f32 %v389, %v509
    %511 = vdwg.mxu0
    %512 = vmatpush.msra.mxu0 0.0
    %513 = vmatpush.msra.mxu0 0.0
    %514 = vmatpush.msra.mxu0 0.0
    %515 = vmatpush.msra.mxu0 0.0
    %516 = vmatpush.msra.mxu0 0.0
    %517 = vmatpush.msra.mxu0 0.0
    %518 = vmatpush.msra.mxu0 0.0
    %519 = vmatpush.msra.mxu0 %v407
    %520 = vmatpush.msra.mxu0 %v379
    %521 = vmatpush.msra.mxu0 %v375
    %522 = vmatpush.msra.mxu0 %v371
    %523 = vmatpush.msra.mxu0 %v367
    %524 = vmatpush.msra.mxu0 %v363
    %525 = vmatpush.msra.mxu0 %v359
    %526 = vmatpush.msra.mxu0 %v355
    %527 = vmatpush.msra.mxu0 %v351
    %528 = vmatmul.f32.gmra.mxu0 %v397
    %v529 = vpop.f32.mrf.mxu0
    %v530 = vadd.f32 %v510, %v529
    %531 = vdwg.mxu0
    %532 = vmatpush.msra.mxu0 %v348
    %533 = vmatpush.msra.mxu0 %v344
    %534 = vmatpush.msra.mxu0 %v340
    %535 = vmatpush.msra.mxu0 %v336
    %536 = vmatpush.msra.mxu0 %v332
    %537 = vmatpush.msra.mxu0 %v328
    %538 = vmatpush.msra.mxu0 %v324
    %539 = vmatpush.msra.mxu0 %v320
    %540 = vmatpush.msra.mxu0 %v316
    %541 = vmatpush.msra.mxu0 %v312
    %542 = vmatpush.msra.mxu0 %v308
    %543 = vmatpush.msra.mxu0 %v304
    %544 = vmatpush.msra.mxu0 %v300
    %545 = vmatpush.msra.mxu0 %v296
    %546 = vmatpush.msra.mxu0 %v292
    %547 = vmatpush.msra.mxu0 %v288
    %548 = vmatmul.f32.gmra.mxu0 %v263
    %v549 = vpop.f32.mrf.mxu0
    %v550 = vadd.f32 %v390, %v549
    %551 = vdwg.mxu0
    %552 = vmatpush.msra.mxu0 0.0
    %553 = vmatpush.msra.mxu0 0.0
    %554 = vmatpush.msra.mxu0 0.0
    %555 = vmatpush.msra.mxu0 0.0
    %556 = vmatpush.msra.mxu0 0.0
    %557 = vmatpush.msra.mxu0 0.0
    %558 = vmatpush.msra.mxu0 0.0
    %559 = vmatpush.msra.mxu0 %v410
    %560 = vmatpush.msra.mxu0 %v380
    %561 = vmatpush.msra.mxu0 %v376
    %562 = vmatpush.msra.mxu0 %v372
    %563 = vmatpush.msra.mxu0 %v368
    %564 = vmatpush.msra.mxu0 %v364
    %565 = vmatpush.msra.mxu0 %v360
    %566 = vmatpush.msra.mxu0 %v356
    %567 = vmatpush.msra.mxu0 %v352
    %568 = vmatmul.f32.gmra.mxu0 %v397
    %v569 = vpop.f32.mrf.mxu0
    %v570 = vadd.f32 %v550, %v569
    %571 = vdwg.mxu0
    %v572 = vmax.f32 %v450, 0.0
    %v573 = vmax.f32 %v490, 0.0
    %v574 = vmax.f32 %v530, 0.0
    %v575 = vmax.f32 %v570, 0.0
    %v576 = vld [vmem:[#allocation14] sm:$0xff]
    %v577 = vld [vmem:[#allocation14 + $0x8] sm:$0xff]
    %v578 = vld [vmem:[#allocation14 + $0x10] sm:$0xff]
    %v579 = vld [vmem:[#allocation14 + $0x18] sm:$0xff]
    %v580 = vld [vmem:[#allocation14 + $0x20] sm:$0xff]
    %v581 = vld [vmem:[#allocation14 + $0x28] sm:$0xff]
    %v582 = vld [vmem:[#allocation14 + $0x30] sm:$0xff]
    %v583 = vld [vmem:[#allocation14 + $0x38] sm:$0xff]
    %v584 = vld [vmem:[#allocation14 + $0x40] sm:$0xff]
    %v585 = vld [vmem:[#allocation14 + $0x48] sm:$0xff]
    %v586 = vld [vmem:[#allocation14 + $0x50] sm:$0xff]
    %v587 = vld [vmem:[#allocation14 + $0x58] sm:$0xff]
    %v588 = vld [vmem:[#allocation14 + $0x60] sm:$0xff]
    %v589 = vld [vmem:[#allocation14 + $0x68] sm:$0xff]
    %v590 = vld [vmem:[#allocation14 + $0x70] sm:$0xff]
    %v591 = vld [vmem:[#allocation14 + $0x78] sm:$0xff]
    %v592 = vld [vmem:[#allocation14 + $0x80] sm:$0xff]
    %v593 = vld [vmem:[#allocation14 + $0x88] sm:$0xff]
    %v594 = vld [vmem:[#allocation14 + $0x90] sm:$0xff]
    %v595 = vld [vmem:[#allocation14 + $0x98] sm:$0xff]
    %v596 = vld [vmem:[#allocation14 + $0xa0] sm:$0xff]
    %v597 = vld [vmem:[#allocation14 + $0xa8] sm:$0xff]
    %v598 = vld [vmem:[#allocation14 + $0xb0] sm:$0xff]
    %v599 = vld [vmem:[#allocation14 + $0xb8] sm:$0xff]
    %v600 = vld [vmem:[#allocation14 + $0xc0] sm:$0xff]
    %v601 = vld [vmem:[#allocation14 + $0xc8] sm:$0xff]
    %v602 = vld [vmem:[#allocation14 + $0xd0] sm:$0xff]
    %v603 = vld [vmem:[#allocation14 + $0xd8] sm:$0xff]
    %v604 = vld [vmem:[#allocation14 + $0xe0] sm:$0xff]
    %v605 = vld [vmem:[#allocation14 + $0xe8] sm:$0xff]
    %v606 = vld [vmem:[#allocation14 + $0xf0] sm:$0xff]
    %v607 = vld [vmem:[#allocation14 + $0xf8] sm:$0xff]
    %v608 = vld [vmem:[#allocation14 + $0x100] sm:$0xff]
    %v609 = vld [vmem:[#allocation14 + $0x108] sm:$0xff]
    %v610 = vld [vmem:[#allocation14 + $0x110] sm:$0xff]
    %v611 = vld [vmem:[#allocation14 + $0x118] sm:$0xff]
    %v612 = vld [vmem:[#allocation14 + $0x120] sm:$0xff]
    %v613 = vld [vmem:[#allocation14 + $0x128] sm:$0xff]
    %v614 = vld [vmem:[#allocation14 + $0x130] sm:$0xff]
    %v615 = vld [vmem:[#allocation14 + $0x138] sm:$0xff]
    %v616 = vld [vmem:[#allocation14 + $0x140] sm:$0xff]
    %v617 = vld [vmem:[#allocation14 + $0x148] sm:$0xff]
    %v618 = vld [vmem:[#allocation14 + $0x150] sm:$0xff]
    %v619 = vld [vmem:[#allocation14 + $0x158] sm:$0xff]
    %v620 = vld [vmem:[#allocation14 + $0x160] sm:$0xff]
    %v621 = vld [vmem:[#allocation14 + $0x168] sm:$0xff]
    %v622 = vld [vmem:[#allocation14 + $0x170] sm:$0xff]
    %v623 = vld [vmem:[#allocation14 + $0x178] sm:$0xff]
    %v624 = vld [vmem:[#allocation14 + $0x180] sm:$0xff]
    %v625 = vld [vmem:[#allocation14 + $0x188] sm:$0xff]
    %v626 = vld [vmem:[#allocation14 + $0x190] sm:$0xff]
    %v627 = vld [vmem:[#allocation14 + $0x198] sm:$0xff]
    %v628 = vld [vmem:[#allocation14 + $0x1a0] sm:$0xff]
    %v629 = vld [vmem:[#allocation14 + $0x1a8] sm:$0xff]
    %v630 = vld [vmem:[#allocation14 + $0x1b0] sm:$0xff]
    %v631 = vld [vmem:[#allocation14 + $0x1b8] sm:$0xff]
    %v632 = vld [vmem:[#allocation14 + $0x1c0] sm:$0xff]
    %v633 = vld [vmem:[#allocation14 + $0x1c8] sm:$0xff]
    %v634 = vld [vmem:[#allocation14 + $0x1d0] sm:$0xff]
    %v635 = vld [vmem:[#allocation14 + $0x1d8] sm:$0xff]
    %v636 = vld [vmem:[#allocation14 + $0x1e0] sm:$0xff]
    %v637 = vld [vmem:[#allocation14 + $0x1e8] sm:$0xff]
    %v638 = vld [vmem:[#allocation14 + $0x1f0] sm:$0xff]
    %v639 = vld [vmem:[#allocation14 + $0x1f8] sm:$0xff]
    %v640 = vld [vmem:[#allocation14 + $0x200] sm:$0xff]
    %v641 = vld [vmem:[#allocation14 + $0x208] sm:$0xff]
    %v642 = vld [vmem:[#allocation14 + $0x210] sm:$0xff]
    %v643 = vld [vmem:[#allocation14 + $0x218] sm:$0xff]
    %v644 = vld [vmem:[#allocation14 + $0x220] sm:$0xff]
    %v645 = vld [vmem:[#allocation14 + $0x228] sm:$0xff]
    %v646 = vld [vmem:[#allocation14 + $0x230] sm:$0xff]
    %v647 = vld [vmem:[#allocation14 + $0x238] sm:$0xff]
    %v648 = vld [vmem:[#allocation14 + $0x240] sm:$0xff]
    %v649 = vld [vmem:[#allocation14 + $0x248] sm:$0xff]
    %v650 = vld [vmem:[#allocation14 + $0x250] sm:$0xff]
    %v651 = vld [vmem:[#allocation14 + $0x258] sm:$0xff]
    %v652 = vld [vmem:[#allocation14 + $0x260] sm:$0xff]
    %v653 = vld [vmem:[#allocation14 + $0x268] sm:$0xff]
    %v654 = vld [vmem:[#allocation14 + $0x270] sm:$0xff]
    %v655 = vld [vmem:[#allocation14 + $0x278] sm:$0xff]
    %v656 = vld [vmem:[#allocation14 + $0x280] sm:$0xff]
    %v657 = vld [vmem:[#allocation14 + $0x288] sm:$0xff]
    %v658 = vld [vmem:[#allocation14 + $0x290] sm:$0xff]
    %v659 = vld [vmem:[#allocation14 + $0x298] sm:$0xff]
    %v660 = vld [vmem:[#allocation14 + $0x2a0] sm:$0xff]
    %v661 = vld [vmem:[#allocation14 + $0x2a8] sm:$0xff]
    %v662 = vld [vmem:[#allocation14 + $0x2b0] sm:$0xff]
    %v663 = vld [vmem:[#allocation14 + $0x2b8] sm:$0xff]
    %v664 = vld [vmem:[#allocation14 + $0x2c0] sm:$0xff]
    %v665 = vld [vmem:[#allocation14 + $0x2c8] sm:$0xff]
    %v666 = vld [vmem:[#allocation14 + $0x2d0] sm:$0xff]
    %v667 = vld [vmem:[#allocation14 + $0x2d8] sm:$0xff]
    %v668 = vld [vmem:[#allocation14 + $0x2e0] sm:$0xff]
    %v669 = vld [vmem:[#allocation14 + $0x2e8] sm:$0xff]
    %v670 = vld [vmem:[#allocation14 + $0x2f0] sm:$0xff]
    %v671 = vld [vmem:[#allocation14 + $0x2f8] sm:$0xff]
    %v672 = vld [vmem:[#allocation14 + $0x300] sm:$0xff]
    %v673 = vld [vmem:[#allocation14 + $0x308] sm:$0xff]
    %v674 = vld [vmem:[#allocation14 + $0x310] sm:$0xff]
    %v675 = vld [vmem:[#allocation14 + $0x318] sm:$0xff]
    %v676 = vld [vmem:[#allocation14 + $0x320] sm:$0xff]
    %v677 = vld [vmem:[#allocation14 + $0x328] sm:$0xff]
    %v678 = vld [vmem:[#allocation14 + $0x330] sm:$0xff]
    %v679 = vld [vmem:[#allocation14 + $0x338] sm:$0xff]
    %v680 = vld [vmem:[#allocation14 + $0x340] sm:$0xff]
    %v681 = vld [vmem:[#allocation14 + $0x348] sm:$0xff]
    %v682 = vld [vmem:[#allocation14 + $0x350] sm:$0xff]
    %v683 = vld [vmem:[#allocation14 + $0x358] sm:$0xff]
    %v684 = vld [vmem:[#allocation14 + $0x360] sm:$0xff]
    %v685 = vld [vmem:[#allocation14 + $0x368] sm:$0xff]
    %v686 = vld [vmem:[#allocation14 + $0x370] sm:$0xff]
    %v687 = vld [vmem:[#allocation14 + $0x378] sm:$0xff]
    %v688 = vld [vmem:[#allocation14 + $0x380] sm:$0xff]
    %v689 = vld [vmem:[#allocation14 + $0x388] sm:$0xff]
    %v690 = vld [vmem:[#allocation14 + $0x390] sm:$0xff]
    %v691 = vld [vmem:[#allocation14 + $0x398] sm:$0xff]
    %v692 = vld [vmem:[#allocation14 + $0x3a0] sm:$0xff]
    %v693 = vld [vmem:[#allocation14 + $0x3a8] sm:$0xff]
    %v694 = vld [vmem:[#allocation14 + $0x3b0] sm:$0xff]
    %v695 = vld [vmem:[#allocation14 + $0x3b8] sm:$0xff]
    %v696 = vld [vmem:[#allocation14 + $0x3c0] sm:$0xff]
    %v697 = vld [vmem:[#allocation14 + $0x3c8] sm:$0xff]
    %v698 = vld [vmem:[#allocation14 + $0x3d0] sm:$0xff]
    %v699 = vld [vmem:[#allocation14 + $0x3d8] sm:$0xff]
    %v700 = vld [vmem:[#allocation14 + $0x3e0] sm:$0xff]
    %v701 = vld [vmem:[#allocation14 + $0x3e8] sm:$0xff]
    %v702 = vld [vmem:[#allocation14 + $0x3f0] sm:$0xff]
    %v703 = vld [vmem:[#allocation14 + $0x3f8] sm:$0xff]
    %v704 = vld [vmem:[#allocation14 + $0x400] sm:$0xff]
    %v705 = vld [vmem:[#allocation14 + $0x408] sm:$0xff]
    %v706 = vld [vmem:[#allocation14 + $0x410] sm:$0xff]
    %v707 = vld [vmem:[#allocation14 + $0x418] sm:$0xff]
    %v708 = vld [vmem:[#allocation14 + $0x420] sm:$0xff]
    %v709 = vld [vmem:[#allocation14 + $0x428] sm:$0xff]
    %v710 = vld [vmem:[#allocation14 + $0x430] sm:$0xff]
    %v711 = vld [vmem:[#allocation14 + $0x438] sm:$0xff]
    %v712 = vld [vmem:[#allocation14 + $0x440] sm:$0xff]
    %v713 = vld [vmem:[#allocation14 + $0x448] sm:$0xff]
    %v714 = vld [vmem:[#allocation14 + $0x450] sm:$0xff]
    %v715 = vld [vmem:[#allocation14 + $0x458] sm:$0xff]
    %v716 = vld [vmem:[#allocation14 + $0x460] sm:$0xff]
    %v717 = vld [vmem:[#allocation14 + $0x468] sm:$0xff]
    %v718 = vld [vmem:[#allocation14 + $0x470] sm:$0xff]
    %v719 = vld [vmem:[#allocation14 + $0x478] sm:$0xff]
    %v720 = vld [vmem:[#allocation14 + $0x480] sm:$0xff]
    %v721 = vld [vmem:[#allocation14 + $0x488] sm:$0xff]
    %v722 = vld [vmem:[#allocation14 + $0x490] sm:$0xff]
    %v723 = vld [vmem:[#allocation14 + $0x498] sm:$0xff]
    %v724 = vld [vmem:[#allocation14 + $0x4a0] sm:$0xff]
    %v725 = vld [vmem:[#allocation14 + $0x4a8] sm:$0xff]
    %v726 = vld [vmem:[#allocation14 + $0x4b0] sm:$0xff]
    %v727 = vld [vmem:[#allocation14 + $0x4b8] sm:$0xff]
    %v728 = vld [vmem:[#allocation14 + $0x4c0] sm:$0xff]
    %v729 = vld [vmem:[#allocation14 + $0x4c8] sm:$0xff]
    %v730 = vld [vmem:[#allocation14 + $0x4d0] sm:$0xff]
    %v731 = vld [vmem:[#allocation14 + $0x4d8] sm:$0xff]
    %v732 = vld [vmem:[#allocation14 + $0x4e0] sm:$0xff]
    %v733 = vld [vmem:[#allocation14 + $0x4e8] sm:$0xff]
    %v734 = vld [vmem:[#allocation14 + $0x4f0] sm:$0xff]
    %v735 = vld [vmem:[#allocation14 + $0x4f8] sm:$0xff]
    %v736 = vld [vmem:[#allocation14 + $0x500] sm:$0xff]
    %v737 = vld [vmem:[#allocation14 + $0x508] sm:$0xff]
    %v738 = vld [vmem:[#allocation14 + $0x510] sm:$0xff]
    %v739 = vld [vmem:[#allocation14 + $0x518] sm:$0xff]
    %v740 = vld [vmem:[#allocation14 + $0x520] sm:$0xff]
    %v741 = vld [vmem:[#allocation14 + $0x528] sm:$0xff]
    %v742 = vld [vmem:[#allocation14 + $0x530] sm:$0xff]
    %v743 = vld [vmem:[#allocation14 + $0x538] sm:$0xff]
    %v744 = vld [vmem:[#allocation14 + $0x540] sm:$0xff]
    %v745 = vld [vmem:[#allocation14 + $0x548] sm:$0xff]
    %v746 = vld [vmem:[#allocation14 + $0x550] sm:$0xff]
    %v747 = vld [vmem:[#allocation14 + $0x558] sm:$0xff]
    %v748 = vld [vmem:[#allocation14 + $0x560] sm:$0xff]
    %v749 = vld [vmem:[#allocation14 + $0x568] sm:$0xff]
    %v750 = vld [vmem:[#allocation14 + $0x570] sm:$0xff]
    %v751 = vld [vmem:[#allocation14 + $0x578] sm:$0xff]
    %v752 = vld [vmem:[#allocation14 + $0x580] sm:$0xff]
    %v753 = vld [vmem:[#allocation14 + $0x588] sm:$0xff]
    %v754 = vld [vmem:[#allocation14 + $0x590] sm:$0xff]
    %v755 = vld [vmem:[#allocation14 + $0x598] sm:$0xff]
    %v756 = vld [vmem:[#allocation14 + $0x5a0] sm:$0xff]
    %v757 = vld [vmem:[#allocation14 + $0x5a8] sm:$0xff]
    %v758 = vld [vmem:[#allocation14 + $0x5b0] sm:$0xff]
    %v759 = vld [vmem:[#allocation14 + $0x5b8] sm:$0xff]
    %v760 = vld [vmem:[#allocation14 + $0x5c0] sm:$0xff]
    %v761 = vld [vmem:[#allocation14 + $0x5c8] sm:$0xff]
    %v762 = vld [vmem:[#allocation14 + $0x5d0] sm:$0xff]
    %v763 = vld [vmem:[#allocation14 + $0x5d8] sm:$0xff]
    %v764 = vld [vmem:[#allocation14 + $0x5e0] sm:$0xff]
    %v765 = vld [vmem:[#allocation14 + $0x5e8] sm:$0xff]
    %v766 = vld [vmem:[#allocation14 + $0x5f0] sm:$0xff]
    %v767 = vld [vmem:[#allocation14 + $0x5f8] sm:$0xff]
    %v768 = vld [vmem:[#allocation14 + $0x600] sm:$0xff]
    %v769 = vld [vmem:[#allocation14 + $0x608] sm:$0xff]
    %v770 = vld [vmem:[#allocation14 + $0x610] sm:$0xff]
    %v771 = vld [vmem:[#allocation14 + $0x618] sm:$0xff]
    %v772 = vld [vmem:[#allocation14 + $0x620] sm:$0xff]
    %v773 = vld [vmem:[#allocation14 + $0x628] sm:$0xff]
    %v774 = vld [vmem:[#allocation14 + $0x630] sm:$0xff]
    %v775 = vld [vmem:[#allocation14 + $0x638] sm:$0xff]
    %v776 = vld [vmem:[#allocation14 + $0x640] sm:$0xff]
    %v777 = vld [vmem:[#allocation14 + $0x648] sm:$0xff]
    %v778 = vld [vmem:[#allocation14 + $0x650] sm:$0xff]
    %v779 = vld [vmem:[#allocation14 + $0x658] sm:$0xff]
    %v780 = vld [vmem:[#allocation14 + $0x660] sm:$0xff]
    %v781 = vld [vmem:[#allocation14 + $0x668] sm:$0xff]
    %v782 = vld [vmem:[#allocation14 + $0x670] sm:$0xff]
    %v783 = vld [vmem:[#allocation14 + $0x678] sm:$0xff]
    %v784 = vld [vmem:[#allocation14 + $0x680] sm:$0xff]
    %v785 = vld [vmem:[#allocation14 + $0x688] sm:$0xff]
    %v786 = vld [vmem:[#allocation14 + $0x690] sm:$0xff]
    %v787 = vld [vmem:[#allocation14 + $0x698] sm:$0xff]
    %v788 = vld [vmem:[#allocation14 + $0x6a0] sm:$0xff]
    %v789 = vld [vmem:[#allocation14 + $0x6a8] sm:$0xff]
    %v790 = vld [vmem:[#allocation14 + $0x6b0] sm:$0xff]
    %v791 = vld [vmem:[#allocation14 + $0x6b8] sm:$0xff]
    %v792 = vld [vmem:[#allocation14 + $0x6c0] sm:$0xff]
    %v793 = vld [vmem:[#allocation14 + $0x6c8] sm:$0xff]
    %v794 = vld [vmem:[#allocation14 + $0x6d0] sm:$0xff]
    %v795 = vld [vmem:[#allocation14 + $0x6d8] sm:$0xff]
    %v796 = vld [vmem:[#allocation14 + $0x6e0] sm:$0xff]
    %v797 = vld [vmem:[#allocation14 + $0x6e8] sm:$0xff]
    %v798 = vld [vmem:[#allocation14 + $0x6f0] sm:$0xff]
    %v799 = vld [vmem:[#allocation14 + $0x6f8] sm:$0xff]
    %v800 = vld [vmem:[#allocation14 + $0x700] sm:$0xff]
    %v801 = vld [vmem:[#allocation14 + $0x708] sm:$0xff]
    %v802 = vld [vmem:[#allocation14 + $0x710] sm:$0xff]
    %v803 = vld [vmem:[#allocation14 + $0x718] sm:$0xff]
    %v804 = vld [vmem:[#allocation14 + $0x720] sm:$0xff]
    %v805 = vld [vmem:[#allocation14 + $0x728] sm:$0xff]
    %v806 = vld [vmem:[#allocation14 + $0x730] sm:$0xff]
    %v807 = vld [vmem:[#allocation14 + $0x738] sm:$0xff]
    %v808 = vld [vmem:[#allocation14 + $0x740] sm:$0xff]
    %v809 = vld [vmem:[#allocation14 + $0x748] sm:$0xff]
    %v810 = vld [vmem:[#allocation14 + $0x750] sm:$0xff]
    %v811 = vld [vmem:[#allocation14 + $0x758] sm:$0xff]
    %v812 = vld [vmem:[#allocation14 + $0x760] sm:$0xff]
    %v813 = vld [vmem:[#allocation14 + $0x768] sm:$0xff]
    %v814 = vld [vmem:[#allocation14 + $0x770] sm:$0xff]
    %v815 = vld [vmem:[#allocation14 + $0x778] sm:$0xff]
    %v816 = vld [vmem:[#allocation14 + $0x780] sm:$0xff]
    %v817 = vld [vmem:[#allocation14 + $0x788] sm:$0xff]
    %v818 = vld [vmem:[#allocation14 + $0x790] sm:$0xff]
    %v819 = vld [vmem:[#allocation14 + $0x798] sm:$0xff]
    %v820 = vld [vmem:[#allocation14 + $0x7a0] sm:$0xff]
    %v821 = vld [vmem:[#allocation14 + $0x7a8] sm:$0xff]
    %v822 = vld [vmem:[#allocation14 + $0x7b0] sm:$0xff]
    %v823 = vld [vmem:[#allocation14 + $0x7b8] sm:$0xff]
    %v824 = vld [vmem:[#allocation14 + $0x7c0] sm:$0xff]
    %v825 = vld [vmem:[#allocation14 + $0x7c8] sm:$0xff]
    %v826 = vld [vmem:[#allocation14 + $0x7d0] sm:$0xff]
    %v827 = vld [vmem:[#allocation14 + $0x7d8] sm:$0xff]
    %v828 = vld [vmem:[#allocation14 + $0x7e0] sm:$0xff]
    %v829 = vld [vmem:[#allocation14 + $0x7e8] sm:$0xff]
    %v830 = vld [vmem:[#allocation14 + $0x7f0] sm:$0xff]
    %v831 = vld [vmem:[#allocation14 + $0x7f8] sm:$0xff]
    %v832 = vld [vmem:[#allocation14 + $0x800] sm:$0xff]
    %v833 = vld [vmem:[#allocation14 + $0x808] sm:$0xff]
    %v834 = vld [vmem:[#allocation14 + $0x810] sm:$0xff]
    %v835 = vld [vmem:[#allocation14 + $0x818] sm:$0xff]
    %v836 = vld [vmem:[#allocation14 + $0x820] sm:$0xff]
    %v837 = vld [vmem:[#allocation14 + $0x828] sm:$0xff]
    %v838 = vld [vmem:[#allocation14 + $0x830] sm:$0xff]
    %v839 = vld [vmem:[#allocation14 + $0x838] sm:$0xff]
    %v840 = vld [vmem:[#allocation14 + $0x840] sm:$0xff]
    %v841 = vld [vmem:[#allocation14 + $0x848] sm:$0xff]
    %v842 = vld [vmem:[#allocation14 + $0x850] sm:$0xff]
    %v843 = vld [vmem:[#allocation14 + $0x858] sm:$0xff]
    %v844 = vld [vmem:[#allocation14 + $0x860] sm:$0xff]
    %v845 = vld [vmem:[#allocation14 + $0x868] sm:$0xff]
    %v846 = vld [vmem:[#allocation14 + $0x870] sm:$0xff]
    %v847 = vld [vmem:[#allocation14 + $0x878] sm:$0xff]
    %v848 = vld [vmem:[#allocation14 + $0x880] sm:$0xff]
    %v849 = vld [vmem:[#allocation14 + $0x888] sm:$0xff]
    %v850 = vld [vmem:[#allocation14 + $0x890] sm:$0xff]
    %v851 = vld [vmem:[#allocation14 + $0x898] sm:$0xff]
    %v852 = vld [vmem:[#allocation14 + $0x8a0] sm:$0xff]
    %v853 = vld [vmem:[#allocation14 + $0x8a8] sm:$0xff]
    %v854 = vld [vmem:[#allocation14 + $0x8b0] sm:$0xff]
    %v855 = vld [vmem:[#allocation14 + $0x8b8] sm:$0xff]
    %v856 = vld [vmem:[#allocation14 + $0x8c0] sm:$0xff]
    %v857 = vld [vmem:[#allocation14 + $0x8c8] sm:$0xff]
    %v858 = vld [vmem:[#allocation14 + $0x8d0] sm:$0xff]
    %v859 = vld [vmem:[#allocation14 + $0x8d8] sm:$0xff]
    %v860 = vld [vmem:[#allocation14 + $0x8e0] sm:$0xff]
    %v861 = vld [vmem:[#allocation14 + $0x8e8] sm:$0xff]
    %v862 = vld [vmem:[#allocation14 + $0x8f0] sm:$0xff]
    %v863 = vld [vmem:[#allocation14 + $0x8f8] sm:$0xff]
    %v864 = vld [vmem:[#allocation14 + $0x900] sm:$0xff]
    %v865 = vld [vmem:[#allocation14 + $0x908] sm:$0xff]
    %v866 = vld [vmem:[#allocation14 + $0x910] sm:$0xff]
    %v867 = vld [vmem:[#allocation14 + $0x918] sm:$0xff]
    %v868 = vld [vmem:[#allocation14 + $0x920] sm:$0xff]
    %v869 = vld [vmem:[#allocation14 + $0x928] sm:$0xff]
    %v870 = vld [vmem:[#allocation14 + $0x930] sm:$0xff]
    %v871 = vld [vmem:[#allocation14 + $0x938] sm:$0xff]
    %v872 = vld [vmem:[#allocation14 + $0x940] sm:$0xff]
    %v873 = vld [vmem:[#allocation14 + $0x948] sm:$0xff]
    %v874 = vld [vmem:[#allocation14 + $0x950] sm:$0xff]
    %v875 = vld [vmem:[#allocation14 + $0x958] sm:$0xff]
    %v876 = vld [vmem:[#allocation16] sm:$0x3f]
    %v878 = vperm.slane %v876, 0
    %v879 = vperm.slane %v876, 1
    %v880 = vperm.slane %v876, 2
    %v881 = vperm.slane %v876, 3
    %v882 = vperm.slane %v876, 4
    %v883 = vperm.slane %v876, 5
    %vm890 = vcmask 130048
    %v892 = vsel %vm890, %v575, 0
    %894 = vmatpush.msra.mxu0 %v666
    %895 = vmatpush.msra.mxu0 %v660
    %896 = vmatpush.msra.mxu0 %v654
    %897 = vmatpush.msra.mxu0 %v648
    %898 = vmatpush.msra.mxu0 %v642
    %899 = vmatpush.msra.mxu0 %v636
    %900 = vmatpush.msra.mxu0 %v630
    %901 = vmatpush.msra.mxu0 %v624
    %902 = vmatpush.msra.mxu0 %v618
    %903 = vmatpush.msra.mxu0 %v612
    %904 = vmatpush.msra.mxu0 %v606
    %905 = vmatpush.msra.mxu0 %v600
    %906 = vmatpush.msra.mxu0 %v594
    %907 = vmatpush.msra.mxu0 %v588
    %908 = vmatpush.msra.mxu0 %v582
    %909 = vmatpush.msra.mxu0 %v576
    %910 = vmatmul.f32.gmra.mxu0 %v572
    %v911 = vpop.f32.mrf.mxu0
    %v912 = vadd.f32 %v878, %v911
    %913 = vdwg.mxu0
    %914 = vmatpush.msra.mxu0 %v762
    %915 = vmatpush.msra.mxu0 %v756
    %916 = vmatpush.msra.mxu0 %v750
    %917 = vmatpush.msra.mxu0 %v744
    %918 = vmatpush.msra.mxu0 %v738
    %919 = vmatpush.msra.mxu0 %v732
    %920 = vmatpush.msra.mxu0 %v726
    %921 = vmatpush.msra.mxu0 %v720
    %922 = vmatpush.msra.mxu0 %v714
    %923 = vmatpush.msra.mxu0 %v708
    %924 = vmatpush.msra.mxu0 %v702
    %925 = vmatpush.msra.mxu0 %v696
    %926 = vmatpush.msra.mxu0 %v690
    %927 = vmatpush.msra.mxu0 %v684
    %928 = vmatpush.msra.mxu0 %v678
    %929 = vmatpush.msra.mxu0 %v672
    %930 = vmatmul.f32.gmra.mxu0 %v573
    %v931 = vpop.f32.mrf.mxu0
    %v932 = vadd.f32 %v912, %v931
    %933 = vdwg.mxu0
    %934 = vmatpush.msra.mxu0 %v858
    %935 = vmatpush.msra.mxu0 %v852
    %936 = vmatpush.msra.mxu0 %v846
    %937 = vmatpush.msra.mxu0 %v840
    %938 = vmatpush.msra.mxu0 %v834
    %939 = vmatpush.msra.mxu0 %v828
    %940 = vmatpush.msra.mxu0 %v822
    %941 = vmatpush.msra.mxu0 %v816
    %942 = vmatpush.msra.mxu0 %v810
    %943 = vmatpush.msra.mxu0 %v804
    %944 = vmatpush.msra.mxu0 %v798
    %945 = vmatpush.msra.mxu0 %v792
    %946 = vmatpush.msra.mxu0 %v786
    %947 = vmatpush.msra.mxu0 %v780
    %948 = vmatpush.msra.mxu0 %v774
    %949 = vmatpush.msra.mxu0 %v768
    %950 = vmatmul.f32.gmra.mxu0 %v574
    %v951 = vpop.f32.mrf.mxu0
    %v952 = vadd.f32 %v932, %v951
    %953 = vdwg.mxu0
    %954 = vmatpush.msra.mxu0 0.0
    %955 = vmatpush.msra.mxu0 0.0
    %956 = vmatpush.msra.mxu0 0.0
    %957 = vmatpush.msra.mxu0 0.0
    %958 = vmatpush.msra.mxu0 0.0
    %959 = vmatpush.msra.mxu0 0.0
    %960 = vmatpush.msra.mxu0 0.0
    %961 = vmatpush.msra.mxu0 0.0
    %962 = vmatpush.msra.mxu0 0.0
    %963 = vmatpush.msra.mxu0 0.0
    %964 = vmatpush.msra.mxu0 0.0
    %965 = vmatpush.msra.mxu0 0.0
    %966 = vmatpush.msra.mxu0 0.0
    %967 = vmatpush.msra.mxu0 0.0
    %968 = vmatpush.msra.mxu0 %v870
    %969 = vmatpush.msra.mxu0 %v864
    %970 = vmatmul.f32.gmra.mxu0 %v892
    %v971 = vpop.f32.mrf.mxu0
    %v972 = vadd.f32 %v952, %v971
    %973 = vdwg.mxu0
    %974 = vmatpush.msra.mxu0 %v667
    %975 = vmatpush.msra.mxu0 %v661
    %976 = vmatpush.msra.mxu0 %v655
    %977 = vmatpush.msra.mxu0 %v649
    %978 = vmatpush.msra.mxu0 %v643
    %979 = vmatpush.msra.mxu0 %v637
    %980 = vmatpush.msra.mxu0 %v631
    %981 = vmatpush.msra.mxu0 %v625
    %982 = vmatpush.msra.mxu0 %v619
    %983 = vmatpush.msra.mxu0 %v613
    %984 = vmatpush.msra.mxu0 %v607
    %985 = vmatpush.msra.mxu0 %v601
    %986 = vmatpush.msra.mxu0 %v595
    %987 = vmatpush.msra.mxu0 %v589
    %988 = vmatpush.msra.mxu0 %v583
    %989 = vmatpush.msra.mxu0 %v577
    %990 = vmatmul.f32.gmra.mxu0 %v572
    %v991 = vpop.f32.mrf.mxu0
    %v992 = vadd.f32 %v879, %v991
    %993 = vdwg.mxu0
    %994 = vmatpush.msra.mxu0 %v763
    %995 = vmatpush.msra.mxu0 %v757
    %996 = vmatpush.msra.mxu0 %v751
    %997 = vmatpush.msra.mxu0 %v745
    %998 = vmatpush.msra.mxu0 %v739
    %999 = vmatpush.msra.mxu0 %v733
    %1000 = vmatpush.msra.mxu0 %v727
    %1001 = vmatpush.msra.mxu0 %v721
    %1002 = vmatpush.msra.mxu0 %v715
    %1003 = vmatpush.msra.mxu0 %v709
    %1004 = vmatpush.msra.mxu0 %v703
    %1005 = vmatpush.msra.mxu0 %v697
    %1006 = vmatpush.msra.mxu0 %v691
    %1007 = vmatpush.msra.mxu0 %v685
    %1008 = vmatpush.msra.mxu0 %v679
    %1009 = vmatpush.msra.mxu0 %v673
    %1010 = vmatmul.f32.gmra.mxu0 %v573
    %v1011 = vpop.f32.mrf.mxu0
    %v1012 = vadd.f32 %v992, %v1011
    %1013 = vdwg.mxu0
    %1014 = vmatpush.msra.mxu0 %v859
    %1015 = vmatpush.msra.mxu0 %v853
    %1016 = vmatpush.msra.mxu0 %v847
    %1017 = vmatpush.msra.mxu0 %v841
    %1018 = vmatpush.msra.mxu0 %v835
    %1019 = vmatpush.msra.mxu0 %v829
    %1020 = vmatpush.msra.mxu0 %v823
    %1021 = vmatpush.msra.mxu0 %v817
    %1022 = vmatpush.msra.mxu0 %v811
    %1023 = vmatpush.msra.mxu0 %v805
    %1024 = vmatpush.msra.mxu0 %v799
    %1025 = vmatpush.msra.mxu0 %v793
    %1026 = vmatpush.msra.mxu0 %v787
    %1027 = vmatpush.msra.mxu0 %v781
    %1028 = vmatpush.msra.mxu0 %v775
    %1029 = vmatpush.msra.mxu0 %v769
    %1030 = vmatmul.f32.gmra.mxu0 %v574
    %v1031 = vpop.f32.mrf.mxu0
    %v1032 = vadd.f32 %v1012, %v1031
    %1033 = vdwg.mxu0
    %1034 = vmatpush.msra.mxu0 0.0
    %1035 = vmatpush.msra.mxu0 0.0
    %1036 = vmatpush.msra.mxu0 0.0
    %1037 = vmatpush.msra.mxu0 0.0
    %1038 = vmatpush.msra.mxu0 0.0
    %1039 = vmatpush.msra.mxu0 0.0
    %1040 = vmatpush.msra.mxu0 0.0
    %1041 = vmatpush.msra.mxu0 0.0
    %1042 = vmatpush.msra.mxu0 0.0
    %1043 = vmatpush.msra.mxu0 0.0
    %1044 = vmatpush.msra.mxu0 0.0
    %1045 = vmatpush.msra.mxu0 0.0
    %1046 = vmatpush.msra.mxu0 0.0
    %1047 = vmatpush.msra.mxu0 0.0
    %1048 = vmatpush.msra.mxu0 %v871
    %1049 = vmatpush.msra.mxu0 %v865
    %1050 = vmatmul.f32.gmra.mxu0 %v892
    %v1051 = vpop.f32.mrf.mxu0
    %v1052 = vadd.f32 %v1032, %v1051
    %1053 = vdwg.mxu0
    %1054 = vmatpush.msra.mxu0 %v668
    %1055 = vmatpush.msra.mxu0 %v662
    %1056 = vmatpush.msra.mxu0 %v656
    %1057 = vmatpush.msra.mxu0 %v650
    %1058 = vmatpush.msra.mxu0 %v644
    %1059 = vmatpush.msra.mxu0 %v638
    %1060 = vmatpush.msra.mxu0 %v632
    %1061 = vmatpush.msra.mxu0 %v626
    %1062 = vmatpush.msra.mxu0 %v620
    %1063 = vmatpush.msra.mxu0 %v614
    %1064 = vmatpush.msra.mxu0 %v608
    %1065 = vmatpush.msra.mxu0 %v602
    %1066 = vmatpush.msra.mxu0 %v596
    %1067 = vmatpush.msra.mxu0 %v590
    %1068 = vmatpush.msra.mxu0 %v584
    %1069 = vmatpush.msra.mxu0 %v578
    %1070 = vmatmul.f32.gmra.mxu0 %v572
    %v1071 = vpop.f32.mrf.mxu0
    %v1072 = vadd.f32 %v880, %v1071
    %1073 = vdwg.mxu0
    %1074 = vmatpush.msra.mxu0 %v764
    %1075 = vmatpush.msra.mxu0 %v758
    %1076 = vmatpush.msra.mxu0 %v752
    %1077 = vmatpush.msra.mxu0 %v746
    %1078 = vmatpush.msra.mxu0 %v740
    %1079 = vmatpush.msra.mxu0 %v734
    %1080 = vmatpush.msra.mxu0 %v728
    %1081 = vmatpush.msra.mxu0 %v722
    %1082 = vmatpush.msra.mxu0 %v716
    %1083 = vmatpush.msra.mxu0 %v710
    %1084 = vmatpush.msra.mxu0 %v704
    %1085 = vmatpush.msra.mxu0 %v698
    %1086 = vmatpush.msra.mxu0 %v692
    %1087 = vmatpush.msra.mxu0 %v686
    %1088 = vmatpush.msra.mxu0 %v680
    %1089 = vmatpush.msra.mxu0 %v674
    %1090 = vmatmul.f32.gmra.mxu0 %v573
    %v1091 = vpop.f32.mrf.mxu0
    %v1092 = vadd.f32 %v1072, %v1091
    %1093 = vdwg.mxu0
    %1094 = vmatpush.msra.mxu0 %v860
    %1095 = vmatpush.msra.mxu0 %v854
    %1096 = vmatpush.msra.mxu0 %v848
    %1097 = vmatpush.msra.mxu0 %v842
    %1098 = vmatpush.msra.mxu0 %v836
    %1099 = vmatpush.msra.mxu0 %v830
    %1100 = vmatpush.msra.mxu0 %v824
    %1101 = vmatpush.msra.mxu0 %v818
    %1102 = vmatpush.msra.mxu0 %v812
    %1103 = vmatpush.msra.mxu0 %v806
    %1104 = vmatpush.msra.mxu0 %v800
    %1105 = vmatpush.msra.mxu0 %v794
    %1106 = vmatpush.msra.mxu0 %v788
    %1107 = vmatpush.msra.mxu0 %v782
    %1108 = vmatpush.msra.mxu0 %v776
    %1109 = vmatpush.msra.mxu0 %v770
    %1110 = vmatmul.f32.gmra.mxu0 %v574
    %v1111 = vpop.f32.mrf.mxu0
    %v1112 = vadd.f32 %v1092, %v1111
    %1113 = vdwg.mxu0
    %1114 = vmatpush.msra.mxu0 0.0
    %1115 = vmatpush.msra.mxu0 0.0
    %1116 = vmatpush.msra.mxu0 0.0
    %1117 = vmatpush.msra.mxu0 0.0
    %1118 = vmatpush.msra.mxu0 0.0
    %1119 = vmatpush.msra.mxu0 0.0
    %1120 = vmatpush.msra.mxu0 0.0
    %1121 = vmatpush.msra.mxu0 0.0
    %1122 = vmatpush.msra.mxu0 0.0
    %1123 = vmatpush.msra.mxu0 0.0
    %1124 = vmatpush.msra.mxu0 0.0
    %1125 = vmatpush.msra.mxu0 0.0
    %1126 = vmatpush.msra.mxu0 0.0
    %1127 = vmatpush.msra.mxu0 0.0
    %1128 = vmatpush.msra.mxu0 %v872
    %1129 = vmatpush.msra.mxu0 %v866
    %1130 = vmatmul.f32.gmra.mxu0 %v892
    %v1131 = vpop.f32.mrf.mxu0
    %v1132 = vadd.f32 %v1112, %v1131
    %1133 = vdwg.mxu0
    %1134 = vmatpush.msra.mxu0 %v669
    %1135 = vmatpush.msra.mxu0 %v663
    %1136 = vmatpush.msra.mxu0 %v657
    %1137 = vmatpush.msra.mxu0 %v651
    %1138 = vmatpush.msra.mxu0 %v645
    %1139 = vmatpush.msra.mxu0 %v639
    %1140 = vmatpush.msra.mxu0 %v633
    %1141 = vmatpush.msra.mxu0 %v627
    %1142 = vmatpush.msra.mxu0 %v621
    %1143 = vmatpush.msra.mxu0 %v615
    %1144 = vmatpush.msra.mxu0 %v609
    %1145 = vmatpush.msra.mxu0 %v603
    %1146 = vmatpush.msra.mxu0 %v597
    %1147 = vmatpush.msra.mxu0 %v591
    %1148 = vmatpush.msra.mxu0 %v585
    %1149 = vmatpush.msra.mxu0 %v579
    %1150 = vmatmul.f32.gmra.mxu0 %v572
    %v1151 = vpop.f32.mrf.mxu0
    %v1152 = vadd.f32 %v881, %v1151
    %1153 = vdwg.mxu0
    %1154 = vmatpush.msra.mxu0 %v765
    %1155 = vmatpush.msra.mxu0 %v759
    %1156 = vmatpush.msra.mxu0 %v753
    %1157 = vmatpush.msra.mxu0 %v747
    %1158 = vmatpush.msra.mxu0 %v741
    %1159 = vmatpush.msra.mxu0 %v735
    %1160 = vmatpush.msra.mxu0 %v729
    %1161 = vmatpush.msra.mxu0 %v723
    %1162 = vmatpush.msra.mxu0 %v717
    %1163 = vmatpush.msra.mxu0 %v711
    %1164 = vmatpush.msra.mxu0 %v705
    %1165 = vmatpush.msra.mxu0 %v699
    %1166 = vmatpush.msra.mxu0 %v693
    %1167 = vmatpush.msra.mxu0 %v687
    %1168 = vmatpush.msra.mxu0 %v681
    %1169 = vmatpush.msra.mxu0 %v675
    %1170 = vmatmul.f32.gmra.mxu0 %v573
    %v1171 = vpop.f32.mrf.mxu0
    %v1172 = vadd.f32 %v1152, %v1171
    %1173 = vdwg.mxu0
    %1174 = vmatpush.msra.mxu0 %v861
    %1175 = vmatpush.msra.mxu0 %v855
    %1176 = vmatpush.msra.mxu0 %v849
    %1177 = vmatpush.msra.mxu0 %v843
    %1178 = vmatpush.msra.mxu0 %v837
    %1179 = vmatpush.msra.mxu0 %v831
    %1180 = vmatpush.msra.mxu0 %v825
    %1181 = vmatpush.msra.mxu0 %v819
    %1182 = vmatpush.msra.mxu0 %v813
    %1183 = vmatpush.msra.mxu0 %v807
    %1184 = vmatpush.msra.mxu0 %v801
    %1185 = vmatpush.msra.mxu0 %v795
    %1186 = vmatpush.msra.mxu0 %v789
    %1187 = vmatpush.msra.mxu0 %v783
    %1188 = vmatpush.msra.mxu0 %v777
    %1189 = vmatpush.msra.mxu0 %v771
    %1190 = vmatmul.f32.gmra.mxu0 %v574
    %v1191 = vpop.f32.mrf.mxu0
    %v1192 = vadd.f32 %v1172, %v1191
    %1193 = vdwg.mxu0
    %1194 = vmatpush.msra.mxu0 0.0
    %1195 = vmatpush.msra.mxu0 0.0
    %1196 = vmatpush.msra.mxu0 0.0
    %1197 = vmatpush.msra.mxu0 0.0
    %1198 = vmatpush.msra.mxu0 0.0
    %1199 = vmatpush.msra.mxu0 0.0
    %1200 = vmatpush.msra.mxu0 0.0
    %1201 = vmatpush.msra.mxu0 0.0
    %1202 = vmatpush.msra.mxu0 0.0
    %1203 = vmatpush.msra.mxu0 0.0
    %1204 = vmatpush.msra.mxu0 0.0
    %1205 = vmatpush.msra.mxu0 0.0
    %1206 = vmatpush.msra.mxu0 0.0
    %1207 = vmatpush.msra.mxu0 0.0
    %1208 = vmatpush.msra.mxu0 %v873
    %1209 = vmatpush.msra.mxu0 %v867
    %1210 = vmatmul.f32.gmra.mxu0 %v892
    %v1211 = vpop.f32.mrf.mxu0
    %v1212 = vadd.f32 %v1192, %v1211
    %1213 = vdwg.mxu0
    %1214 = vmatpush.msra.mxu0 %v670
    %1215 = vmatpush.msra.mxu0 %v664
    %1216 = vmatpush.msra.mxu0 %v658
    %1217 = vmatpush.msra.mxu0 %v652
    %1218 = vmatpush.msra.mxu0 %v646
    %1219 = vmatpush.msra.mxu0 %v640
    %1220 = vmatpush.msra.mxu0 %v634
    %1221 = vmatpush.msra.mxu0 %v628
    %1222 = vmatpush.msra.mxu0 %v622
    %1223 = vmatpush.msra.mxu0 %v616
    %1224 = vmatpush.msra.mxu0 %v610
    %1225 = vmatpush.msra.mxu0 %v604
    %1226 = vmatpush.msra.mxu0 %v598
    %1227 = vmatpush.msra.mxu0 %v592
    %1228 = vmatpush.msra.mxu0 %v586
    %1229 = vmatpush.msra.mxu0 %v580
    %1230 = vmatmul.f32.gmra.mxu0 %v572
    %v1231 = vpop.f32.mrf.mxu0
    %v1232 = vadd.f32 %v882, %v1231
    %1233 = vdwg.mxu0
    %1234 = vmatpush.msra.mxu0 %v766
    %1235 = vmatpush.msra.mxu0 %v760
    %1236 = vmatpush.msra.mxu0 %v754
    %1237 = vmatpush.msra.mxu0 %v748
    %1238 = vmatpush.msra.mxu0 %v742
    %1239 = vmatpush.msra.mxu0 %v736
    %1240 = vmatpush.msra.mxu0 %v730
    %1241 = vmatpush.msra.mxu0 %v724
    %1242 = vmatpush.msra.mxu0 %v718
    %1243 = vmatpush.msra.mxu0 %v712
    %1244 = vmatpush.msra.mxu0 %v706
    %1245 = vmatpush.msra.mxu0 %v700
    %1246 = vmatpush.msra.mxu0 %v694
    %1247 = vmatpush.msra.mxu0 %v688
    %1248 = vmatpush.msra.mxu0 %v682
    %1249 = vmatpush.msra.mxu0 %v676
    %1250 = vmatmul.f32.gmra.mxu0 %v573
    %v1251 = vpop.f32.mrf.mxu0
    %v1252 = vadd.f32 %v1232, %v1251
    %1253 = vdwg.mxu0
    %1254 = vmatpush.msra.mxu0 %v862
    %1255 = vmatpush.msra.mxu0 %v856
    %1256 = vmatpush.msra.mxu0 %v850
    %1257 = vmatpush.msra.mxu0 %v844
    %1258 = vmatpush.msra.mxu0 %v838
    %1259 = vmatpush.msra.mxu0 %v832
    %1260 = vmatpush.msra.mxu0 %v826
    %1261 = vmatpush.msra.mxu0 %v820
    %1262 = vmatpush.msra.mxu0 %v814
    %1263 = vmatpush.msra.mxu0 %v808
    %1264 = vmatpush.msra.mxu0 %v802
    %1265 = vmatpush.msra.mxu0 %v796
    %1266 = vmatpush.msra.mxu0 %v790
    %1267 = vmatpush.msra.mxu0 %v784
    %1268 = vmatpush.msra.mxu0 %v778
    %1269 = vmatpush.msra.mxu0 %v772
    %1270 = vmatmul.f32.gmra.mxu0 %v574
    %v1271 = vpop.f32.mrf.mxu0
    %v1272 = vadd.f32 %v1252, %v1271
    %1273 = vdwg.mxu0
    %1274 = vmatpush.msra.mxu0 0.0
    %1275 = vmatpush.msra.mxu0 0.0
    %1276 = vmatpush.msra.mxu0 0.0
    %1277 = vmatpush.msra.mxu0 0.0
    %1278 = vmatpush.msra.mxu0 0.0
    %1279 = vmatpush.msra.mxu0 0.0
    %1280 = vmatpush.msra.mxu0 0.0
    %1281 = vmatpush.msra.mxu0 0.0
    %1282 = vmatpush.msra.mxu0 0.0
    %1283 = vmatpush.msra.mxu0 0.0
    %1284 = vmatpush.msra.mxu0 0.0
    %1285 = vmatpush.msra.mxu0 0.0
    %1286 = vmatpush.msra.mxu0 0.0
    %1287 = vmatpush.msra.mxu0 0.0
    %1288 = vmatpush.msra.mxu0 %v874
    %1289 = vmatpush.msra.mxu0 %v868
    %1290 = vmatmul.f32.gmra.mxu0 %v892
    %v1291 = vpop.f32.mrf.mxu0
    %v1292 = vadd.f32 %v1272, %v1291
    %1293 = vdwg.mxu0
    %1294 = vmatpush.msra.mxu0 %v671
    %1295 = vmatpush.msra.mxu0 %v665
    %1296 = vmatpush.msra.mxu0 %v659
    %1297 = vmatpush.msra.mxu0 %v653
    %1298 = vmatpush.msra.mxu0 %v647
    %1299 = vmatpush.msra.mxu0 %v641
    %1300 = vmatpush.msra.mxu0 %v635
    %1301 = vmatpush.msra.mxu0 %v629
    %1302 = vmatpush.msra.mxu0 %v623
    %1303 = vmatpush.msra.mxu0 %v617
    %1304 = vmatpush.msra.mxu0 %v611
    %1305 = vmatpush.msra.mxu0 %v605
    %1306 = vmatpush.msra.mxu0 %v599
    %1307 = vmatpush.msra.mxu0 %v593
    %1308 = vmatpush.msra.mxu0 %v587
    %1309 = vmatpush.msra.mxu0 %v581
    %1310 = vmatmul.f32.gmra.mxu0 %v572
    %v1311 = vpop.f32.mrf.mxu0
    %v1312 = vadd.f32 %v883, %v1311
    %1313 = vdwg.mxu0
    %1314 = vmatpush.msra.mxu0 %v767
    %1315 = vmatpush.msra.mxu0 %v761
    %1316 = vmatpush.msra.mxu0 %v755
    %1317 = vmatpush.msra.mxu0 %v749
    %1318 = vmatpush.msra.mxu0 %v743
    %1319 = vmatpush.msra.mxu0 %v737
    %1320 = vmatpush.msra.mxu0 %v731
    %1321 = vmatpush.msra.mxu0 %v725
    %1322 = vmatpush.msra.mxu0 %v719
    %1323 = vmatpush.msra.mxu0 %v713
    %1324 = vmatpush.msra.mxu0 %v707
    %1325 = vmatpush.msra.mxu0 %v701
    %1326 = vmatpush.msra.mxu0 %v695
    %1327 = vmatpush.msra.mxu0 %v689
    %1328 = vmatpush.msra.mxu0 %v683
    %1329 = vmatpush.msra.mxu0 %v677
    %1330 = vmatmul.f32.gmra.mxu0 %v573
    %v1331 = vpop.f32.mrf.mxu0
    %v1332 = vadd.f32 %v1312, %v1331
    %1333 = vdwg.mxu0
    %1334 = vmatpush.msra.mxu0 %v863
    %1335 = vmatpush.msra.mxu0 %v857
    %1336 = vmatpush.msra.mxu0 %v851
    %1337 = vmatpush.msra.mxu0 %v845
    %1338 = vmatpush.msra.mxu0 %v839
    %1339 = vmatpush.msra.mxu0 %v833
    %1340 = vmatpush.msra.mxu0 %v827
    %1341 = vmatpush.msra.mxu0 %v821
    %1342 = vmatpush.msra.mxu0 %v815
    %1343 = vmatpush.msra.mxu0 %v809
    %1344 = vmatpush.msra.mxu0 %v803
    %1345 = vmatpush.msra.mxu0 %v797
    %1346 = vmatpush.msra.mxu0 %v791
    %1347 = vmatpush.msra.mxu0 %v785
    %1348 = vmatpush.msra.mxu0 %v779
    %1349 = vmatpush.msra.mxu0 %v773
    %1350 = vmatmul.f32.gmra.mxu0 %v574
    %v1351 = vpop.f32.mrf.mxu0
    %v1352 = vadd.f32 %v1332, %v1351
    %1353 = vdwg.mxu0
    %1354 = vmatpush.msra.mxu0 0.0
    %1355 = vmatpush.msra.mxu0 0.0
    %1356 = vmatpush.msra.mxu0 0.0
    %1357 = vmatpush.msra.mxu0 0.0
    %1358 = vmatpush.msra.mxu0 0.0
    %1359 = vmatpush.msra.mxu0 0.0
    %1360 = vmatpush.msra.mxu0 0.0
    %1361 = vmatpush.msra.mxu0 0.0
    %1362 = vmatpush.msra.mxu0 0.0
    %1363 = vmatpush.msra.mxu0 0.0
    %1364 = vmatpush.msra.mxu0 0.0
    %1365 = vmatpush.msra.mxu0 0.0
    %1366 = vmatpush.msra.mxu0 0.0
    %1367 = vmatpush.msra.mxu0 0.0
    %1368 = vmatpush.msra.mxu0 %v875
    %1369 = vmatpush.msra.mxu0 %v869
    %1370 = vmatmul.f32.gmra.mxu0 %v892
    %v1371 = vpop.f32.mrf.mxu0
    %v1372 = vadd.f32 %v1352, %v1371
    %1373 = vdwg.mxu0
    %v1374 = vmax.f32 %v972, 0.0
    %v1375 = vmax.f32 %v1052, 0.0
    %v1376 = vmax.f32 %v1132, 0.0
    %v1377 = vmax.f32 %v1212, 0.0
    %v1378 = vmax.f32 %v1292, 0.0
    %v1379 = vmax.f32 %v1372, 0.0
    %v1380 = vld [vmem:[#allocation17] sm:$0xff]
    %v1381 = vld [vmem:[#allocation17 + $0x8] sm:$0xff]
    %v1382 = vld [vmem:[#allocation17 + $0x10] sm:$0xff]
    %v1383 = vld [vmem:[#allocation17 + $0x18] sm:$0xff]
    %v1384 = vld [vmem:[#allocation17 + $0x20] sm:$0xff]
    %v1385 = vld [vmem:[#allocation17 + $0x28] sm:$0xff]
    %v1386 = vld [vmem:[#allocation17 + $0x30] sm:$0xff]
    %v1387 = vld [vmem:[#allocation17 + $0x38] sm:$0xff]
    %v1388 = vld [vmem:[#allocation17 + $0x40] sm:$0xff]
    %v1389 = vld [vmem:[#allocation17 + $0x48] sm:$0xff]
    %v1390 = vld [vmem:[#allocation17 + $0x50] sm:$0xff]
    %v1391 = vld [vmem:[#allocation17 + $0x58] sm:$0xff]
    %v1392 = vld [vmem:[#allocation17 + $0x60] sm:$0xff]
    %v1393 = vld [vmem:[#allocation17 + $0x68] sm:$0xff]
    %v1394 = vld [vmem:[#allocation17 + $0x70] sm:$0xff]
    %v1395 = vld [vmem:[#allocation17 + $0x78] sm:$0xff]
    %v1396 = vld [vmem:[#allocation17 + $0x80] sm:$0xff]
    %v1397 = vld [vmem:[#allocation17 + $0x88] sm:$0xff]
    %v1398 = vld [vmem:[#allocation17 + $0x90] sm:$0xff]
    %v1399 = vld [vmem:[#allocation17 + $0x98] sm:$0xff]
    %v1400 = vld [vmem:[#allocation17 + $0xa0] sm:$0xff]
    %v1401 = vld [vmem:[#allocation17 + $0xa8] sm:$0xff]
    %v1402 = vld [vmem:[#allocation17 + $0xb0] sm:$0xff]
    %v1403 = vld [vmem:[#allocation17 + $0xb8] sm:$0xff]
    %v1404 = vld [vmem:[#allocation17 + $0xc0] sm:$0xff]
    %v1405 = vld [vmem:[#allocation17 + $0xc8] sm:$0xff]
    %v1406 = vld [vmem:[#allocation17 + $0xd0] sm:$0xff]
    %v1407 = vld [vmem:[#allocation17 + $0xd8] sm:$0xff]
    %v1408 = vld [vmem:[#allocation17 + $0xe0] sm:$0xff]
    %v1409 = vld [vmem:[#allocation17 + $0xe8] sm:$0xff]
    %v1410 = vld [vmem:[#allocation17 + $0xf0] sm:$0xff]
    %v1411 = vld [vmem:[#allocation17 + $0xf8] sm:$0xff]
    %v1412 = vld [vmem:[#allocation17 + $0x100] sm:$0xff]
    %v1413 = vld [vmem:[#allocation17 + $0x108] sm:$0xff]
    %v1414 = vld [vmem:[#allocation17 + $0x110] sm:$0xff]
    %v1415 = vld [vmem:[#allocation17 + $0x118] sm:$0xff]
    %v1416 = vld [vmem:[#allocation17 + $0x120] sm:$0xff]
    %v1417 = vld [vmem:[#allocation17 + $0x128] sm:$0xff]
    %v1418 = vld [vmem:[#allocation17 + $0x130] sm:$0xff]
    %v1419 = vld [vmem:[#allocation17 + $0x138] sm:$0xff]
    %v1420 = vld [vmem:[#allocation17 + $0x140] sm:$0xff]
    %v1421 = vld [vmem:[#allocation17 + $0x148] sm:$0xff]
    %v1422 = vld [vmem:[#allocation17 + $0x150] sm:$0xff]
    %v1423 = vld [vmem:[#allocation17 + $0x158] sm:$0xff]
    %v1424 = vld [vmem:[#allocation17 + $0x160] sm:$0xff]
    %v1425 = vld [vmem:[#allocation17 + $0x168] sm:$0xff]
    %v1426 = vld [vmem:[#allocation17 + $0x170] sm:$0xff]
    %v1427 = vld [vmem:[#allocation17 + $0x178] sm:$0xff]
    %v1428 = vld [vmem:[#allocation17 + $0x180] sm:$0xff]
    %v1429 = vld [vmem:[#allocation17 + $0x188] sm:$0xff]
    %v1430 = vld [vmem:[#allocation17 + $0x190] sm:$0xff]
    %v1431 = vld [vmem:[#allocation17 + $0x198] sm:$0xff]
    %v1432 = vld [vmem:[#allocation17 + $0x1a0] sm:$0xff]
    %v1433 = vld [vmem:[#allocation17 + $0x1a8] sm:$0xff]
    %v1434 = vld [vmem:[#allocation17 + $0x1b0] sm:$0xff]
    %v1435 = vld [vmem:[#allocation17 + $0x1b8] sm:$0xff]
    %v1436 = vld [vmem:[#allocation17 + $0x1c0] sm:$0xff]
    %v1437 = vld [vmem:[#allocation17 + $0x1c8] sm:$0xff]
    %v1438 = vld [vmem:[#allocation17 + $0x1d0] sm:$0xff]
    %v1439 = vld [vmem:[#allocation17 + $0x1d8] sm:$0xff]
    %v1440 = vld [vmem:[#allocation17 + $0x1e0] sm:$0xff]
    %v1441 = vld [vmem:[#allocation17 + $0x1e8] sm:$0xff]
    %v1442 = vld [vmem:[#allocation17 + $0x1f0] sm:$0xff]
    %v1443 = vld [vmem:[#allocation17 + $0x1f8] sm:$0xff]
    %v1444 = vld [vmem:[#allocation17 + $0x200] sm:$0xff]
    %v1445 = vld [vmem:[#allocation17 + $0x208] sm:$0xff]
    %v1446 = vld [vmem:[#allocation17 + $0x210] sm:$0xff]
    %v1447 = vld [vmem:[#allocation17 + $0x218] sm:$0xff]
    %v1448 = vld [vmem:[#allocation17 + $0x220] sm:$0xff]
    %v1449 = vld [vmem:[#allocation17 + $0x228] sm:$0xff]
    %v1450 = vld [vmem:[#allocation17 + $0x230] sm:$0xff]
    %v1451 = vld [vmem:[#allocation17 + $0x238] sm:$0xff]
    %v1452 = vld [vmem:[#allocation17 + $0x240] sm:$0xff]
    %v1453 = vld [vmem:[#allocation17 + $0x248] sm:$0xff]
    %v1454 = vld [vmem:[#allocation17 + $0x250] sm:$0xff]
    %v1455 = vld [vmem:[#allocation17 + $0x258] sm:$0xff]
    %v1456 = vld [vmem:[#allocation17 + $0x260] sm:$0xff]
    %v1457 = vld [vmem:[#allocation17 + $0x268] sm:$0xff]
    %v1458 = vld [vmem:[#allocation17 + $0x270] sm:$0xff]
    %v1459 = vld [vmem:[#allocation17 + $0x278] sm:$0xff]
    %v1460 = vld [vmem:[#allocation17 + $0x280] sm:$0xff]
    %v1461 = vld [vmem:[#allocation17 + $0x288] sm:$0xff]
    %v1462 = vld [vmem:[#allocation17 + $0x290] sm:$0xff]
    %v1463 = vld [vmem:[#allocation17 + $0x298] sm:$0xff]
    %v1464 = vld [vmem:[#allocation17 + $0x2a0] sm:$0xff]
    %v1465 = vld [vmem:[#allocation17 + $0x2a8] sm:$0xff]
    %v1466 = vld [vmem:[#allocation17 + $0x2b0] sm:$0xff]
    %v1467 = vld [vmem:[#allocation17 + $0x2b8] sm:$0xff]
    %v1468 = vld [vmem:[#allocation17 + $0x2c0] sm:$0xff]
    %v1469 = vld [vmem:[#allocation17 + $0x2c8] sm:$0xff]
    %v1470 = vld [vmem:[#allocation17 + $0x2d0] sm:$0xff]
    %v1471 = vld [vmem:[#allocation17 + $0x2d8] sm:$0xff]
    %v1472 = vld [vmem:[#allocation17 + $0x2e0] sm:$0xff]
    %v1473 = vld [vmem:[#allocation17 + $0x2e8] sm:$0xff]
    %v1474 = vld [vmem:[#allocation17 + $0x2f0] sm:$0xff]
    %v1475 = vld [vmem:[#allocation17 + $0x2f8] sm:$0xff]
    %v1476 = vld [vmem:[#allocation17 + $0x300] sm:$0xff]
    %v1477 = vld [vmem:[#allocation17 + $0x308] sm:$0xff]
    %v1478 = vld [vmem:[#allocation17 + $0x310] sm:$0xff]
    %v1479 = vld [vmem:[#allocation17 + $0x318] sm:$0xff]
    %v1480 = vld [vmem:[#allocation17 + $0x320] sm:$0xff]
    %v1481 = vld [vmem:[#allocation17 + $0x328] sm:$0xff]
    %v1482 = vld [vmem:[#allocation17 + $0x330] sm:$0xff]
    %v1483 = vld [vmem:[#allocation17 + $0x338] sm:$0xff]
    %v1484 = vld [vmem:[#allocation17 + $0x340] sm:$0xff]
    %v1485 = vld [vmem:[#allocation17 + $0x348] sm:$0xff]
    %v1486 = vld [vmem:[#allocation17 + $0x350] sm:$0xff]
    %v1487 = vld [vmem:[#allocation17 + $0x358] sm:$0xff]
    %v1488 = vld [vmem:[#allocation17 + $0x360] sm:$0xff]
    %v1489 = vld [vmem:[#allocation17 + $0x368] sm:$0xff]
    %v1490 = vld [vmem:[#allocation17 + $0x370] sm:$0xff]
    %v1491 = vld [vmem:[#allocation17 + $0x378] sm:$0xff]
    %v1492 = vld [vmem:[#allocation17 + $0x380] sm:$0xff]
    %v1493 = vld [vmem:[#allocation17 + $0x388] sm:$0xff]
    %v1494 = vld [vmem:[#allocation17 + $0x390] sm:$0xff]
    %v1495 = vld [vmem:[#allocation17 + $0x398] sm:$0xff]
    %v1496 = vld [vmem:[#allocation17 + $0x3a0] sm:$0xff]
    %v1497 = vld [vmem:[#allocation17 + $0x3a8] sm:$0xff]
    %v1498 = vld [vmem:[#allocation17 + $0x3b0] sm:$0xff]
    %v1499 = vld [vmem:[#allocation17 + $0x3b8] sm:$0xff]
    %v1500 = vld [vmem:[#allocation17 + $0x3c0] sm:$0xff]
    %v1501 = vld [vmem:[#allocation17 + $0x3c8] sm:$0xff]
    %v1502 = vld [vmem:[#allocation17 + $0x3d0] sm:$0xff]
    %v1503 = vld [vmem:[#allocation17 + $0x3d8] sm:$0xff]
    %v1504 = vld [vmem:[#allocation17 + $0x3e0] sm:$0xff]
    %v1505 = vld [vmem:[#allocation17 + $0x3e8] sm:$0xff]
    %v1506 = vld [vmem:[#allocation17 + $0x3f0] sm:$0xff]
    %v1507 = vld [vmem:[#allocation17 + $0x3f8] sm:$0xff]
    %v1508 = vld [vmem:[#allocation17 + $0x400] sm:$0xff]
    %v1509 = vld [vmem:[#allocation17 + $0x408] sm:$0xff]
    %v1510 = vld [vmem:[#allocation17 + $0x410] sm:$0xff]
    %v1511 = vld [vmem:[#allocation17 + $0x418] sm:$0xff]
    %v1512 = vld [vmem:[#allocation17 + $0x420] sm:$0xff]
    %v1513 = vld [vmem:[#allocation17 + $0x428] sm:$0xff]
    %v1514 = vld [vmem:[#allocation17 + $0x430] sm:$0xff]
    %v1515 = vld [vmem:[#allocation17 + $0x438] sm:$0xff]
    %v1516 = vld [vmem:[#allocation17 + $0x440] sm:$0xff]
    %v1517 = vld [vmem:[#allocation17 + $0x448] sm:$0xff]
    %v1518 = vld [vmem:[#allocation17 + $0x450] sm:$0xff]
    %v1519 = vld [vmem:[#allocation17 + $0x458] sm:$0xff]
    %v1520 = vld [vmem:[#allocation17 + $0x460] sm:$0xff]
    %v1521 = vld [vmem:[#allocation17 + $0x468] sm:$0xff]
    %v1522 = vld [vmem:[#allocation17 + $0x470] sm:$0xff]
    %v1523 = vld [vmem:[#allocation17 + $0x478] sm:$0xff]
    %v1524 = vld [vmem:[#allocation17 + $0x480] sm:$0xff]
    %v1525 = vld [vmem:[#allocation17 + $0x488] sm:$0xff]
    %v1526 = vld [vmem:[#allocation17 + $0x490] sm:$0xff]
    %v1527 = vld [vmem:[#allocation17 + $0x498] sm:$0xff]
    %v1528 = vld [vmem:[#allocation17 + $0x4a0] sm:$0xff]
    %v1529 = vld [vmem:[#allocation17 + $0x4a8] sm:$0xff]
    %v1530 = vld [vmem:[#allocation17 + $0x4b0] sm:$0xff]
    %v1531 = vld [vmem:[#allocation17 + $0x4b8] sm:$0xff]
    %v1532 = vld [vmem:[#allocation17 + $0x4c0] sm:$0xff]
    %v1533 = vld [vmem:[#allocation17 + $0x4c8] sm:$0xff]
    %v1534 = vld [vmem:[#allocation17 + $0x4d0] sm:$0xff]
    %v1535 = vld [vmem:[#allocation17 + $0x4d8] sm:$0xff]
    %v1536 = vld [vmem:[#allocation17 + $0x4e0] sm:$0xff]
    %v1537 = vld [vmem:[#allocation17 + $0x4e8] sm:$0xff]
    %v1538 = vld [vmem:[#allocation17 + $0x4f0] sm:$0xff]
    %v1539 = vld [vmem:[#allocation17 + $0x4f8] sm:$0xff]
    %v1540 = vld [vmem:[#allocation17 + $0x500] sm:$0xff]
    %v1541 = vld [vmem:[#allocation17 + $0x508] sm:$0xff]
    %v1542 = vld [vmem:[#allocation17 + $0x510] sm:$0xff]
    %v1543 = vld [vmem:[#allocation17 + $0x518] sm:$0xff]
    %v1544 = vld [vmem:[#allocation17 + $0x520] sm:$0xff]
    %v1545 = vld [vmem:[#allocation17 + $0x528] sm:$0xff]
    %v1546 = vld [vmem:[#allocation17 + $0x530] sm:$0xff]
    %v1547 = vld [vmem:[#allocation17 + $0x538] sm:$0xff]
    %v1548 = vld [vmem:[#allocation17 + $0x540] sm:$0xff]
    %v1549 = vld [vmem:[#allocation17 + $0x548] sm:$0xff]
    %v1550 = vld [vmem:[#allocation17 + $0x550] sm:$0xff]
    %v1551 = vld [vmem:[#allocation17 + $0x558] sm:$0xff]
    %v1552 = vld [vmem:[#allocation17 + $0x560] sm:$0xff]
    %v1553 = vld [vmem:[#allocation17 + $0x568] sm:$0xff]
    %v1554 = vld [vmem:[#allocation17 + $0x570] sm:$0xff]
    %v1555 = vld [vmem:[#allocation17 + $0x578] sm:$0xff]
    %v1556 = vld [vmem:[#allocation17 + $0x580] sm:$0xff]
    %v1557 = vld [vmem:[#allocation17 + $0x588] sm:$0xff]
    %v1558 = vld [vmem:[#allocation17 + $0x590] sm:$0xff]
    %v1559 = vld [vmem:[#allocation17 + $0x598] sm:$0xff]
    %v1560 = vld [vmem:[#allocation17 + $0x5a0] sm:$0xff]
    %v1561 = vld [vmem:[#allocation17 + $0x5a8] sm:$0xff]
    %v1562 = vld [vmem:[#allocation17 + $0x5b0] sm:$0xff]
    %v1563 = vld [vmem:[#allocation17 + $0x5b8] sm:$0xff]
    %v1564 = vld [vmem:[#allocation17 + $0x5c0] sm:$0xff]
    %v1565 = vld [vmem:[#allocation17 + $0x5c8] sm:$0xff]
    %v1566 = vld [vmem:[#allocation17 + $0x5d0] sm:$0xff]
    %v1567 = vld [vmem:[#allocation17 + $0x5d8] sm:$0xff]
    %v1568 = vld [vmem:[#allocation17 + $0x5e0] sm:$0xff]
    %v1569 = vld [vmem:[#allocation17 + $0x5e8] sm:$0xff]
    %v1570 = vld [vmem:[#allocation17 + $0x5f0] sm:$0xff]
    %v1571 = vld [vmem:[#allocation17 + $0x5f8] sm:$0xff]
    %v1572 = vld [vmem:[#allocation17 + $0x600] sm:$0xff]
    %v1573 = vld [vmem:[#allocation17 + $0x608] sm:$0xff]
    %v1574 = vld [vmem:[#allocation17 + $0x610] sm:$0xff]
    %v1575 = vld [vmem:[#allocation17 + $0x618] sm:$0xff]
    %v1576 = vld [vmem:[#allocation17 + $0x620] sm:$0xff]
    %v1577 = vld [vmem:[#allocation17 + $0x628] sm:$0xff]
    %v1578 = vld [vmem:[#allocation17 + $0x630] sm:$0xff]
    %v1579 = vld [vmem:[#allocation17 + $0x638] sm:$0xff]
    %v1580 = vld [vmem:[#allocation17 + $0x640] sm:$0xff]
    %v1581 = vld [vmem:[#allocation17 + $0x648] sm:$0xff]
    %v1582 = vld [vmem:[#allocation17 + $0x650] sm:$0xff]
    %v1583 = vld [vmem:[#allocation17 + $0x658] sm:$0xff]
    %v1584 = vld [vmem:[#allocation17 + $0x660] sm:$0xff]
    %v1585 = vld [vmem:[#allocation17 + $0x668] sm:$0xff]
    %v1586 = vld [vmem:[#allocation17 + $0x670] sm:$0xff]
    %v1587 = vld [vmem:[#allocation17 + $0x678] sm:$0xff]
    %v1588 = vld [vmem:[#allocation17 + $0x680] sm:$0xff]
    %v1589 = vld [vmem:[#allocation17 + $0x688] sm:$0xff]
    %v1590 = vld [vmem:[#allocation17 + $0x690] sm:$0xff]
    %v1591 = vld [vmem:[#allocation17 + $0x698] sm:$0xff]
    %v1592 = vld [vmem:[#allocation17 + $0x6a0] sm:$0xff]
    %v1593 = vld [vmem:[#allocation17 + $0x6a8] sm:$0xff]
    %v1594 = vld [vmem:[#allocation17 + $0x6b0] sm:$0xff]
    %v1595 = vld [vmem:[#allocation17 + $0x6b8] sm:$0xff]
    %v1596 = vld [vmem:[#allocation17 + $0x6c0] sm:$0xff]
    %v1597 = vld [vmem:[#allocation17 + $0x6c8] sm:$0xff]
    %v1598 = vld [vmem:[#allocation17 + $0x6d0] sm:$0xff]
    %v1599 = vld [vmem:[#allocation17 + $0x6d8] sm:$0xff]
    %v1600 = vld [vmem:[#allocation17 + $0x6e0] sm:$0xff]
    %v1601 = vld [vmem:[#allocation17 + $0x6e8] sm:$0xff]
    %v1602 = vld [vmem:[#allocation17 + $0x6f0] sm:$0xff]
    %v1603 = vld [vmem:[#allocation17 + $0x6f8] sm:$0xff]
    %v1604 = vld [vmem:[#allocation17 + $0x700] sm:$0xff]
    %v1605 = vld [vmem:[#allocation17 + $0x708] sm:$0xff]
    %v1606 = vld [vmem:[#allocation17 + $0x710] sm:$0xff]
    %v1607 = vld [vmem:[#allocation17 + $0x718] sm:$0xff]
    %v1608 = vld [vmem:[#allocation17 + $0x720] sm:$0xff]
    %v1609 = vld [vmem:[#allocation17 + $0x728] sm:$0xff]
    %v1610 = vld [vmem:[#allocation17 + $0x730] sm:$0xff]
    %v1611 = vld [vmem:[#allocation17 + $0x738] sm:$0xff]
    %v1612 = vld [vmem:[#allocation17 + $0x740] sm:$0xff]
    %v1613 = vld [vmem:[#allocation17 + $0x748] sm:$0xff]
    %v1614 = vld [vmem:[#allocation17 + $0x750] sm:$0xff]
    %v1615 = vld [vmem:[#allocation17 + $0x758] sm:$0xff]
    %v1616 = vld [vmem:[#allocation17 + $0x760] sm:$0xff]
    %v1617 = vld [vmem:[#allocation17 + $0x768] sm:$0xff]
    %v1618 = vld [vmem:[#allocation17 + $0x770] sm:$0xff]
    %v1619 = vld [vmem:[#allocation17 + $0x778] sm:$0xff]
    %v1620 = vld [vmem:[#allocation17 + $0x780] sm:$0xff]
    %v1621 = vld [vmem:[#allocation17 + $0x788] sm:$0xff]
    %v1622 = vld [vmem:[#allocation17 + $0x790] sm:$0xff]
    %v1623 = vld [vmem:[#allocation17 + $0x798] sm:$0xff]
    %v1624 = vld [vmem:[#allocation17 + $0x7a0] sm:$0xff]
    %v1625 = vld [vmem:[#allocation17 + $0x7a8] sm:$0xff]
    %v1626 = vld [vmem:[#allocation17 + $0x7b0] sm:$0xff]
    %v1627 = vld [vmem:[#allocation17 + $0x7b8] sm:$0xff]
    %v1628 = vld [vmem:[#allocation17 + $0x7c0] sm:$0xff]
    %v1629 = vld [vmem:[#allocation17 + $0x7c8] sm:$0xff]
    %v1630 = vld [vmem:[#allocation17 + $0x7d0] sm:$0xff]
    %v1631 = vld [vmem:[#allocation17 + $0x7d8] sm:$0xff]
    %v1632 = vld [vmem:[#allocation17 + $0x7e0] sm:$0xff]
    %v1633 = vld [vmem:[#allocation17 + $0x7e8] sm:$0xff]
    %v1634 = vld [vmem:[#allocation17 + $0x7f0] sm:$0xff]
    %v1635 = vld [vmem:[#allocation17 + $0x7f8] sm:$0xff]
    %v1636 = vld [vmem:[#allocation17 + $0x800] sm:$0xff]
    %v1637 = vld [vmem:[#allocation17 + $0x808] sm:$0xff]
    %v1638 = vld [vmem:[#allocation17 + $0x810] sm:$0xff]
    %v1639 = vld [vmem:[#allocation17 + $0x818] sm:$0xff]
    %v1640 = vld [vmem:[#allocation17 + $0x820] sm:$0xff]
    %v1641 = vld [vmem:[#allocation17 + $0x828] sm:$0xff]
    %v1642 = vld [vmem:[#allocation17 + $0x830] sm:$0xff]
    %v1643 = vld [vmem:[#allocation17 + $0x838] sm:$0xff]
    %v1644 = vld [vmem:[#allocation17 + $0x840] sm:$0xff]
    %v1645 = vld [vmem:[#allocation17 + $0x848] sm:$0xff]
    %v1646 = vld [vmem:[#allocation17 + $0x850] sm:$0xff]
    %v1647 = vld [vmem:[#allocation17 + $0x858] sm:$0xff]
    %v1648 = vld [vmem:[#allocation17 + $0x860] sm:$0xff]
    %v1649 = vld [vmem:[#allocation17 + $0x868] sm:$0xff]
    %v1650 = vld [vmem:[#allocation17 + $0x870] sm:$0xff]
    %v1651 = vld [vmem:[#allocation17 + $0x878] sm:$0xff]
    %v1652 = vld [vmem:[#allocation17 + $0x880] sm:$0xff]
    %v1653 = vld [vmem:[#allocation17 + $0x888] sm:$0xff]
    %v1654 = vld [vmem:[#allocation17 + $0x890] sm:$0xff]
    %v1655 = vld [vmem:[#allocation17 + $0x898] sm:$0xff]
    %v1656 = vld [vmem:[#allocation17 + $0x8a0] sm:$0xff]
    %v1657 = vld [vmem:[#allocation17 + $0x8a8] sm:$0xff]
    %v1658 = vld [vmem:[#allocation17 + $0x8b0] sm:$0xff]
    %v1659 = vld [vmem:[#allocation17 + $0x8b8] sm:$0xff]
    %v1660 = vld [vmem:[#allocation17 + $0x8c0] sm:$0xff]
    %v1661 = vld [vmem:[#allocation17 + $0x8c8] sm:$0xff]
    %v1662 = vld [vmem:[#allocation17 + $0x8d0] sm:$0xff]
    %v1663 = vld [vmem:[#allocation17 + $0x8d8] sm:$0xff]
    %v1664 = vld [vmem:[#allocation17 + $0x8e0] sm:$0xff]
    %v1665 = vld [vmem:[#allocation17 + $0x8e8] sm:$0xff]
    %v1666 = vld [vmem:[#allocation17 + $0x8f0] sm:$0xff]
    %v1667 = vld [vmem:[#allocation17 + $0x8f8] sm:$0xff]
    %v1668 = vld [vmem:[#allocation17 + $0x900] sm:$0xff]
    %v1669 = vld [vmem:[#allocation17 + $0x908] sm:$0xff]
    %v1670 = vld [vmem:[#allocation17 + $0x910] sm:$0xff]
    %v1671 = vld [vmem:[#allocation17 + $0x918] sm:$0xff]
    %v1672 = vld [vmem:[#allocation17 + $0x920] sm:$0xff]
    %v1673 = vld [vmem:[#allocation17 + $0x928] sm:$0xff]
    %v1674 = vld [vmem:[#allocation17 + $0x930] sm:$0xff]
    %v1675 = vld [vmem:[#allocation17 + $0x938] sm:$0xff]
    %v1676 = vld [vmem:[#allocation17 + $0x940] sm:$0xff]
    %v1677 = vld [vmem:[#allocation17 + $0x948] sm:$0xff]
    %v1678 = vld [vmem:[#allocation17 + $0x950] sm:$0xff]
    %v1679 = vld [vmem:[#allocation17 + $0x958] sm:$0xff]
    %v1680 = vld [vmem:[#allocation17 + $0x960] sm:$0xff]
    %v1681 = vld [vmem:[#allocation17 + $0x968] sm:$0xff]
    %v1682 = vld [vmem:[#allocation17 + $0x970] sm:$0xff]
    %v1683 = vld [vmem:[#allocation17 + $0x978] sm:$0xff]
    %v1684 = vld [vmem:[#allocation17 + $0x980] sm:$0xff]
    %v1685 = vld [vmem:[#allocation17 + $0x988] sm:$0xff]
    %v1686 = vld [vmem:[#allocation17 + $0x990] sm:$0xff]
    %v1687 = vld [vmem:[#allocation17 + $0x998] sm:$0xff]
    %v1688 = vld [vmem:[#allocation17 + $0x9a0] sm:$0xff]
    %v1689 = vld [vmem:[#allocation17 + $0x9a8] sm:$0xff]
    %v1690 = vld [vmem:[#allocation17 + $0x9b0] sm:$0xff]
    %v1691 = vld [vmem:[#allocation17 + $0x9b8] sm:$0xff]
    %v1692 = vld [vmem:[#allocation17 + $0x9c0] sm:$0xff]
    %v1693 = vld [vmem:[#allocation17 + $0x9c8] sm:$0xff]
    %v1694 = vld [vmem:[#allocation17 + $0x9d0] sm:$0xff]
    %v1695 = vld [vmem:[#allocation17 + $0x9d8] sm:$0xff]
    %v1696 = vld [vmem:[#allocation17 + $0x9e0] sm:$0xff]
    %v1697 = vld [vmem:[#allocation17 + $0x9e8] sm:$0xff]
    %v1698 = vld [vmem:[#allocation17 + $0x9f0] sm:$0xff]
    %v1699 = vld [vmem:[#allocation17 + $0x9f8] sm:$0xff]
    %v1700 = vld [vmem:[#allocation17 + $0xa00] sm:$0xff]
    %v1701 = vld [vmem:[#allocation17 + $0xa08] sm:$0xff]
    %v1702 = vld [vmem:[#allocation17 + $0xa10] sm:$0xff]
    %v1703 = vld [vmem:[#allocation17 + $0xa18] sm:$0xff]
    %v1704 = vld [vmem:[#allocation17 + $0xa20] sm:$0xff]
    %v1705 = vld [vmem:[#allocation17 + $0xa28] sm:$0xff]
    %v1706 = vld [vmem:[#allocation17 + $0xa30] sm:$0xff]
    %v1707 = vld [vmem:[#allocation17 + $0xa38] sm:$0xff]
    %v1708 = vld [vmem:[#allocation17 + $0xa40] sm:$0xff]
    %v1709 = vld [vmem:[#allocation17 + $0xa48] sm:$0xff]
    %v1710 = vld [vmem:[#allocation17 + $0xa50] sm:$0xff]
    %v1711 = vld [vmem:[#allocation17 + $0xa58] sm:$0xff]
    %v1712 = vld [vmem:[#allocation17 + $0xa60] sm:$0xff]
    %v1713 = vld [vmem:[#allocation17 + $0xa68] sm:$0xff]
    %v1714 = vld [vmem:[#allocation17 + $0xa70] sm:$0xff]
    %v1715 = vld [vmem:[#allocation17 + $0xa78] sm:$0xff]
    %v1716 = vld [vmem:[#allocation17 + $0xa80] sm:$0xff]
    %v1717 = vld [vmem:[#allocation17 + $0xa88] sm:$0xff]
    %v1718 = vld [vmem:[#allocation17 + $0xa90] sm:$0xff]
    %v1719 = vld [vmem:[#allocation17 + $0xa98] sm:$0xff]
    %v1720 = vld [vmem:[#allocation17 + $0xaa0] sm:$0xff]
    %v1721 = vld [vmem:[#allocation17 + $0xaa8] sm:$0xff]
    %v1722 = vld [vmem:[#allocation17 + $0xab0] sm:$0xff]
    %v1723 = vld [vmem:[#allocation17 + $0xab8] sm:$0xff]
    %v1724 = vld [vmem:[#allocation17 + $0xac0] sm:$0xff]
    %v1725 = vld [vmem:[#allocation17 + $0xac8] sm:$0xff]
    %v1726 = vld [vmem:[#allocation17 + $0xad0] sm:$0xff]
    %v1727 = vld [vmem:[#allocation17 + $0xad8] sm:$0xff]
    %v1728 = vld [vmem:[#allocation17 + $0xae0] sm:$0xff]
    %v1729 = vld [vmem:[#allocation17 + $0xae8] sm:$0xff]
    %v1730 = vld [vmem:[#allocation17 + $0xaf0] sm:$0xff]
    %v1731 = vld [vmem:[#allocation17 + $0xaf8] sm:$0xff]
    %v1732 = vld [vmem:[#allocation17 + $0xb00] sm:$0xff]
    %v1733 = vld [vmem:[#allocation17 + $0xb08] sm:$0xff]
    %v1734 = vld [vmem:[#allocation17 + $0xb10] sm:$0xff]
    %v1735 = vld [vmem:[#allocation17 + $0xb18] sm:$0xff]
    %v1736 = vld [vmem:[#allocation17 + $0xb20] sm:$0xff]
    %v1737 = vld [vmem:[#allocation17 + $0xb28] sm:$0xff]
    %v1738 = vld [vmem:[#allocation17 + $0xb30] sm:$0xff]
    %v1739 = vld [vmem:[#allocation17 + $0xb38] sm:$0xff]
    %v1740 = vld [vmem:[#allocation17 + $0xb40] sm:$0xff]
    %v1741 = vld [vmem:[#allocation17 + $0xb48] sm:$0xff]
    %v1742 = vld [vmem:[#allocation17 + $0xb50] sm:$0xff]
    %v1743 = vld [vmem:[#allocation17 + $0xb58] sm:$0xff]
    %v1744 = vld [vmem:[#allocation17 + $0xb60] sm:$0xff]
    %v1745 = vld [vmem:[#allocation17 + $0xb68] sm:$0xff]
    %v1746 = vld [vmem:[#allocation17 + $0xb70] sm:$0xff]
    %v1747 = vld [vmem:[#allocation17 + $0xb78] sm:$0xff]
    %v1748 = vld [vmem:[#allocation17 + $0xb80] sm:$0xff]
    %v1749 = vld [vmem:[#allocation17 + $0xb88] sm:$0xff]
    %v1750 = vld [vmem:[#allocation17 + $0xb90] sm:$0xff]
    %v1751 = vld [vmem:[#allocation17 + $0xb98] sm:$0xff]
    %v1752 = vld [vmem:[#allocation17 + $0xba0] sm:$0xff]
    %v1753 = vld [vmem:[#allocation17 + $0xba8] sm:$0xff]
    %v1754 = vld [vmem:[#allocation17 + $0xbb0] sm:$0xff]
    %v1755 = vld [vmem:[#allocation17 + $0xbb8] sm:$0xff]
    %v1756 = vld [vmem:[#allocation17 + $0xbc0] sm:$0xff]
    %v1757 = vld [vmem:[#allocation17 + $0xbc8] sm:$0xff]
    %v1758 = vld [vmem:[#allocation17 + $0xbd0] sm:$0xff]
    %v1759 = vld [vmem:[#allocation17 + $0xbd8] sm:$0xff]
    %v1760 = vld [vmem:[#allocation17 + $0xbe0] sm:$0xff]
    %v1761 = vld [vmem:[#allocation17 + $0xbe8] sm:$0xff]
    %v1762 = vld [vmem:[#allocation17 + $0xbf0] sm:$0xff]
    %v1763 = vld [vmem:[#allocation17 + $0xbf8] sm:$0xff]
    %v1764 = vld [vmem:[#allocation17 + $0xc00] sm:$0xff]
    %v1765 = vld [vmem:[#allocation17 + $0xc08] sm:$0xff]
    %v1766 = vld [vmem:[#allocation17 + $0xc10] sm:$0xff]
    %v1767 = vld [vmem:[#allocation17 + $0xc18] sm:$0xff]
    %v1768 = vld [vmem:[#allocation17 + $0xc20] sm:$0xff]
    %v1769 = vld [vmem:[#allocation17 + $0xc28] sm:$0xff]
    %v1770 = vld [vmem:[#allocation17 + $0xc30] sm:$0xff]
    %v1771 = vld [vmem:[#allocation17 + $0xc38] sm:$0xff]
    %v1772 = vld [vmem:[#allocation17 + $0xc40] sm:$0xff]
    %v1773 = vld [vmem:[#allocation17 + $0xc48] sm:$0xff]
    %v1774 = vld [vmem:[#allocation17 + $0xc50] sm:$0xff]
    %v1775 = vld [vmem:[#allocation17 + $0xc58] sm:$0xff]
    %v1776 = vld [vmem:[#allocation17 + $0xc60] sm:$0xff]
    %v1777 = vld [vmem:[#allocation17 + $0xc68] sm:$0xff]
    %v1778 = vld [vmem:[#allocation17 + $0xc70] sm:$0xff]
    %v1779 = vld [vmem:[#allocation17 + $0xc78] sm:$0xff]
    %v1780 = vld [vmem:[#allocation17 + $0xc80] sm:$0xff]
    %v1781 = vld [vmem:[#allocation17 + $0xc88] sm:$0xff]
    %v1782 = vld [vmem:[#allocation17 + $0xc90] sm:$0xff]
    %v1783 = vld [vmem:[#allocation17 + $0xc98] sm:$0xff]
    %v1784 = vld [vmem:[#allocation17 + $0xca0] sm:$0xff]
    %v1785 = vld [vmem:[#allocation17 + $0xca8] sm:$0xff]
    %v1786 = vld [vmem:[#allocation17 + $0xcb0] sm:$0xff]
    %v1787 = vld [vmem:[#allocation17 + $0xcb8] sm:$0xff]
    %v1788 = vld [vmem:[#allocation17 + $0xcc0] sm:$0xff]
    %v1789 = vld [vmem:[#allocation17 + $0xcc8] sm:$0xff]
    %v1790 = vld [vmem:[#allocation17 + $0xcd0] sm:$0xff]
    %v1791 = vld [vmem:[#allocation17 + $0xcd8] sm:$0xff]
    %v1792 = vld [vmem:[#allocation17 + $0xce0] sm:$0xff]
    %v1793 = vld [vmem:[#allocation17 + $0xce8] sm:$0xff]
    %v1794 = vld [vmem:[#allocation17 + $0xcf0] sm:$0xff]
    %v1795 = vld [vmem:[#allocation17 + $0xcf8] sm:$0xff]
    %v1796 = vld [vmem:[#allocation17 + $0xd00] sm:$0xff]
    %v1797 = vld [vmem:[#allocation17 + $0xd08] sm:$0xff]
    %v1798 = vld [vmem:[#allocation17 + $0xd10] sm:$0xff]
    %v1799 = vld [vmem:[#allocation17 + $0xd18] sm:$0xff]
    %v1800 = vld [vmem:[#allocation17 + $0xd20] sm:$0xff]
    %v1801 = vld [vmem:[#allocation17 + $0xd28] sm:$0xff]
    %v1802 = vld [vmem:[#allocation17 + $0xd30] sm:$0xff]
    %v1803 = vld [vmem:[#allocation17 + $0xd38] sm:$0xff]
    %v1804 = vld [vmem:[#allocation17 + $0xd40] sm:$0xff]
    %v1805 = vld [vmem:[#allocation17 + $0xd48] sm:$0xff]
    %v1806 = vld [vmem:[#allocation17 + $0xd50] sm:$0xff]
    %v1807 = vld [vmem:[#allocation17 + $0xd58] sm:$0xff]
    %v1808 = vld [vmem:[#allocation17 + $0xd60] sm:$0xff]
    %v1809 = vld [vmem:[#allocation17 + $0xd68] sm:$0xff]
    %v1810 = vld [vmem:[#allocation17 + $0xd70] sm:$0xff]
    %v1811 = vld [vmem:[#allocation17 + $0xd78] sm:$0xff]
    %v1812 = vld [vmem:[#allocation17 + $0xd80] sm:$0xff]
    %v1813 = vld [vmem:[#allocation17 + $0xd88] sm:$0xff]
    %v1814 = vld [vmem:[#allocation17 + $0xd90] sm:$0xff]
    %v1815 = vld [vmem:[#allocation17 + $0xd98] sm:$0xff]
    %v1816 = vld [vmem:[#allocation17 + $0xda0] sm:$0xff]
    %v1817 = vld [vmem:[#allocation17 + $0xda8] sm:$0xff]
    %v1818 = vld [vmem:[#allocation17 + $0xdb0] sm:$0xff]
    %v1819 = vld [vmem:[#allocation17 + $0xdb8] sm:$0xff]
    %v1820 = vld [vmem:[#allocation17 + $0xdc0] sm:$0xff]
    %v1821 = vld [vmem:[#allocation17 + $0xdc8] sm:$0xff]
    %v1822 = vld [vmem:[#allocation17 + $0xdd0] sm:$0xff]
    %v1823 = vld [vmem:[#allocation17 + $0xdd8] sm:$0xff]
    %v1824 = vld [vmem:[#allocation17 + $0xde0] sm:$0xff]
    %v1825 = vld [vmem:[#allocation17 + $0xde8] sm:$0xff]
    %v1826 = vld [vmem:[#allocation17 + $0xdf0] sm:$0xff]
    %v1827 = vld [vmem:[#allocation17 + $0xdf8] sm:$0xff]
    %v1828 = vld [vmem:[#allocation17 + $0xe00] sm:$0xff]
    %v1829 = vld [vmem:[#allocation17 + $0xe08] sm:$0xff]
    %v1830 = vld [vmem:[#allocation17 + $0xe10] sm:$0xff]
    %v1831 = vld [vmem:[#allocation17 + $0xe18] sm:$0xff]
    %v1832 = vld [vmem:[#allocation17 + $0xe20] sm:$0xff]
    %v1833 = vld [vmem:[#allocation17 + $0xe28] sm:$0xff]
    %v1834 = vld [vmem:[#allocation17 + $0xe30] sm:$0xff]
    %v1835 = vld [vmem:[#allocation17 + $0xe38] sm:$0xff]
    %v1836 = vld [vmem:[#allocation17 + $0xe40] sm:$0xff]
    %v1837 = vld [vmem:[#allocation17 + $0xe48] sm:$0xff]
    %v1838 = vld [vmem:[#allocation17 + $0xe50] sm:$0xff]
    %v1839 = vld [vmem:[#allocation17 + $0xe58] sm:$0xff]
    %v1840 = vld [vmem:[#allocation17 + $0xe60] sm:$0xff]
    %v1841 = vld [vmem:[#allocation17 + $0xe68] sm:$0xff]
    %v1842 = vld [vmem:[#allocation17 + $0xe70] sm:$0xff]
    %v1843 = vld [vmem:[#allocation17 + $0xe78] sm:$0xff]
    %v1844 = vld [vmem:[#allocation17 + $0xe80] sm:$0xff]
    %v1845 = vld [vmem:[#allocation17 + $0xe88] sm:$0xff]
    %v1846 = vld [vmem:[#allocation17 + $0xe90] sm:$0xff]
    %v1847 = vld [vmem:[#allocation17 + $0xe98] sm:$0xff]
    %v1848 = vld [vmem:[#allocation17 + $0xea0] sm:$0xff]
    %v1849 = vld [vmem:[#allocation17 + $0xea8] sm:$0xff]
    %v1850 = vld [vmem:[#allocation17 + $0xeb0] sm:$0xff]
    %v1851 = vld [vmem:[#allocation17 + $0xeb8] sm:$0xff]
    %v1852 = vld [vmem:[#allocation17 + $0xec0] sm:$0xff]
    %v1853 = vld [vmem:[#allocation17 + $0xec8] sm:$0xff]
    %v1854 = vld [vmem:[#allocation17 + $0xed0] sm:$0xff]
    %v1855 = vld [vmem:[#allocation17 + $0xed8] sm:$0xff]
    %v1856 = vld [vmem:[#allocation17 + $0xee0] sm:$0xff]
    %v1857 = vld [vmem:[#allocation17 + $0xee8] sm:$0xff]
    %v1858 = vld [vmem:[#allocation17 + $0xef0] sm:$0xff]
    %v1859 = vld [vmem:[#allocation17 + $0xef8] sm:$0xff]
    %v1860 = vld [vmem:[#allocation17 + $0xf00] sm:$0xff]
    %v1861 = vld [vmem:[#allocation17 + $0xf08] sm:$0xff]
    %v1862 = vld [vmem:[#allocation17 + $0xf10] sm:$0xff]
    %v1863 = vld [vmem:[#allocation17 + $0xf18] sm:$0xff]
    %v1864 = vld [vmem:[#allocation17 + $0xf20] sm:$0xff]
    %v1865 = vld [vmem:[#allocation17 + $0xf28] sm:$0xff]
    %v1866 = vld [vmem:[#allocation17 + $0xf30] sm:$0xff]
    %v1867 = vld [vmem:[#allocation17 + $0xf38] sm:$0xff]
    %v1868 = vld [vmem:[#allocation17 + $0xf40] sm:$0xff]
    %v1869 = vld [vmem:[#allocation17 + $0xf48] sm:$0xff]
    %v1870 = vld [vmem:[#allocation17 + $0xf50] sm:$0xff]
    %v1871 = vld [vmem:[#allocation17 + $0xf58] sm:$0xff]
    %v1872 = vld [vmem:[#allocation17 + $0xf60] sm:$0xff]
    %v1873 = vld [vmem:[#allocation17 + $0xf68] sm:$0xff]
    %v1874 = vld [vmem:[#allocation17 + $0xf70] sm:$0xff]
    %v1875 = vld [vmem:[#allocation17 + $0xf78] sm:$0xff]
    %v1876 = vld [vmem:[#allocation17 + $0xf80] sm:$0xff]
    %v1877 = vld [vmem:[#allocation17 + $0xf88] sm:$0xff]
    %v1878 = vld [vmem:[#allocation17 + $0xf90] sm:$0xff]
    %v1879 = vld [vmem:[#allocation17 + $0xf98] sm:$0xff]
    %v1880 = vld [vmem:[#allocation17 + $0xfa0] sm:$0xff]
    %v1881 = vld [vmem:[#allocation17 + $0xfa8] sm:$0xff]
    %v1882 = vld [vmem:[#allocation17 + $0xfb0] sm:$0xff]
    %v1883 = vld [vmem:[#allocation17 + $0xfb8] sm:$0xff]
    %v1884 = vld [vmem:[#allocation17 + $0xfc0] sm:$0xff]
    %v1885 = vld [vmem:[#allocation17 + $0xfc8] sm:$0xff]
    %v1886 = vld [vmem:[#allocation17 + $0xfd0] sm:$0xff]
    %v1887 = vld [vmem:[#allocation17 + $0xfd8] sm:$0xff]
    %v1888 = vld [vmem:[#allocation17 + $0xfe0] sm:$0xff]
    %v1889 = vld [vmem:[#allocation17 + $0xfe8] sm:$0xff]
    %v1890 = vld [vmem:[#allocation17 + $0xff0] sm:$0xff]
    %v1891 = vld [vmem:[#allocation17 + $0xff8] sm:$0xff]
    %v1892 = vld [vmem:[#allocation17 + $0x1000] sm:$0xff]
    %v1893 = vld [vmem:[#allocation17 + $0x1008] sm:$0xff]
    %v1894 = vld [vmem:[#allocation17 + $0x1010] sm:$0xff]
    %v1895 = vld [vmem:[#allocation17 + $0x1018] sm:$0xff]
    %v1896 = vld [vmem:[#allocation17 + $0x1020] sm:$0xff]
    %v1897 = vld [vmem:[#allocation17 + $0x1028] sm:$0xff]
    %v1898 = vld [vmem:[#allocation17 + $0x1030] sm:$0xff]
    %v1899 = vld [vmem:[#allocation17 + $0x1038] sm:$0xff]
    %v1900 = vld [vmem:[#allocation17 + $0x1040] sm:$0xff]
    %v1901 = vld [vmem:[#allocation17 + $0x1048] sm:$0xff]
    %v1902 = vld [vmem:[#allocation17 + $0x1050] sm:$0xff]
    %v1903 = vld [vmem:[#allocation17 + $0x1058] sm:$0xff]
    %v1904 = vld [vmem:[#allocation17 + $0x1060] sm:$0xff]
    %v1905 = vld [vmem:[#allocation17 + $0x1068] sm:$0xff]
    %v1906 = vld [vmem:[#allocation17 + $0x1070] sm:$0xff]
    %v1907 = vld [vmem:[#allocation17 + $0x1078] sm:$0xff]
    %v1908 = vld [vmem:[#allocation17 + $0x1080] sm:$0xff]
    %v1909 = vld [vmem:[#allocation17 + $0x1088] sm:$0xff]
    %v1910 = vld [vmem:[#allocation17 + $0x1090] sm:$0xff]
    %v1911 = vld [vmem:[#allocation17 + $0x1098] sm:$0xff]
    %v1912 = vld [vmem:[#allocation17 + $0x10a0] sm:$0xff]
    %v1913 = vld [vmem:[#allocation17 + $0x10a8] sm:$0xff]
    %v1914 = vld [vmem:[#allocation17 + $0x10b0] sm:$0xff]
    %v1915 = vld [vmem:[#allocation17 + $0x10b8] sm:$0xff]
    %v1916 = vld [vmem:[#allocation17 + $0x10c0] sm:$0xff]
    %v1917 = vld [vmem:[#allocation17 + $0x10c8] sm:$0xff]
    %v1918 = vld [vmem:[#allocation17 + $0x10d0] sm:$0xff]
    %v1919 = vld [vmem:[#allocation17 + $0x10d8] sm:$0xff]
    %v1920 = vld [vmem:[#allocation17 + $0x10e0] sm:$0xff]
    %v1921 = vld [vmem:[#allocation17 + $0x10e8] sm:$0xff]
    %v1922 = vld [vmem:[#allocation17 + $0x10f0] sm:$0xff]
    %v1923 = vld [vmem:[#allocation17 + $0x10f8] sm:$0xff]
    %v1924 = vld [vmem:[#allocation17 + $0x1100] sm:$0xff]
    %v1925 = vld [vmem:[#allocation17 + $0x1108] sm:$0xff]
    %v1926 = vld [vmem:[#allocation17 + $0x1110] sm:$0xff]
    %v1927 = vld [vmem:[#allocation17 + $0x1118] sm:$0xff]
    %v1928 = vld [vmem:[#allocation17 + $0x1120] sm:$0xff]
    %v1929 = vld [vmem:[#allocation17 + $0x1128] sm:$0xff]
    %v1930 = vld [vmem:[#allocation17 + $0x1130] sm:$0xff]
    %v1931 = vld [vmem:[#allocation17 + $0x1138] sm:$0xff]
    %v1932 = vld [vmem:[#allocation17 + $0x1140] sm:$0xff]
    %v1933 = vld [vmem:[#allocation17 + $0x1148] sm:$0xff]
    %v1934 = vld [vmem:[#allocation17 + $0x1150] sm:$0xff]
    %v1935 = vld [vmem:[#allocation17 + $0x1158] sm:$0xff]
    %v1936 = vld [vmem:[#allocation17 + $0x1160] sm:$0xff]
    %v1937 = vld [vmem:[#allocation17 + $0x1168] sm:$0xff]
    %v1938 = vld [vmem:[#allocation17 + $0x1170] sm:$0xff]
    %v1939 = vld [vmem:[#allocation17 + $0x1178] sm:$0xff]
    %v1940 = vld [vmem:[#allocation17 + $0x1180] sm:$0xff]
    %v1941 = vld [vmem:[#allocation17 + $0x1188] sm:$0xff]
    %v1942 = vld [vmem:[#allocation17 + $0x1190] sm:$0xff]
    %v1943 = vld [vmem:[#allocation17 + $0x1198] sm:$0xff]
    %v1944 = vld [vmem:[#allocation17 + $0x11a0] sm:$0xff]
    %v1945 = vld [vmem:[#allocation17 + $0x11a8] sm:$0xff]
    %v1946 = vld [vmem:[#allocation17 + $0x11b0] sm:$0xff]
    %v1947 = vld [vmem:[#allocation17 + $0x11b8] sm:$0xff]
    %v1948 = vld [vmem:[#allocation17 + $0x11c0] sm:$0xff]
    %v1949 = vld [vmem:[#allocation17 + $0x11c8] sm:$0xff]
    %v1950 = vld [vmem:[#allocation17 + $0x11d0] sm:$0xff]
    %v1951 = vld [vmem:[#allocation17 + $0x11d8] sm:$0xff]
    %v1952 = vld [vmem:[#allocation17 + $0x11e0] sm:$0xff]
    %v1953 = vld [vmem:[#allocation17 + $0x11e8] sm:$0xff]
    %v1954 = vld [vmem:[#allocation17 + $0x11f0] sm:$0xff]
    %v1955 = vld [vmem:[#allocation17 + $0x11f8] sm:$0xff]
    %v1956 = vld [vmem:[#allocation17 + $0x1200] sm:$0xff]
    %v1957 = vld [vmem:[#allocation17 + $0x1208] sm:$0xff]
    %v1958 = vld [vmem:[#allocation17 + $0x1210] sm:$0xff]
    %v1959 = vld [vmem:[#allocation17 + $0x1218] sm:$0xff]
    %v1960 = vld [vmem:[#allocation17 + $0x1220] sm:$0xff]
    %v1961 = vld [vmem:[#allocation17 + $0x1228] sm:$0xff]
    %v1962 = vld [vmem:[#allocation17 + $0x1230] sm:$0xff]
    %v1963 = vld [vmem:[#allocation17 + $0x1238] sm:$0xff]
    %v1964 = vld [vmem:[#allocation17 + $0x1240] sm:$0xff]
    %v1965 = vld [vmem:[#allocation17 + $0x1248] sm:$0xff]
    %v1966 = vld [vmem:[#allocation17 + $0x1250] sm:$0xff]
    %v1967 = vld [vmem:[#allocation17 + $0x1258] sm:$0xff]
    %v1968 = vld [vmem:[#allocation17 + $0x1260] sm:$0xff]
    %v1969 = vld [vmem:[#allocation17 + $0x1268] sm:$0xff]
    %v1970 = vld [vmem:[#allocation17 + $0x1270] sm:$0xff]
    %v1971 = vld [vmem:[#allocation17 + $0x1278] sm:$0xff]
    %v1972 = vld [vmem:[#allocation17 + $0x1280] sm:$0xff]
    %v1973 = vld [vmem:[#allocation17 + $0x1288] sm:$0xff]
    %v1974 = vld [vmem:[#allocation17 + $0x1290] sm:$0xff]
    %v1975 = vld [vmem:[#allocation17 + $0x1298] sm:$0xff]
    %v1976 = vld [vmem:[#allocation17 + $0x12a0] sm:$0xff]
    %v1977 = vld [vmem:[#allocation17 + $0x12a8] sm:$0xff]
    %v1978 = vld [vmem:[#allocation17 + $0x12b0] sm:$0xff]
    %v1979 = vld [vmem:[#allocation17 + $0x12b8] sm:$0xff]
    %v1980 = vld [vmem:[#allocation17 + $0x12c0] sm:$0xff]
    %v1981 = vld [vmem:[#allocation17 + $0x12c8] sm:$0xff]
    %v1982 = vld [vmem:[#allocation17 + $0x12d0] sm:$0xff]
    %v1983 = vld [vmem:[#allocation17 + $0x12d8] sm:$0xff]
    %v1984 = vld [vmem:[#allocation17 + $0x12e0] sm:$0xff]
    %v1985 = vld [vmem:[#allocation17 + $0x12e8] sm:$0xff]
    %v1986 = vld [vmem:[#allocation17 + $0x12f0] sm:$0xff]
    %v1987 = vld [vmem:[#allocation17 + $0x12f8] sm:$0xff]
    %v1988 = vld [vmem:[#allocation17 + $0x1300] sm:$0xff]
    %v1989 = vld [vmem:[#allocation17 + $0x1308] sm:$0xff]
    %v1990 = vld [vmem:[#allocation17 + $0x1310] sm:$0xff]
    %v1991 = vld [vmem:[#allocation17 + $0x1318] sm:$0xff]
    %v1992 = vld [vmem:[#allocation17 + $0x1320] sm:$0xff]
    %v1993 = vld [vmem:[#allocation17 + $0x1328] sm:$0xff]
    %v1994 = vld [vmem:[#allocation17 + $0x1330] sm:$0xff]
    %v1995 = vld [vmem:[#allocation17 + $0x1338] sm:$0xff]
    %v1996 = vld [vmem:[#allocation17 + $0x1340] sm:$0xff]
    %v1997 = vld [vmem:[#allocation17 + $0x1348] sm:$0xff]
    %v1998 = vld [vmem:[#allocation17 + $0x1350] sm:$0xff]
    %v1999 = vld [vmem:[#allocation17 + $0x1358] sm:$0xff]
    %v2000 = vld [vmem:[#allocation17 + $0x1360] sm:$0xff]
    %v2001 = vld [vmem:[#allocation17 + $0x1368] sm:$0xff]
    %v2002 = vld [vmem:[#allocation17 + $0x1370] sm:$0xff]
    %v2003 = vld [vmem:[#allocation17 + $0x1378] sm:$0xff]
    %v2004 = vld [vmem:[#allocation17 + $0x1380] sm:$0xff]
    %v2005 = vld [vmem:[#allocation17 + $0x1388] sm:$0xff]
    %v2006 = vld [vmem:[#allocation17 + $0x1390] sm:$0xff]
    %v2007 = vld [vmem:[#allocation17 + $0x1398] sm:$0xff]
    %v2008 = vld [vmem:[#allocation17 + $0x13a0] sm:$0xff]
    %v2009 = vld [vmem:[#allocation17 + $0x13a8] sm:$0xff]
    %v2010 = vld [vmem:[#allocation17 + $0x13b0] sm:$0xff]
    %v2011 = vld [vmem:[#allocation17 + $0x13b8] sm:$0xff]
    %v2012 = vld [vmem:[#allocation17 + $0x13c0] sm:$0xff]
    %v2013 = vld [vmem:[#allocation17 + $0x13c8] sm:$0xff]
    %v2014 = vld [vmem:[#allocation17 + $0x13d0] sm:$0xff]
    %v2015 = vld [vmem:[#allocation17 + $0x13d8] sm:$0xff]
    %v2016 = vld [vmem:[#allocation17 + $0x13e0] sm:$0xff]
    %v2017 = vld [vmem:[#allocation17 + $0x13e8] sm:$0xff]
    %v2018 = vld [vmem:[#allocation17 + $0x13f0] sm:$0xff]
    %v2019 = vld [vmem:[#allocation17 + $0x13f8] sm:$0xff]
    %v2020 = vld [vmem:[#allocation17 + $0x1400] sm:$0xff]
    %v2021 = vld [vmem:[#allocation17 + $0x1408] sm:$0xff]
    %v2022 = vld [vmem:[#allocation17 + $0x1410] sm:$0xff]
    %v2023 = vld [vmem:[#allocation17 + $0x1418] sm:$0xff]
    %v2024 = vld [vmem:[#allocation17 + $0x1420] sm:$0xff]
    %v2025 = vld [vmem:[#allocation17 + $0x1428] sm:$0xff]
    %v2026 = vld [vmem:[#allocation17 + $0x1430] sm:$0xff]
    %v2027 = vld [vmem:[#allocation17 + $0x1438] sm:$0xff]
    %v2028 = vld [vmem:[#allocation17 + $0x1440] sm:$0xff]
    %v2029 = vld [vmem:[#allocation17 + $0x1448] sm:$0xff]
    %v2030 = vld [vmem:[#allocation17 + $0x1450] sm:$0xff]
    %v2031 = vld [vmem:[#allocation17 + $0x1458] sm:$0xff]
    %v2032 = vld [vmem:[#allocation17 + $0x1460] sm:$0xff]
    %v2033 = vld [vmem:[#allocation17 + $0x1468] sm:$0xff]
    %v2034 = vld [vmem:[#allocation17 + $0x1470] sm:$0xff]
    %v2035 = vld [vmem:[#allocation17 + $0x1478] sm:$0xff]
    %v2036 = vld [vmem:[#allocation17 + $0x1480] sm:$0xff]
    %v2037 = vld [vmem:[#allocation17 + $0x1488] sm:$0xff]
    %v2038 = vld [vmem:[#allocation17 + $0x1490] sm:$0xff]
    %v2039 = vld [vmem:[#allocation17 + $0x1498] sm:$0xff]
    %v2040 = vld [vmem:[#allocation17 + $0x14a0] sm:$0xff]
    %v2041 = vld [vmem:[#allocation17 + $0x14a8] sm:$0xff]
    %v2042 = vld [vmem:[#allocation17 + $0x14b0] sm:$0xff]
    %v2043 = vld [vmem:[#allocation17 + $0x14b8] sm:$0xff]
    %v2044 = vld [vmem:[#allocation17 + $0x14c0] sm:$0xff]
    %v2045 = vld [vmem:[#allocation17 + $0x14c8] sm:$0xff]
    %v2046 = vld [vmem:[#allocation17 + $0x14d0] sm:$0xff]
    %v2047 = vld [vmem:[#allocation17 + $0x14d8] sm:$0xff]
    %v2048 = vld [vmem:[#allocation17 + $0x14e0] sm:$0xff]
    %v2049 = vld [vmem:[#allocation17 + $0x14e8] sm:$0xff]
    %v2050 = vld [vmem:[#allocation17 + $0x14f0] sm:$0xff]
    %v2051 = vld [vmem:[#allocation17 + $0x14f8] sm:$0xff]
    %v2052 = vld [vmem:[#allocation17 + $0x1500] sm:$0xf]
    %v2053 = vld [vmem:[#allocation17 + $0x1508] sm:$0xf]
    %v2054 = vld [vmem:[#allocation17 + $0x1510] sm:$0xf]
    %v2055 = vld [vmem:[#allocation17 + $0x1518] sm:$0xf]
    %v2056 = vld [vmem:[#allocation17 + $0x1520] sm:$0xf]
    %v2057 = vld [vmem:[#allocation17 + $0x1528] sm:$0xf]
    %v2058 = vld [vmem:[#allocation17 + $0x1530] sm:$0xf]
    %v2059 = vld [vmem:[#allocation17 + $0x1538] sm:$0xf]
    %v2060 = vld [vmem:[#allocation19] sm:$0xff]
    %v2062 = vperm.slane %v2060, 0
    %v2063 = vperm.slane %v2060, 1
    %v2064 = vperm.slane %v2060, 2
    %v2065 = vperm.slane %v2060, 3
    %v2066 = vperm.slane %v2060, 4
    %v2067 = vperm.slane %v2060, 5
    %v2068 = vperm.slane %v2060, 6
    %v2069 = vperm.slane %v2060, 7
    %vm2078 = vcmask 293888
    %v2080 = vsel %vm2078, %v1379, 0
    %v2083 = vsel %vm399, %v2052, 0
    %v2086 = vsel %vm399, %v2053, 0
    %v2089 = vsel %vm399, %v2054, 0
    %v2092 = vsel %vm399, %v2055, 0
    %v2095 = vsel %vm399, %v2056, 0
    %v2098 = vsel %vm399, %v2057, 0
    %v2101 = vsel %vm399, %v2058, 0
    %v2104 = vsel %vm399, %v2059, 0
    %2106 = vmatpush.msra.mxu0 %v1500
    %2107 = vmatpush.msra.mxu0 %v1492
    %2108 = vmatpush.msra.mxu0 %v1484
    %2109 = vmatpush.msra.mxu0 %v1476
    %2110 = vmatpush.msra.mxu0 %v1468
    %2111 = vmatpush.msra.mxu0 %v1460
    %2112 = vmatpush.msra.mxu0 %v1452
    %2113 = vmatpush.msra.mxu0 %v1444
    %2114 = vmatpush.msra.mxu0 %v1436
    %2115 = vmatpush.msra.mxu0 %v1428
    %2116 = vmatpush.msra.mxu0 %v1420
    %2117 = vmatpush.msra.mxu0 %v1412
    %2118 = vmatpush.msra.mxu0 %v1404
    %2119 = vmatpush.msra.mxu0 %v1396
    %2120 = vmatpush.msra.mxu0 %v1388
    %2121 = vmatpush.msra.mxu0 %v1380
    %2122 = vmatmul.f32.gmra.mxu0 %v1374
    %v2123 = vpop.f32.mrf.mxu0
    %v2124 = vadd.f32 %v2062, %v2123
    %2125 = vdwg.mxu0
    %2126 = vmatpush.msra.mxu0 %v1628
    %2127 = vmatpush.msra.mxu0 %v1620
    %2128 = vmatpush.msra.mxu0 %v1612
    %2129 = vmatpush.msra.mxu0 %v1604
    %2130 = vmatpush.msra.mxu0 %v1596
    %2131 = vmatpush.msra.mxu0 %v1588
    %2132 = vmatpush.msra.mxu0 %v1580
    %2133 = vmatpush.msra.mxu0 %v1572
    %2134 = vmatpush.msra.mxu0 %v1564
    %2135 = vmatpush.msra.mxu0 %v1556
    %2136 = vmatpush.msra.mxu0 %v1548
    %2137 = vmatpush.msra.mxu0 %v1540
    %2138 = vmatpush.msra.mxu0 %v1532
    %2139 = vmatpush.msra.mxu0 %v1524
    %2140 = vmatpush.msra.mxu0 %v1516
    %2141 = vmatpush.msra.mxu0 %v1508
    %2142 = vmatmul.f32.gmra.mxu0 %v1375
    %v2143 = vpop.f32.mrf.mxu0
    %v2144 = vadd.f32 %v2124, %v2143
    %2145 = vdwg.mxu0
    %2146 = vmatpush.msra.mxu0 %v1756
    %2147 = vmatpush.msra.mxu0 %v1748
    %2148 = vmatpush.msra.mxu0 %v1740
    %2149 = vmatpush.msra.mxu0 %v1732
    %2150 = vmatpush.msra.mxu0 %v1724
    %2151 = vmatpush.msra.mxu0 %v1716
    %2152 = vmatpush.msra.mxu0 %v1708
    %2153 = vmatpush.msra.mxu0 %v1700
    %2154 = vmatpush.msra.mxu0 %v1692
    %2155 = vmatpush.msra.mxu0 %v1684
    %2156 = vmatpush.msra.mxu0 %v1676
    %2157 = vmatpush.msra.mxu0 %v1668
    %2158 = vmatpush.msra.mxu0 %v1660
    %2159 = vmatpush.msra.mxu0 %v1652
    %2160 = vmatpush.msra.mxu0 %v1644
    %2161 = vmatpush.msra.mxu0 %v1636
    %2162 = vmatmul.f32.gmra.mxu0 %v1376
    %v2163 = vpop.f32.mrf.mxu0
    %v2164 = vadd.f32 %v2144, %v2163
    %2165 = vdwg.mxu0
    %2166 = vmatpush.msra.mxu0 %v1884
    %2167 = vmatpush.msra.mxu0 %v1876
    %2168 = vmatpush.msra.mxu0 %v1868
    %2169 = vmatpush.msra.mxu0 %v1860
    %2170 = vmatpush.msra.mxu0 %v1852
    %2171 = vmatpush.msra.mxu0 %v1844
    %2172 = vmatpush.msra.mxu0 %v1836
    %2173 = vmatpush.msra.mxu0 %v1828
    %2174 = vmatpush.msra.mxu0 %v1820
    %2175 = vmatpush.msra.mxu0 %v1812
    %2176 = vmatpush.msra.mxu0 %v1804
    %2177 = vmatpush.msra.mxu0 %v1796
    %2178 = vmatpush.msra.mxu0 %v1788
    %2179 = vmatpush.msra.mxu0 %v1780
    %2180 = vmatpush.msra.mxu0 %v1772
    %2181 = vmatpush.msra.mxu0 %v1764
    %2182 = vmatmul.f32.gmra.mxu0 %v1377
    %v2183 = vpop.f32.mrf.mxu0
    %v2184 = vadd.f32 %v2164, %v2183
    %2185 = vdwg.mxu0
    %2186 = vmatpush.msra.mxu0 %v2012
    %2187 = vmatpush.msra.mxu0 %v2004
    %2188 = vmatpush.msra.mxu0 %v1996
    %2189 = vmatpush.msra.mxu0 %v1988
    %2190 = vmatpush.msra.mxu0 %v1980
    %2191 = vmatpush.msra.mxu0 %v1972
    %2192 = vmatpush.msra.mxu0 %v1964
    %2193 = vmatpush.msra.mxu0 %v1956
    %2194 = vmatpush.msra.mxu0 %v1948
    %2195 = vmatpush.msra.mxu0 %v1940
    %2196 = vmatpush.msra.mxu0 %v1932
    %2197 = vmatpush.msra.mxu0 %v1924
    %2198 = vmatpush.msra.mxu0 %v1916
    %2199 = vmatpush.msra.mxu0 %v1908
    %2200 = vmatpush.msra.mxu0 %v1900
    %2201 = vmatpush.msra.mxu0 %v1892
    %2202 = vmatmul.f32.gmra.mxu0 %v1378
    %v2203 = vpop.f32.mrf.mxu0
    %v2204 = vadd.f32 %v2184, %v2203
    %2205 = vdwg.mxu0
    %2206 = vmatpush.msra.mxu0 0.0
    %2207 = vmatpush.msra.mxu0 0.0
    %2208 = vmatpush.msra.mxu0 0.0
    %2209 = vmatpush.msra.mxu0 0.0
    %2210 = vmatpush.msra.mxu0 0.0
    %2211 = vmatpush.msra.mxu0 0.0
    %2212 = vmatpush.msra.mxu0 0.0
    %2213 = vmatpush.msra.mxu0 0.0
    %2214 = vmatpush.msra.mxu0 0.0
    %2215 = vmatpush.msra.mxu0 0.0
    %2216 = vmatpush.msra.mxu0 0.0
    %2217 = vmatpush.msra.mxu0 %v2083
    %2218 = vmatpush.msra.mxu0 %v2044
    %2219 = vmatpush.msra.mxu0 %v2036
    %2220 = vmatpush.msra.mxu0 %v2028
    %2221 = vmatpush.msra.mxu0 %v2020
    %2222 = vmatmul.f32.gmra.mxu0 %v2080
    %v2223 = vpop.f32.mrf.mxu0
    %v2224 = vadd.f32 %v2204, %v2223
    %2225 = vdwg.mxu0
    %2226 = vmatpush.msra.mxu0 %v1501
    %2227 = vmatpush.msra.mxu0 %v1493
    %2228 = vmatpush.msra.mxu0 %v1485
    %2229 = vmatpush.msra.mxu0 %v1477
    %2230 = vmatpush.msra.mxu0 %v1469
    %2231 = vmatpush.msra.mxu0 %v1461
    %2232 = vmatpush.msra.mxu0 %v1453
    %2233 = vmatpush.msra.mxu0 %v1445
    %2234 = vmatpush.msra.mxu0 %v1437
    %2235 = vmatpush.msra.mxu0 %v1429
    %2236 = vmatpush.msra.mxu0 %v1421
    %2237 = vmatpush.msra.mxu0 %v1413
    %2238 = vmatpush.msra.mxu0 %v1405
    %2239 = vmatpush.msra.mxu0 %v1397
    %2240 = vmatpush.msra.mxu0 %v1389
    %2241 = vmatpush.msra.mxu0 %v1381
    %2242 = vmatmul.f32.gmra.mxu0 %v1374
    %v2243 = vpop.f32.mrf.mxu0
    %v2244 = vadd.f32 %v2063, %v2243
    %2245 = vdwg.mxu0
    %2246 = vmatpush.msra.mxu0 %v1629
    %2247 = vmatpush.msra.mxu0 %v1621
    %2248 = vmatpush.msra.mxu0 %v1613
    %2249 = vmatpush.msra.mxu0 %v1605
    %2250 = vmatpush.msra.mxu0 %v1597
    %2251 = vmatpush.msra.mxu0 %v1589
    %2252 = vmatpush.msra.mxu0 %v1581
    %2253 = vmatpush.msra.mxu0 %v1573
    %2254 = vmatpush.msra.mxu0 %v1565
    %2255 = vmatpush.msra.mxu0 %v1557
    %2256 = vmatpush.msra.mxu0 %v1549
    %2257 = vmatpush.msra.mxu0 %v1541
    %2258 = vmatpush.msra.mxu0 %v1533
    %2259 = vmatpush.msra.mxu0 %v1525
    %2260 = vmatpush.msra.mxu0 %v1517
    %2261 = vmatpush.msra.mxu0 %v1509
    %2262 = vmatmul.f32.gmra.mxu0 %v1375
    %v2263 = vpop.f32.mrf.mxu0
    %v2264 = vadd.f32 %v2244, %v2263
    %2265 = vdwg.mxu0
    %2266 = vmatpush.msra.mxu0 %v1757
    %2267 = vmatpush.msra.mxu0 %v1749
    %2268 = vmatpush.msra.mxu0 %v1741
    %2269 = vmatpush.msra.mxu0 %v1733
    %2270 = vmatpush.msra.mxu0 %v1725
    %2271 = vmatpush.msra.mxu0 %v1717
    %2272 = vmatpush.msra.mxu0 %v1709
    %2273 = vmatpush.msra.mxu0 %v1701
    %2274 = vmatpush.msra.mxu0 %v1693
    %2275 = vmatpush.msra.mxu0 %v1685
    %2276 = vmatpush.msra.mxu0 %v1677
    %2277 = vmatpush.msra.mxu0 %v1669
    %2278 = vmatpush.msra.mxu0 %v1661
    %2279 = vmatpush.msra.mxu0 %v1653
    %2280 = vmatpush.msra.mxu0 %v1645
    %2281 = vmatpush.msra.mxu0 %v1637
    %2282 = vmatmul.f32.gmra.mxu0 %v1376
    %v2283 = vpop.f32.mrf.mxu0
    %v2284 = vadd.f32 %v2264, %v2283
    %2285 = vdwg.mxu0
    %2286 = vmatpush.msra.mxu0 %v1885
    %2287 = vmatpush.msra.mxu0 %v1877
    %2288 = vmatpush.msra.mxu0 %v1869
    %2289 = vmatpush.msra.mxu0 %v1861
    %2290 = vmatpush.msra.mxu0 %v1853
    %2291 = vmatpush.msra.mxu0 %v1845
    %2292 = vmatpush.msra.mxu0 %v1837
    %2293 = vmatpush.msra.mxu0 %v1829
    %2294 = vmatpush.msra.mxu0 %v1821
    %2295 = vmatpush.msra.mxu0 %v1813
    %2296 = vmatpush.msra.mxu0 %v1805
    %2297 = vmatpush.msra.mxu0 %v1797
    %2298 = vmatpush.msra.mxu0 %v1789
    %2299 = vmatpush.msra.mxu0 %v1781
    %2300 = vmatpush.msra.mxu0 %v1773
    %2301 = vmatpush.msra.mxu0 %v1765
    %2302 = vmatmul.f32.gmra.mxu0 %v1377
    %v2303 = vpop.f32.mrf.mxu0
    %v2304 = vadd.f32 %v2284, %v2303
    %2305 = vdwg.mxu0
    %2306 = vmatpush.msra.mxu0 %v2013
    %2307 = vmatpush.msra.mxu0 %v2005
    %2308 = vmatpush.msra.mxu0 %v1997
    %2309 = vmatpush.msra.mxu0 %v1989
    %2310 = vmatpush.msra.mxu0 %v1981
    %2311 = vmatpush.msra.mxu0 %v1973
    %2312 = vmatpush.msra.mxu0 %v1965
    %2313 = vmatpush.msra.mxu0 %v1957
    %2314 = vmatpush.msra.mxu0 %v1949
    %2315 = vmatpush.msra.mxu0 %v1941
    %2316 = vmatpush.msra.mxu0 %v1933
    %2317 = vmatpush.msra.mxu0 %v1925
    %2318 = vmatpush.msra.mxu0 %v1917
    %2319 = vmatpush.msra.mxu0 %v1909
    %2320 = vmatpush.msra.mxu0 %v1901
    %2321 = vmatpush.msra.mxu0 %v1893
    %2322 = vmatmul.f32.gmra.mxu0 %v1378
    %v2323 = vpop.f32.mrf.mxu0
    %v2324 = vadd.f32 %v2304, %v2323
    %2325 = vdwg.mxu0
    %2326 = vmatpush.msra.mxu0 0.0
    %2327 = vmatpush.msra.mxu0 0.0
    %2328 = vmatpush.msra.mxu0 0.0
    %2329 = vmatpush.msra.mxu0 0.0
    %2330 = vmatpush.msra.mxu0 0.0
    %2331 = vmatpush.msra.mxu0 0.0
    %2332 = vmatpush.msra.mxu0 0.0
    %2333 = vmatpush.msra.mxu0 0.0
    %2334 = vmatpush.msra.mxu0 0.0
    %2335 = vmatpush.msra.mxu0 0.0
    %2336 = vmatpush.msra.mxu0 0.0
    %2337 = vmatpush.msra.mxu0 %v2086
    %2338 = vmatpush.msra.mxu0 %v2045
    %2339 = vmatpush.msra.mxu0 %v2037
    %2340 = vmatpush.msra.mxu0 %v2029
    %2341 = vmatpush.msra.mxu0 %v2021
    %2342 = vmatmul.f32.gmra.mxu0 %v2080
    %v2343 = vpop.f32.mrf.mxu0
    %v2344 = vadd.f32 %v2324, %v2343
    %2345 = vdwg.mxu0
    %2346 = vmatpush.msra.mxu0 %v1502
    %2347 = vmatpush.msra.mxu0 %v1494
    %2348 = vmatpush.msra.mxu0 %v1486
    %2349 = vmatpush.msra.mxu0 %v1478
    %2350 = vmatpush.msra.mxu0 %v1470
    %2351 = vmatpush.msra.mxu0 %v1462
    %2352 = vmatpush.msra.mxu0 %v1454
    %2353 = vmatpush.msra.mxu0 %v1446
    %2354 = vmatpush.msra.mxu0 %v1438
    %2355 = vmatpush.msra.mxu0 %v1430
    %2356 = vmatpush.msra.mxu0 %v1422
    %2357 = vmatpush.msra.mxu0 %v1414
    %2358 = vmatpush.msra.mxu0 %v1406
    %2359 = vmatpush.msra.mxu0 %v1398
    %2360 = vmatpush.msra.mxu0 %v1390
    %2361 = vmatpush.msra.mxu0 %v1382
    %2362 = vmatmul.f32.gmra.mxu0 %v1374
    %v2363 = vpop.f32.mrf.mxu0
    %v2364 = vadd.f32 %v2064, %v2363
    %2365 = vdwg.mxu0
    %2366 = vmatpush.msra.mxu0 %v1630
    %2367 = vmatpush.msra.mxu0 %v1622
    %2368 = vmatpush.msra.mxu0 %v1614
    %2369 = vmatpush.msra.mxu0 %v1606
    %2370 = vmatpush.msra.mxu0 %v1598
    %2371 = vmatpush.msra.mxu0 %v1590
    %2372 = vmatpush.msra.mxu0 %v1582
    %2373 = vmatpush.msra.mxu0 %v1574
    %2374 = vmatpush.msra.mxu0 %v1566
    %2375 = vmatpush.msra.mxu0 %v1558
    %2376 = vmatpush.msra.mxu0 %v1550
    %2377 = vmatpush.msra.mxu0 %v1542
    %2378 = vmatpush.msra.mxu0 %v1534
    %2379 = vmatpush.msra.mxu0 %v1526
    %2380 = vmatpush.msra.mxu0 %v1518
    %2381 = vmatpush.msra.mxu0 %v1510
    %2382 = vmatmul.f32.gmra.mxu0 %v1375
    %v2383 = vpop.f32.mrf.mxu0
    %v2384 = vadd.f32 %v2364, %v2383
    %2385 = vdwg.mxu0
    %2386 = vmatpush.msra.mxu0 %v1758
    %2387 = vmatpush.msra.mxu0 %v1750
    %2388 = vmatpush.msra.mxu0 %v1742
    %2389 = vmatpush.msra.mxu0 %v1734
    %2390 = vmatpush.msra.mxu0 %v1726
    %2391 = vmatpush.msra.mxu0 %v1718
    %2392 = vmatpush.msra.mxu0 %v1710
    %2393 = vmatpush.msra.mxu0 %v1702
    %2394 = vmatpush.msra.mxu0 %v1694
    %2395 = vmatpush.msra.mxu0 %v1686
    %2396 = vmatpush.msra.mxu0 %v1678
    %2397 = vmatpush.msra.mxu0 %v1670
    %2398 = vmatpush.msra.mxu0 %v1662
    %2399 = vmatpush.msra.mxu0 %v1654
    %2400 = vmatpush.msra.mxu0 %v1646
    %2401 = vmatpush.msra.mxu0 %v1638
    %2402 = vmatmul.f32.gmra.mxu0 %v1376
    %v2403 = vpop.f32.mrf.mxu0
    %v2404 = vadd.f32 %v2384, %v2403
    %2405 = vdwg.mxu0
    %2406 = vmatpush.msra.mxu0 %v1886
    %2407 = vmatpush.msra.mxu0 %v1878
    %2408 = vmatpush.msra.mxu0 %v1870
    %2409 = vmatpush.msra.mxu0 %v1862
    %2410 = vmatpush.msra.mxu0 %v1854
    %2411 = vmatpush.msra.mxu0 %v1846
    %2412 = vmatpush.msra.mxu0 %v1838
    %2413 = vmatpush.msra.mxu0 %v1830
    %2414 = vmatpush.msra.mxu0 %v1822
    %2415 = vmatpush.msra.mxu0 %v1814
    %2416 = vmatpush.msra.mxu0 %v1806
    %2417 = vmatpush.msra.mxu0 %v1798
    %2418 = vmatpush.msra.mxu0 %v1790
    %2419 = vmatpush.msra.mxu0 %v1782
    %2420 = vmatpush.msra.mxu0 %v1774
    %2421 = vmatpush.msra.mxu0 %v1766
    %2422 = vmatmul.f32.gmra.mxu0 %v1377
    %v2423 = vpop.f32.mrf.mxu0
    %v2424 = vadd.f32 %v2404, %v2423
    %2425 = vdwg.mxu0
    %2426 = vmatpush.msra.mxu0 %v2014
    %2427 = vmatpush.msra.mxu0 %v2006
    %2428 = vmatpush.msra.mxu0 %v1998
    %2429 = vmatpush.msra.mxu0 %v1990
    %2430 = vmatpush.msra.mxu0 %v1982
    %2431 = vmatpush.msra.mxu0 %v1974
    %2432 = vmatpush.msra.mxu0 %v1966
    %2433 = vmatpush.msra.mxu0 %v1958
    %2434 = vmatpush.msra.mxu0 %v1950
    %2435 = vmatpush.msra.mxu0 %v1942
    %2436 = vmatpush.msra.mxu0 %v1934
    %2437 = vmatpush.msra.mxu0 %v1926
    %2438 = vmatpush.msra.mxu0 %v1918
    %2439 = vmatpush.msra.mxu0 %v1910
    %2440 = vmatpush.msra.mxu0 %v1902
    %2441 = vmatpush.msra.mxu0 %v1894
    %2442 = vmatmul.f32.gmra.mxu0 %v1378
    %v2443 = vpop.f32.mrf.mxu0
    %v2444 = vadd.f32 %v2424, %v2443
    %2445 = vdwg.mxu0
    %2446 = vmatpush.msra.mxu0 0.0
    %2447 = vmatpush.msra.mxu0 0.0
    %2448 = vmatpush.msra.mxu0 0.0
    %2449 = vmatpush.msra.mxu0 0.0
    %2450 = vmatpush.msra.mxu0 0.0
    %2451 = vmatpush.msra.mxu0 0.0
    %2452 = vmatpush.msra.mxu0 0.0
    %2453 = vmatpush.msra.mxu0 0.0
    %2454 = vmatpush.msra.mxu0 0.0
    %2455 = vmatpush.msra.mxu0 0.0
    %2456 = vmatpush.msra.mxu0 0.0
    %2457 = vmatpush.msra.mxu0 %v2089
    %2458 = vmatpush.msra.mxu0 %v2046
    %2459 = vmatpush.msra.mxu0 %v2038
    %2460 = vmatpush.msra.mxu0 %v2030
    %2461 = vmatpush.msra.mxu0 %v2022
    %2462 = vmatmul.f32.gmra.mxu0 %v2080
    %v2463 = vpop.f32.mrf.mxu0
    %v2464 = vadd.f32 %v2444, %v2463
    %2465 = vdwg.mxu0
    %2466 = vmatpush.msra.mxu0 %v1503
    %2467 = vmatpush.msra.mxu0 %v1495
    %2468 = vmatpush.msra.mxu0 %v1487
    %2469 = vmatpush.msra.mxu0 %v1479
    %2470 = vmatpush.msra.mxu0 %v1471
    %2471 = vmatpush.msra.mxu0 %v1463
    %2472 = vmatpush.msra.mxu0 %v1455
    %2473 = vmatpush.msra.mxu0 %v1447
    %2474 = vmatpush.msra.mxu0 %v1439
    %2475 = vmatpush.msra.mxu0 %v1431
    %2476 = vmatpush.msra.mxu0 %v1423
    %2477 = vmatpush.msra.mxu0 %v1415
    %2478 = vmatpush.msra.mxu0 %v1407
    %2479 = vmatpush.msra.mxu0 %v1399
    %2480 = vmatpush.msra.mxu0 %v1391
    %2481 = vmatpush.msra.mxu0 %v1383
    %2482 = vmatmul.f32.gmra.mxu0 %v1374
    %v2483 = vpop.f32.mrf.mxu0
    %v2484 = vadd.f32 %v2065, %v2483
    %2485 = vdwg.mxu0
    %2486 = vmatpush.msra.mxu0 %v1631
    %2487 = vmatpush.msra.mxu0 %v1623
    %2488 = vmatpush.msra.mxu0 %v1615
    %2489 = vmatpush.msra.mxu0 %v1607
    %2490 = vmatpush.msra.mxu0 %v1599
    %2491 = vmatpush.msra.mxu0 %v1591
    %2492 = vmatpush.msra.mxu0 %v1583
    %2493 = vmatpush.msra.mxu0 %v1575
    %2494 = vmatpush.msra.mxu0 %v1567
    %2495 = vmatpush.msra.mxu0 %v1559
    %2496 = vmatpush.msra.mxu0 %v1551
    %2497 = vmatpush.msra.mxu0 %v1543
    %2498 = vmatpush.msra.mxu0 %v1535
    %2499 = vmatpush.msra.mxu0 %v1527
    %2500 = vmatpush.msra.mxu0 %v1519
    %2501 = vmatpush.msra.mxu0 %v1511
    %2502 = vmatmul.f32.gmra.mxu0 %v1375
    %v2503 = vpop.f32.mrf.mxu0
    %v2504 = vadd.f32 %v2484, %v2503
    %2505 = vdwg.mxu0
    %2506 = vmatpush.msra.mxu0 %v1759
    %2507 = vmatpush.msra.mxu0 %v1751
    %2508 = vmatpush.msra.mxu0 %v1743
    %2509 = vmatpush.msra.mxu0 %v1735
    %2510 = vmatpush.msra.mxu0 %v1727
    %2511 = vmatpush.msra.mxu0 %v1719
    %2512 = vmatpush.msra.mxu0 %v1711
    %2513 = vmatpush.msra.mxu0 %v1703
    %2514 = vmatpush.msra.mxu0 %v1695
    %2515 = vmatpush.msra.mxu0 %v1687
    %2516 = vmatpush.msra.mxu0 %v1679
    %2517 = vmatpush.msra.mxu0 %v1671
    %2518 = vmatpush.msra.mxu0 %v1663
    %2519 = vmatpush.msra.mxu0 %v1655
    %2520 = vmatpush.msra.mxu0 %v1647
    %2521 = vmatpush.msra.mxu0 %v1639
    %2522 = vmatmul.f32.gmra.mxu0 %v1376
    %v2523 = vpop.f32.mrf.mxu0
    %v2524 = vadd.f32 %v2504, %v2523
    %2525 = vdwg.mxu0
    %2526 = vmatpush.msra.mxu0 %v1887
    %2527 = vmatpush.msra.mxu0 %v1879
    %2528 = vmatpush.msra.mxu0 %v1871
    %2529 = vmatpush.msra.mxu0 %v1863
    %2530 = vmatpush.msra.mxu0 %v1855
    %2531 = vmatpush.msra.mxu0 %v1847
    %2532 = vmatpush.msra.mxu0 %v1839
    %2533 = vmatpush.msra.mxu0 %v1831
    %2534 = vmatpush.msra.mxu0 %v1823
    %2535 = vmatpush.msra.mxu0 %v1815
    %2536 = vmatpush.msra.mxu0 %v1807
    %2537 = vmatpush.msra.mxu0 %v1799
    %2538 = vmatpush.msra.mxu0 %v1791
    %2539 = vmatpush.msra.mxu0 %v1783
    %2540 = vmatpush.msra.mxu0 %v1775
    %2541 = vmatpush.msra.mxu0 %v1767
    %2542 = vmatmul.f32.gmra.mxu0 %v1377
    %v2543 = vpop.f32.mrf.mxu0
    %v2544 = vadd.f32 %v2524, %v2543
    %2545 = vdwg.mxu0
    %2546 = vmatpush.msra.mxu0 %v2015
    %2547 = vmatpush.msra.mxu0 %v2007
    %2548 = vmatpush.msra.mxu0 %v1999
    %2549 = vmatpush.msra.mxu0 %v1991
    %2550 = vmatpush.msra.mxu0 %v1983
    %2551 = vmatpush.msra.mxu0 %v1975
    %2552 = vmatpush.msra.mxu0 %v1967
    %2553 = vmatpush.msra.mxu0 %v1959
    %2554 = vmatpush.msra.mxu0 %v1951
    %2555 = vmatpush.msra.mxu0 %v1943
    %2556 = vmatpush.msra.mxu0 %v1935
    %2557 = vmatpush.msra.mxu0 %v1927
    %2558 = vmatpush.msra.mxu0 %v1919
    %2559 = vmatpush.msra.mxu0 %v1911
    %2560 = vmatpush.msra.mxu0 %v1903
    %2561 = vmatpush.msra.mxu0 %v1895
    %2562 = vmatmul.f32.gmra.mxu0 %v1378
    %v2563 = vpop.f32.mrf.mxu0
    %v2564 = vadd.f32 %v2544, %v2563
    %2565 = vdwg.mxu0
    %2566 = vmatpush.msra.mxu0 0.0
    %2567 = vmatpush.msra.mxu0 0.0
    %2568 = vmatpush.msra.mxu0 0.0
    %2569 = vmatpush.msra.mxu0 0.0
    %2570 = vmatpush.msra.mxu0 0.0
    %2571 = vmatpush.msra.mxu0 0.0
    %2572 = vmatpush.msra.mxu0 0.0
    %2573 = vmatpush.msra.mxu0 0.0
    %2574 = vmatpush.msra.mxu0 0.0
    %2575 = vmatpush.msra.mxu0 0.0
    %2576 = vmatpush.msra.mxu0 0.0
    %2577 = vmatpush.msra.mxu0 %v2092
    %2578 = vmatpush.msra.mxu0 %v2047
    %2579 = vmatpush.msra.mxu0 %v2039
    %2580 = vmatpush.msra.mxu0 %v2031
    %2581 = vmatpush.msra.mxu0 %v2023
    %2582 = vmatmul.f32.gmra.mxu0 %v2080
    %v2583 = vpop.f32.mrf.mxu0
    %v2584 = vadd.f32 %v2564, %v2583
    %2585 = vdwg.mxu0
    %2586 = vmatpush.msra.mxu0 %v1504
    %2587 = vmatpush.msra.mxu0 %v1496
    %2588 = vmatpush.msra.mxu0 %v1488
    %2589 = vmatpush.msra.mxu0 %v1480
    %2590 = vmatpush.msra.mxu0 %v1472
    %2591 = vmatpush.msra.mxu0 %v1464
    %2592 = vmatpush.msra.mxu0 %v1456
    %2593 = vmatpush.msra.mxu0 %v1448
    %2594 = vmatpush.msra.mxu0 %v1440
    %2595 = vmatpush.msra.mxu0 %v1432
    %2596 = vmatpush.msra.mxu0 %v1424
    %2597 = vmatpush.msra.mxu0 %v1416
    %2598 = vmatpush.msra.mxu0 %v1408
    %2599 = vmatpush.msra.mxu0 %v1400
    %2600 = vmatpush.msra.mxu0 %v1392
    %2601 = vmatpush.msra.mxu0 %v1384
    %2602 = vmatmul.f32.gmra.mxu0 %v1374
    %v2603 = vpop.f32.mrf.mxu0
    %v2604 = vadd.f32 %v2066, %v2603
    %2605 = vdwg.mxu0
    %2606 = vmatpush.msra.mxu0 %v1632
    %2607 = vmatpush.msra.mxu0 %v1624
    %2608 = vmatpush.msra.mxu0 %v1616
    %2609 = vmatpush.msra.mxu0 %v1608
    %2610 = vmatpush.msra.mxu0 %v1600
    %2611 = vmatpush.msra.mxu0 %v1592
    %2612 = vmatpush.msra.mxu0 %v1584
    %2613 = vmatpush.msra.mxu0 %v1576
    %2614 = vmatpush.msra.mxu0 %v1568
    %2615 = vmatpush.msra.mxu0 %v1560
    %2616 = vmatpush.msra.mxu0 %v1552
    %2617 = vmatpush.msra.mxu0 %v1544
    %2618 = vmatpush.msra.mxu0 %v1536
    %2619 = vmatpush.msra.mxu0 %v1528
    %2620 = vmatpush.msra.mxu0 %v1520
    %2621 = vmatpush.msra.mxu0 %v1512
    %2622 = vmatmul.f32.gmra.mxu0 %v1375
    %v2623 = vpop.f32.mrf.mxu0
    %v2624 = vadd.f32 %v2604, %v2623
    %2625 = vdwg.mxu0
    %2626 = vmatpush.msra.mxu0 %v1760
    %2627 = vmatpush.msra.mxu0 %v1752
    %2628 = vmatpush.msra.mxu0 %v1744
    %2629 = vmatpush.msra.mxu0 %v1736
    %2630 = vmatpush.msra.mxu0 %v1728
    %2631 = vmatpush.msra.mxu0 %v1720
    %2632 = vmatpush.msra.mxu0 %v1712
    %2633 = vmatpush.msra.mxu0 %v1704
    %2634 = vmatpush.msra.mxu0 %v1696
    %2635 = vmatpush.msra.mxu0 %v1688
    %2636 = vmatpush.msra.mxu0 %v1680
    %2637 = vmatpush.msra.mxu0 %v1672
    %2638 = vmatpush.msra.mxu0 %v1664
    %2639 = vmatpush.msra.mxu0 %v1656
    %2640 = vmatpush.msra.mxu0 %v1648
    %2641 = vmatpush.msra.mxu0 %v1640
    %2642 = vmatmul.f32.gmra.mxu0 %v1376
    %v2643 = vpop.f32.mrf.mxu0
    %v2644 = vadd.f32 %v2624, %v2643
    %2645 = vdwg.mxu0
    %2646 = vmatpush.msra.mxu0 %v1888
    %2647 = vmatpush.msra.mxu0 %v1880
    %2648 = vmatpush.msra.mxu0 %v1872
    %2649 = vmatpush.msra.mxu0 %v1864
    %2650 = vmatpush.msra.mxu0 %v1856
    %2651 = vmatpush.msra.mxu0 %v1848
    %2652 = vmatpush.msra.mxu0 %v1840
    %2653 = vmatpush.msra.mxu0 %v1832
    %2654 = vmatpush.msra.mxu0 %v1824
    %2655 = vmatpush.msra.mxu0 %v1816
    %2656 = vmatpush.msra.mxu0 %v1808
    %2657 = vmatpush.msra.mxu0 %v1800
    %2658 = vmatpush.msra.mxu0 %v1792
    %2659 = vmatpush.msra.mxu0 %v1784
    %2660 = vmatpush.msra.mxu0 %v1776
    %2661 = vmatpush.msra.mxu0 %v1768
    %2662 = vmatmul.f32.gmra.mxu0 %v1377
    %v2663 = vpop.f32.mrf.mxu0
    %v2664 = vadd.f32 %v2644, %v2663
    %2665 = vdwg.mxu0
    %2666 = vmatpush.msra.mxu0 %v2016
    %2667 = vmatpush.msra.mxu0 %v2008
    %2668 = vmatpush.msra.mxu0 %v2000
    %2669 = vmatpush.msra.mxu0 %v1992
    %2670 = vmatpush.msra.mxu0 %v1984
    %2671 = vmatpush.msra.mxu0 %v1976
    %2672 = vmatpush.msra.mxu0 %v1968
    %2673 = vmatpush.msra.mxu0 %v1960
    %2674 = vmatpush.msra.mxu0 %v1952
    %2675 = vmatpush.msra.mxu0 %v1944
    %2676 = vmatpush.msra.mxu0 %v1936
    %2677 = vmatpush.msra.mxu0 %v1928
    %2678 = vmatpush.msra.mxu0 %v1920
    %2679 = vmatpush.msra.mxu0 %v1912
    %2680 = vmatpush.msra.mxu0 %v1904
    %2681 = vmatpush.msra.mxu0 %v1896
    %2682 = vmatmul.f32.gmra.mxu0 %v1378
    %v2683 = vpop.f32.mrf.mxu0
    %v2684 = vadd.f32 %v2664, %v2683
    %2685 = vdwg.mxu0
    %2686 = vmatpush.msra.mxu0 0.0
    %2687 = vmatpush.msra.mxu0 0.0
    %2688 = vmatpush.msra.mxu0 0.0
    %2689 = vmatpush.msra.mxu0 0.0
    %2690 = vmatpush.msra.mxu0 0.0
    %2691 = vmatpush.msra.mxu0 0.0
    %2692 = vmatpush.msra.mxu0 0.0
    %2693 = vmatpush.msra.mxu0 0.0
    %2694 = vmatpush.msra.mxu0 0.0
    %2695 = vmatpush.msra.mxu0 0.0
    %2696 = vmatpush.msra.mxu0 0.0
    %2697 = vmatpush.msra.mxu0 %v2095
    %2698 = vmatpush.msra.mxu0 %v2048
    %2699 = vmatpush.msra.mxu0 %v2040
    %2700 = vmatpush.msra.mxu0 %v2032
    %2701 = vmatpush.msra.mxu0 %v2024
    %2702 = vmatmul.f32.gmra.mxu0 %v2080
    %v2703 = vpop.f32.mrf.mxu0
    %v2704 = vadd.f32 %v2684, %v2703
    %2705 = vdwg.mxu0
    %2706 = vmatpush.msra.mxu0 %v1505
    %2707 = vmatpush.msra.mxu0 %v1497
    %2708 = vmatpush.msra.mxu0 %v1489
    %2709 = vmatpush.msra.mxu0 %v1481
    %2710 = vmatpush.msra.mxu0 %v1473
    %2711 = vmatpush.msra.mxu0 %v1465
    %2712 = vmatpush.msra.mxu0 %v1457
    %2713 = vmatpush.msra.mxu0 %v1449
    %2714 = vmatpush.msra.mxu0 %v1441
    %2715 = vmatpush.msra.mxu0 %v1433
    %2716 = vmatpush.msra.mxu0 %v1425
    %2717 = vmatpush.msra.mxu0 %v1417
    %2718 = vmatpush.msra.mxu0 %v1409
    %2719 = vmatpush.msra.mxu0 %v1401
    %2720 = vmatpush.msra.mxu0 %v1393
    %2721 = vmatpush.msra.mxu0 %v1385
    %2722 = vmatmul.f32.gmra.mxu0 %v1374
    %v2723 = vpop.f32.mrf.mxu0
    %v2724 = vadd.f32 %v2067, %v2723
    %2725 = vdwg.mxu0
    %2726 = vmatpush.msra.mxu0 %v1633
    %2727 = vmatpush.msra.mxu0 %v1625
    %2728 = vmatpush.msra.mxu0 %v1617
    %2729 = vmatpush.msra.mxu0 %v1609
    %2730 = vmatpush.msra.mxu0 %v1601
    %2731 = vmatpush.msra.mxu0 %v1593
    %2732 = vmatpush.msra.mxu0 %v1585
    %2733 = vmatpush.msra.mxu0 %v1577
    %2734 = vmatpush.msra.mxu0 %v1569
    %2735 = vmatpush.msra.mxu0 %v1561
    %2736 = vmatpush.msra.mxu0 %v1553
    %2737 = vmatpush.msra.mxu0 %v1545
    %2738 = vmatpush.msra.mxu0 %v1537
    %2739 = vmatpush.msra.mxu0 %v1529
    %2740 = vmatpush.msra.mxu0 %v1521
    %2741 = vmatpush.msra.mxu0 %v1513
    %2742 = vmatmul.f32.gmra.mxu0 %v1375
    %v2743 = vpop.f32.mrf.mxu0
    %v2744 = vadd.f32 %v2724, %v2743
    %2745 = vdwg.mxu0
    %2746 = vmatpush.msra.mxu0 %v1761
    %2747 = vmatpush.msra.mxu0 %v1753
    %2748 = vmatpush.msra.mxu0 %v1745
    %2749 = vmatpush.msra.mxu0 %v1737
    %2750 = vmatpush.msra.mxu0 %v1729
    %2751 = vmatpush.msra.mxu0 %v1721
    %2752 = vmatpush.msra.mxu0 %v1713
    %2753 = vmatpush.msra.mxu0 %v1705
    %2754 = vmatpush.msra.mxu0 %v1697
    %2755 = vmatpush.msra.mxu0 %v1689
    %2756 = vmatpush.msra.mxu0 %v1681
    %2757 = vmatpush.msra.mxu0 %v1673
    %2758 = vmatpush.msra.mxu0 %v1665
    %2759 = vmatpush.msra.mxu0 %v1657
    %2760 = vmatpush.msra.mxu0 %v1649
    %2761 = vmatpush.msra.mxu0 %v1641
    %2762 = vmatmul.f32.gmra.mxu0 %v1376
    %v2763 = vpop.f32.mrf.mxu0
    %v2764 = vadd.f32 %v2744, %v2763
    %2765 = vdwg.mxu0
    %2766 = vmatpush.msra.mxu0 %v1889
    %2767 = vmatpush.msra.mxu0 %v1881
    %2768 = vmatpush.msra.mxu0 %v1873
    %2769 = vmatpush.msra.mxu0 %v1865
    %2770 = vmatpush.msra.mxu0 %v1857
    %2771 = vmatpush.msra.mxu0 %v1849
    %2772 = vmatpush.msra.mxu0 %v1841
    %2773 = vmatpush.msra.mxu0 %v1833
    %2774 = vmatpush.msra.mxu0 %v1825
    %2775 = vmatpush.msra.mxu0 %v1817
    %2776 = vmatpush.msra.mxu0 %v1809
    %2777 = vmatpush.msra.mxu0 %v1801
    %2778 = vmatpush.msra.mxu0 %v1793
    %2779 = vmatpush.msra.mxu0 %v1785
    %2780 = vmatpush.msra.mxu0 %v1777
    %2781 = vmatpush.msra.mxu0 %v1769
    %2782 = vmatmul.f32.gmra.mxu0 %v1377
    %v2783 = vpop.f32.mrf.mxu0
    %v2784 = vadd.f32 %v2764, %v2783
    %2785 = vdwg.mxu0
    %2786 = vmatpush.msra.mxu0 %v2017
    %2787 = vmatpush.msra.mxu0 %v2009
    %2788 = vmatpush.msra.mxu0 %v2001
    %2789 = vmatpush.msra.mxu0 %v1993
    %2790 = vmatpush.msra.mxu0 %v1985
    %2791 = vmatpush.msra.mxu0 %v1977
    %2792 = vmatpush.msra.mxu0 %v1969
    %2793 = vmatpush.msra.mxu0 %v1961
    %2794 = vmatpush.msra.mxu0 %v1953
    %2795 = vmatpush.msra.mxu0 %v1945
    %2796 = vmatpush.msra.mxu0 %v1937
    %2797 = vmatpush.msra.mxu0 %v1929
    %2798 = vmatpush.msra.mxu0 %v1921
    %2799 = vmatpush.msra.mxu0 %v1913
    %2800 = vmatpush.msra.mxu0 %v1905
    %2801 = vmatpush.msra.mxu0 %v1897
    %2802 = vmatmul.f32.gmra.mxu0 %v1378
    %v2803 = vpop.f32.mrf.mxu0
    %v2804 = vadd.f32 %v2784, %v2803
    %2805 = vdwg.mxu0
    %2806 = vmatpush.msra.mxu0 0.0
    %2807 = vmatpush.msra.mxu0 0.0
    %2808 = vmatpush.msra.mxu0 0.0
    %2809 = vmatpush.msra.mxu0 0.0
    %2810 = vmatpush.msra.mxu0 0.0
    %2811 = vmatpush.msra.mxu0 0.0
    %2812 = vmatpush.msra.mxu0 0.0
    %2813 = vmatpush.msra.mxu0 0.0
    %2814 = vmatpush.msra.mxu0 0.0
    %2815 = vmatpush.msra.mxu0 0.0
    %2816 = vmatpush.msra.mxu0 0.0
    %2817 = vmatpush.msra.mxu0 %v2098
    %2818 = vmatpush.msra.mxu0 %v2049
    %2819 = vmatpush.msra.mxu0 %v2041
    %2820 = vmatpush.msra.mxu0 %v2033
    %2821 = vmatpush.msra.mxu0 %v2025
    %2822 = vmatmul.f32.gmra.mxu0 %v2080
    %v2823 = vpop.f32.mrf.mxu0
    %v2824 = vadd.f32 %v2804, %v2823
    %2825 = vdwg.mxu0
    %2826 = vmatpush.msra.mxu0 %v1506
    %2827 = vmatpush.msra.mxu0 %v1498
    %2828 = vmatpush.msra.mxu0 %v1490
    %2829 = vmatpush.msra.mxu0 %v1482
    %2830 = vmatpush.msra.mxu0 %v1474
    %2831 = vmatpush.msra.mxu0 %v1466
    %2832 = vmatpush.msra.mxu0 %v1458
    %2833 = vmatpush.msra.mxu0 %v1450
    %2834 = vmatpush.msra.mxu0 %v1442
    %2835 = vmatpush.msra.mxu0 %v1434
    %2836 = vmatpush.msra.mxu0 %v1426
    %2837 = vmatpush.msra.mxu0 %v1418
    %2838 = vmatpush.msra.mxu0 %v1410
    %2839 = vmatpush.msra.mxu0 %v1402
    %2840 = vmatpush.msra.mxu0 %v1394
    %2841 = vmatpush.msra.mxu0 %v1386
    %2842 = vmatmul.f32.gmra.mxu0 %v1374
    %v2843 = vpop.f32.mrf.mxu0
    %v2844 = vadd.f32 %v2068, %v2843
    %2845 = vdwg.mxu0
    %2846 = vmatpush.msra.mxu0 %v1634
    %2847 = vmatpush.msra.mxu0 %v1626
    %2848 = vmatpush.msra.mxu0 %v1618
    %2849 = vmatpush.msra.mxu0 %v1610
    %2850 = vmatpush.msra.mxu0 %v1602
    %2851 = vmatpush.msra.mxu0 %v1594
    %2852 = vmatpush.msra.mxu0 %v1586
    %2853 = vmatpush.msra.mxu0 %v1578
    %2854 = vmatpush.msra.mxu0 %v1570
    %2855 = vmatpush.msra.mxu0 %v1562
    %2856 = vmatpush.msra.mxu0 %v1554
    %2857 = vmatpush.msra.mxu0 %v1546
    %2858 = vmatpush.msra.mxu0 %v1538
    %2859 = vmatpush.msra.mxu0 %v1530
    %2860 = vmatpush.msra.mxu0 %v1522
    %2861 = vmatpush.msra.mxu0 %v1514
    %2862 = vmatmul.f32.gmra.mxu0 %v1375
    %v2863 = vpop.f32.mrf.mxu0
    %v2864 = vadd.f32 %v2844, %v2863
    %2865 = vdwg.mxu0
    %2866 = vmatpush.msra.mxu0 %v1762
    %2867 = vmatpush.msra.mxu0 %v1754
    %2868 = vmatpush.msra.mxu0 %v1746
    %2869 = vmatpush.msra.mxu0 %v1738
    %2870 = vmatpush.msra.mxu0 %v1730
    %2871 = vmatpush.msra.mxu0 %v1722
    %2872 = vmatpush.msra.mxu0 %v1714
    %2873 = vmatpush.msra.mxu0 %v1706
    %2874 = vmatpush.msra.mxu0 %v1698
    %2875 = vmatpush.msra.mxu0 %v1690
    %2876 = vmatpush.msra.mxu0 %v1682
    %2877 = vmatpush.msra.mxu0 %v1674
    %2878 = vmatpush.msra.mxu0 %v1666
    %2879 = vmatpush.msra.mxu0 %v1658
    %2880 = vmatpush.msra.mxu0 %v1650
    %2881 = vmatpush.msra.mxu0 %v1642
    %2882 = vmatmul.f32.gmra.mxu0 %v1376
    %v2883 = vpop.f32.mrf.mxu0
    %v2884 = vadd.f32 %v2864, %v2883
    %2885 = vdwg.mxu0
    %2886 = vmatpush.msra.mxu0 %v1890
    %2887 = vmatpush.msra.mxu0 %v1882
    %2888 = vmatpush.msra.mxu0 %v1874
    %2889 = vmatpush.msra.mxu0 %v1866
    %2890 = vmatpush.msra.mxu0 %v1858
    %2891 = vmatpush.msra.mxu0 %v1850
    %2892 = vmatpush.msra.mxu0 %v1842
    %2893 = vmatpush.msra.mxu0 %v1834
    %2894 = vmatpush.msra.mxu0 %v1826
    %2895 = vmatpush.msra.mxu0 %v1818
    %2896 = vmatpush.msra.mxu0 %v1810
    %2897 = vmatpush.msra.mxu0 %v1802
    %2898 = vmatpush.msra.mxu0 %v1794
    %2899 = vmatpush.msra.mxu0 %v1786
    %2900 = vmatpush.msra.mxu0 %v1778
    %2901 = vmatpush.msra.mxu0 %v1770
    %2902 = vmatmul.f32.gmra.mxu0 %v1377
    %v2903 = vpop.f32.mrf.mxu0
    %v2904 = vadd.f32 %v2884, %v2903
    %2905 = vdwg.mxu0
    %2906 = vmatpush.msra.mxu0 %v2018
    %2907 = vmatpush.msra.mxu0 %v2010
    %2908 = vmatpush.msra.mxu0 %v2002
    %2909 = vmatpush.msra.mxu0 %v1994
    %2910 = vmatpush.msra.mxu0 %v1986
    %2911 = vmatpush.msra.mxu0 %v1978
    %2912 = vmatpush.msra.mxu0 %v1970
    %2913 = vmatpush.msra.mxu0 %v1962
    %2914 = vmatpush.msra.mxu0 %v1954
    %2915 = vmatpush.msra.mxu0 %v1946
    %2916 = vmatpush.msra.mxu0 %v1938
    %2917 = vmatpush.msra.mxu0 %v1930
    %2918 = vmatpush.msra.mxu0 %v1922
    %2919 = vmatpush.msra.mxu0 %v1914
    %2920 = vmatpush.msra.mxu0 %v1906
    %2921 = vmatpush.msra.mxu0 %v1898
    %2922 = vmatmul.f32.gmra.mxu0 %v1378
    %v2923 = vpop.f32.mrf.mxu0
    %v2924 = vadd.f32 %v2904, %v2923
    %2925 = vdwg.mxu0
    %2926 = vmatpush.msra.mxu0 0.0
    %2927 = vmatpush.msra.mxu0 0.0
    %2928 = vmatpush.msra.mxu0 0.0
    %2929 = vmatpush.msra.mxu0 0.0
    %2930 = vmatpush.msra.mxu0 0.0
    %2931 = vmatpush.msra.mxu0 0.0
    %2932 = vmatpush.msra.mxu0 0.0
    %2933 = vmatpush.msra.mxu0 0.0
    %2934 = vmatpush.msra.mxu0 0.0
    %2935 = vmatpush.msra.mxu0 0.0
    %2936 = vmatpush.msra.mxu0 0.0
    %2937 = vmatpush.msra.mxu0 %v2101
    %2938 = vmatpush.msra.mxu0 %v2050
    %2939 = vmatpush.msra.mxu0 %v2042
    %2940 = vmatpush.msra.mxu0 %v2034
    %2941 = vmatpush.msra.mxu0 %v2026
    %2942 = vmatmul.f32.gmra.mxu0 %v2080
    %v2943 = vpop.f32.mrf.mxu0
    %v2944 = vadd.f32 %v2924, %v2943
    %2945 = vdwg.mxu0
    %2946 = vmatpush.msra.mxu0 %v1507
    %2947 = vmatpush.msra.mxu0 %v1499
    %2948 = vmatpush.msra.mxu0 %v1491
    %2949 = vmatpush.msra.mxu0 %v1483
    %2950 = vmatpush.msra.mxu0 %v1475
    %2951 = vmatpush.msra.mxu0 %v1467
    %2952 = vmatpush.msra.mxu0 %v1459
    %2953 = vmatpush.msra.mxu0 %v1451
    %2954 = vmatpush.msra.mxu0 %v1443
    %2955 = vmatpush.msra.mxu0 %v1435
    %2956 = vmatpush.msra.mxu0 %v1427
    %2957 = vmatpush.msra.mxu0 %v1419
    %2958 = vmatpush.msra.mxu0 %v1411
    %2959 = vmatpush.msra.mxu0 %v1403
    %2960 = vmatpush.msra.mxu0 %v1395
    %2961 = vmatpush.msra.mxu0 %v1387
    %2962 = vmatmul.f32.gmra.mxu0 %v1374
    %v2963 = vpop.f32.mrf.mxu0
    %v2964 = vadd.f32 %v2069, %v2963
    %2965 = vdwg.mxu0
    %2966 = vmatpush.msra.mxu0 %v1635
    %2967 = vmatpush.msra.mxu0 %v1627
    %2968 = vmatpush.msra.mxu0 %v1619
    %2969 = vmatpush.msra.mxu0 %v1611
    %2970 = vmatpush.msra.mxu0 %v1603
    %2971 = vmatpush.msra.mxu0 %v1595
    %2972 = vmatpush.msra.mxu0 %v1587
    %2973 = vmatpush.msra.mxu0 %v1579
    %2974 = vmatpush.msra.mxu0 %v1571
    %2975 = vmatpush.msra.mxu0 %v1563
    %2976 = vmatpush.msra.mxu0 %v1555
    %2977 = vmatpush.msra.mxu0 %v1547
    %2978 = vmatpush.msra.mxu0 %v1539
    %2979 = vmatpush.msra.mxu0 %v1531
    %2980 = vmatpush.msra.mxu0 %v1523
    %2981 = vmatpush.msra.mxu0 %v1515
    %2982 = vmatmul.f32.gmra.mxu0 %v1375
    %v2983 = vpop.f32.mrf.mxu0
    %v2984 = vadd.f32 %v2964, %v2983
    %2985 = vdwg.mxu0
    %2986 = vmatpush.msra.mxu0 %v1763
    %2987 = vmatpush.msra.mxu0 %v1755
    %2988 = vmatpush.msra.mxu0 %v1747
    %2989 = vmatpush.msra.mxu0 %v1739
    %2990 = vmatpush.msra.mxu0 %v1731
    %2991 = vmatpush.msra.mxu0 %v1723
    %2992 = vmatpush.msra.mxu0 %v1715
    %2993 = vmatpush.msra.mxu0 %v1707
    %2994 = vmatpush.msra.mxu0 %v1699
    %2995 = vmatpush.msra.mxu0 %v1691
    %2996 = vmatpush.msra.mxu0 %v1683
    %2997 = vmatpush.msra.mxu0 %v1675
    %2998 = vmatpush.msra.mxu0 %v1667
    %2999 = vmatpush.msra.mxu0 %v1659
    %3000 = vmatpush.msra.mxu0 %v1651
    %3001 = vmatpush.msra.mxu0 %v1643
    %3002 = vmatmul.f32.gmra.mxu0 %v1376
    %v3003 = vpop.f32.mrf.mxu0
    %v3004 = vadd.f32 %v2984, %v3003
    %3005 = vdwg.mxu0
    %3006 = vmatpush.msra.mxu0 %v1891
    %3007 = vmatpush.msra.mxu0 %v1883
    %3008 = vmatpush.msra.mxu0 %v1875
    %3009 = vmatpush.msra.mxu0 %v1867
    %3010 = vmatpush.msra.mxu0 %v1859
    %3011 = vmatpush.msra.mxu0 %v1851
    %3012 = vmatpush.msra.mxu0 %v1843
    %3013 = vmatpush.msra.mxu0 %v1835
    %3014 = vmatpush.msra.mxu0 %v1827
    %3015 = vmatpush.msra.mxu0 %v1819
    %3016 = vmatpush.msra.mxu0 %v1811
    %3017 = vmatpush.msra.mxu0 %v1803
    %3018 = vmatpush.msra.mxu0 %v1795
    %3019 = vmatpush.msra.mxu0 %v1787
    %3020 = vmatpush.msra.mxu0 %v1779
    %3021 = vmatpush.msra.mxu0 %v1771
    %3022 = vmatmul.f32.gmra.mxu0 %v1377
    %v3023 = vpop.f32.mrf.mxu0
    %v3024 = vadd.f32 %v3004, %v3023
    %3025 = vdwg.mxu0
    %3026 = vmatpush.msra.mxu0 %v2019
    %3027 = vmatpush.msra.mxu0 %v2011
    %3028 = vmatpush.msra.mxu0 %v2003
    %3029 = vmatpush.msra.mxu0 %v1995
    %3030 = vmatpush.msra.mxu0 %v1987
    %3031 = vmatpush.msra.mxu0 %v1979
    %3032 = vmatpush.msra.mxu0 %v1971
    %3033 = vmatpush.msra.mxu0 %v1963
    %3034 = vmatpush.msra.mxu0 %v1955
    %3035 = vmatpush.msra.mxu0 %v1947
    %3036 = vmatpush.msra.mxu0 %v1939
    %3037 = vmatpush.msra.mxu0 %v1931
    %3038 = vmatpush.msra.mxu0 %v1923
    %3039 = vmatpush.msra.mxu0 %v1915
    %3040 = vmatpush.msra.mxu0 %v1907
    %3041 = vmatpush.msra.mxu0 %v1899
    %3042 = vmatmul.f32.gmra.mxu0 %v1378
    %v3043 = vpop.f32.mrf.mxu0
    %v3044 = vadd.f32 %v3024, %v3043
    %3045 = vdwg.mxu0
    %3046 = vmatpush.msra.mxu0 0.0
    %3047 = vmatpush.msra.mxu0 0.0
    %3048 = vmatpush.msra.mxu0 0.0
    %3049 = vmatpush.msra.mxu0 0.0
    %3050 = vmatpush.msra.mxu0 0.0
    %3051 = vmatpush.msra.mxu0 0.0
    %3052 = vmatpush.msra.mxu0 0.0
    %3053 = vmatpush.msra.mxu0 0.0
    %3054 = vmatpush.msra.mxu0 0.0
    %3055 = vmatpush.msra.mxu0 0.0
    %3056 = vmatpush.msra.mxu0 0.0
    %3057 = vmatpush.msra.mxu0 %v2104
    %3058 = vmatpush.msra.mxu0 %v2051
    %3059 = vmatpush.msra.mxu0 %v2043
    %3060 = vmatpush.msra.mxu0 %v2035
    %3061 = vmatpush.msra.mxu0 %v2027
    %3062 = vmatmul.f32.gmra.mxu0 %v2080
    %v3063 = vpop.f32.mrf.mxu0
    %v3064 = vadd.f32 %v3044, %v3063
    %3065 = vdwg.mxu0
    %v3074 = vrot.slane %v2344, 6
    %v3075 = vrot.slane %v2464, 4
    %v3076 = vrot.slane %v2584, 2
    %v3077 = vrot.slane %v2824, 6
    %v3078 = vrot.slane %v2944, 4
    %v3079 = vrot.slane %v3064, 2
    %vm3080 = vcmask 1041408
    %v3081 = vsel %vm3080, %v2224, %v3074
    %vm3082 = vcmask 1045508
    %v3083 = vsel %vm3082, %v3075, %v3076
    %v3084 = vsel %vm399, %v3081, %v3083
    %v3085 = vsel %vm3080, %v2704, %v3077
    %v3086 = vsel %vm3082, %v3078, %v3079
    %v3087 = vsel %vm399, %v3085, %v3086
    %3090 = vst [vmem:[#allocation20] sm:$0xff] %v3084
    %3091 = vst [vmem:[#allocation20 + $0x8] sm:$0xff] %v3087
    // Predicated region
    $region90: #{tpu_custom_call.1} parent=1 // pred_check
      _
    $region91: #{tpu_custom_call.1} parent=1 // pred_check_branch
      %3093 = sbr.rel (0) target = $region93
    $region92: #{tpu_custom_call.1} parent=1 // pred_region
      %3095 = vsyncadd [#allocation4], 0
      %s3097 = sshll.u32 [#allocation20], 4
      %s3098 = int_to_ptr.vmem [resolvable:$true] %s3097
      %s3099 = sshll.u32 %s11, 4
      %s3100 = int_to_ptr.hbm [resolvable:$true] %s3099
      %3102 = dma.vmem_to_hbm [thread:$0]  %s3098, 256, %s3100, [#allocation4]
    $region93: #{tpu_custom_call.1} parent=1 // pred_fallthru
      _
    // Predicated region
    $region94: #{tpu_custom_call.1} parent=1 // pred_check
      _
    $region95: #{tpu_custom_call.1} parent=1 // pred_check_branch
      %3104 = sbr.rel (0) target = $region97
    $region96: #{tpu_custom_call.1} parent=1 // pred_region
      %3106 = dma.done [#allocation4], 256
    $region97: #{tpu_custom_call.1} parent=1 // pred_fallthru
      _
    %3107 = vsyncpa [#allocation3], 1
    %3108 = vsyncpa [#allocation6], 1
    %3109 = vsyncpa [#allocation9], 1
    %3110 = vsyncpa [#allocation12], 1
    %3111 = vsyncpa [#allocation15], 1
    %3112 = vsyncpa [#allocation18], 1
    %3113 = vsyncpa [#allocation4], 1

</llo_original>
